<compile_context>
chip_gen: v7x
topology: tpu7x:2x2x1
jax: 0.10.0
libtpu: 0.0.40
codegen_flags: <defaults>
</compile_context>

<pallas_src>
import functools

import jax
import jax.numpy as jnp
from jax.experimental import pallas as pl
from jax.experimental.pallas import tpu as pltpu


def _round_up(v, m):
    return -(-v // m) * m


def _mvm(w, z):
    """(c_out, c_in) @ (c_in, n) -> (c_out, n) in f32.

    For tiny c_in (the first layer, c_in == 3) use VPU broadcast multiply-adds
    instead of an MXU dot (K would be padded to 128/256; MXU util ~1-2%)."""
    c_in = w.shape[1]
    if c_in <= 4:
        acc = w[:, 0:1] * z[0:1, :]
        for j in range(1, c_in):
            acc = acc + w[:, j:j + 1] * z[j:j + 1, :]
        return acc
    return jnp.dot(w, z, preferred_element_type=jnp.float32)


# -----------------------------------------------------------------------------
# Small-N fast path: one grid-less invocation, whole cloud resident in VMEM.
# -----------------------------------------------------------------------------
def _point_encoder_single_kernel(*refs, channels, n_true, eps):
    n_layers = len(channels) - 1
    x_ref = refs[0]
    w_refs = [refs[1 + 2 * k] for k in range(n_layers)]
    b_refs = [refs[2 + 2 * k] for k in range(n_layers)]
    out_ref = refs[1 + 2 * n_layers]

    n_pad = x_ref.shape[1]
    needs_mask = (n_pad != n_true)
    if needs_mask:
        lane = jax.lax.broadcasted_iota(jnp.int32, (1, n_pad), 1)
        valid = lane < n_true
    inv_n = 1.0 / float(n_true)

    z = x_ref[...].astype(jnp.float32)
    for k in range(n_layers - 1):
        y = _mvm(w_refs[k][...], z) + b_refs[k][...]
        ym = jnp.where(valid, y, 0.0) if needs_mask else y
        mean = jnp.sum(ym, axis=1, keepdims=True) * inv_n
        d = y - mean
        dm = jnp.where(valid, d, 0.0) if needs_mask else d
        var = jnp.sum(dm * dm, axis=1, keepdims=True) * inv_n
        inv_std = jax.lax.rsqrt(var + eps)
        z = jnp.maximum(d * inv_std, 0.0)

    y = _mvm(w_refs[-1][...], z) + b_refs[-1][...]
    out_ref[...] = y.astype(out_ref.dtype)


# -----------------------------------------------------------------------------
# Large-N path: (phase, tile) grid, norm folded into weights.
# -----------------------------------------------------------------------------
def _point_encoder_grid_kernel(*refs, channels, n_true, tile_n, chunk_w, eps):
    """refs layout:
      refs[0]                    x_ref  (3, tile_n)           streamed input tile
      refs[1+2k], refs[2+2k]     W_k (C_{k+1}, C_k), b_k (C_{k+1}, 1), k = 0..L
      refs[1+2*(L+1)]            out_ref (C_last, tile_n)
      scratch (4 per hidden k):  fw_k, fb_k, ssum_k (C,chunk_w), ssq_k (C,chunk_w)
    """
    n_layers = len(channels) - 1
    n_hidden = n_layers - 1

    x_ref = refs[0]
    w_refs = [refs[1 + 2 * k] for k in range(n_layers)]
    b_refs = [refs[2 + 2 * k] for k in range(n_layers)]
    out_ref = refs[1 + 2 * n_layers]
    scratch = refs[2 + 2 * n_layers:]
    fw_refs = [scratch[4 * k + 0] for k in range(n_hidden)]
    fb_refs = [scratch[4 * k + 1] for k in range(n_hidden)]
    ssum_refs = [scratch[4 * k + 2] for k in range(n_hidden)]
    ssq_refs = [scratch[4 * k + 3] for k in range(n_hidden)]

    phase = pl.program_id(0)
    t = pl.program_id(1)
    n_tiles = pl.num_programs(1)
    inv_n = 1.0 / float(n_true)
    # Padded lanes exist only on the last tile, and only if N isn't a tile
    # multiple -- decided statically so full tiles pay zero masking cost.
    needs_mask = (n_true % tile_n) != 0

    x = x_ref[...].astype(jnp.float32)

    def folded_chain(p):
        # Layers 0..p-1 recomputed with folded (norm-absorbed) weights + ReLU.
        z = x
        for k in range(p):
            z = jnp.maximum(_mvm(fw_refs[k][...], z) + fb_refs[k][...], 0.0)
        return z

    def accumulate(yv, ssum_ref, ssq_ref):
        # Lane-parallel accumulation: VPU elementwise adds over chunk_w-wide
        # slices; the cross-lane (XLU) reduce is deferred to the fold.
        acc_s = ssum_ref[...]
        acc_q = ssq_ref[...]
        for j in range(tile_n // chunk_w):
            yj = yv[:, j * chunk_w:(j + 1) * chunk_w]
            acc_s = acc_s + yj
            acc_q = acc_q + yj * yj
        ssum_ref[...] = acc_s
        ssq_ref[...] = acc_q

    # ---- stats phases p = 0..n_hidden-1: fold InstanceNorm of layer p ----
    for p in range(n_hidden):
        @pl.when(phase == p)
        def _stats(p=p):
            @pl.when(t == 0)
            def _init():
                ssum_refs[p][...] = jnp.zeros_like(ssum_refs[p])
                ssq_refs[p][...] = jnp.zeros_like(ssq_refs[p])

            z = folded_chain(p)
            w = w_refs[p][...]
            b = b_refs[p][...]
            y = _mvm(w, z) + b

            if needs_mask:
                is_last = t == n_tiles - 1

                @pl.when(is_last)
                def _masked():
                    lane = jax.lax.broadcasted_iota(jnp.int32, (1, tile_n), 1)
                    valid = (t * tile_n + lane) < n_true
                    accumulate(jnp.where(valid, y, 0.0),
                               ssum_refs[p], ssq_refs[p])

                @pl.when(jnp.logical_not(is_last))
                def _unmasked():
                    accumulate(y, ssum_refs[p], ssq_refs[p])
            else:
                accumulate(y, ssum_refs[p], ssq_refs[p])

            @pl.when(t == n_tiles - 1)
            def _fold():
                s = jnp.sum(ssum_refs[p][...], axis=1, keepdims=True)
                q = jnp.sum(ssq_refs[p][...], axis=1, keepdims=True)
                mean = s * inv_n
                # E[y^2] - E[y]^2, clamped >= 0 against f32 cancellation.
                var = jnp.maximum(q * inv_n - mean * mean, 0.0)
                inv_std = jax.lax.rsqrt(var + eps)
                fw_refs[p][...] = w * inv_std
                fb_refs[p][...] = (b - mean) * inv_std

    # ---- final phase: folded chain + last 1x1 conv; lane-dense store ----
    @pl.when(phase == n_hidden)
    def _final():
        z = folded_chain(n_hidden)
        y = _mvm(w_refs[n_hidden][...], z) + b_refs[n_hidden][...]
        out_ref[...] = y.astype(out_ref.dtype)


# -----------------------------------------------------------------------------
# Wrapper
# -----------------------------------------------------------------------------
def point_encoder_forward(pts, params, *, tile_n=None,
                          vmem_budget_bytes=24 * 1024 * 1024):
    """pts: (N, 3) float32 -> (1, feature_dim, N) float32."""
    n, c0 = pts.shape
    channels = [c0] + [w.shape[0] for (w, _) in params]
    feature_dim = channels[-1]
    n_hidden = len(params) - 1
    eps = 1e-5

    flat_params = []
    for (w, b) in params:
        flat_params.append(w.astype(jnp.float32))
        flat_params.append(b.reshape(-1, 1).astype(jnp.float32))

    n128 = _round_up(max(n, 1), 128)
    max_c = max(channels)
    # Lane budgets (bytes per point): grid path keeps dbuf in/out + ~3 live
    # activations; single-shot path keeps everything live at once.
    grid_bytes_per_lane = 4 * (2 * c0 + 2 * feature_dim + 3 * max_c)
    single_bytes_per_lane = 4 * (c0 + 2 * sum(channels[1:]))
    single_cap = max(128, (vmem_budget_bytes // single_bytes_per_lane // 128) * 128)

    if tile_n is None:
        if n128 <= single_cap:
            tile_n = n128
        else:
            cap = vmem_budget_bytes // grid_bytes_per_lane
            # Multiple of 512 so the lane-parallel stat chunking divides evenly;
            # cap at 16K (v7x VMEM is half of v5e/v6e).
            tile_n = max(512, min(16384, (cap // 512) * 512))
            # TODO(synk): on v5e/v6e (128 MiB VMEM) the budget/cap could be
            # raised (64 MiB / 32K lanes) for very large clouds.
    else:
        tile_n = max(128, _round_up(int(tile_n), 128))

    n_tiles = max(1, -(-n // tile_n))
    n_pad = n128 if n_tiles == 1 else n_tiles * tile_n

    # Channel-major (3, N) layout; pad the point axis.
    x = pts.T.astype(jnp.float32)
    if n_pad != n:
        x = jnp.pad(x, ((0, 0), (0, n_pad - n)))

    if n_tiles == 1:
        # ---- small-N fast path: one invocation, no grid ----
        kernel = functools.partial(
            _point_encoder_single_kernel,
            channels=tuple(channels), n_true=n, eps=eps)
        out = pl.pallas_call(
            kernel,
            out_shape=jax.ShapeDtypeStruct((feature_dim, n_pad), jnp.float32),
            compiler_params=pltpu.CompilerParams(
                vmem_limit_bytes=32 * 1024 * 1024),
        )(x, *flat_params)
    else:
        # ---- (phase, tile) grid path ----
        chunk_w = 128
        for cw in (512, 256):
            if tile_n % cw == 0:
                chunk_w = cw
                break

        n_phases = n_hidden + 1
        last_phase = n_phases - 1

        kernel = functools.partial(
            _point_encoder_grid_kernel,
            channels=tuple(channels), n_true=n, tile_n=tile_n,
            chunk_w=chunk_w, eps=eps)

        in_specs = [pl.BlockSpec((c0, tile_n), lambda p, t: (0, t))]
        for (w, b) in params:
            c_out, c_in = w.shape
            in_specs.append(pl.BlockSpec((c_out, c_in), lambda p, t: (0, 0)))
            in_specs.append(pl.BlockSpec((c_out, 1), lambda p, t: (0, 0)))

        # Output tile only advances during the last phase; during stats phases
        # the index stays pinned so no garbage writebacks are issued.
        out_specs = pl.BlockSpec(
            (feature_dim, tile_n),
            lambda p, t: (0, jnp.where(p == last_phase, t, 0)))

        scratch_shapes = []
        for k in range(n_hidden):
            c_in, c_out = channels[k], channels[k + 1]
            scratch_shapes += [
                pltpu.VMEM((c_out, c_in), jnp.float32),     # folded W'
                pltpu.VMEM((c_out, 1), jnp.float32),        # folded b'
                pltpu.VMEM((c_out, chunk_w), jnp.float32),  # lane-parallel sum(y)
                pltpu.VMEM((c_out, chunk_w), jnp.float32),  # lane-parallel sum(y^2)
            ]

        out = pl.pallas_call(
            kernel,
            out_shape=jax.ShapeDtypeStruct((feature_dim, n_pad), jnp.float32),
            grid_spec=pltpu.PrefetchScalarGridSpec(
                num_scalar_prefetch=0,
                grid=(n_phases, n_tiles),
                in_specs=in_specs,
                out_specs=out_specs,
                scratch_shapes=scratch_shapes,
            ),
            compiler_params=pltpu.CompilerParams(
                # TODO(synk): v7x dual-TC: per-core partial moments + combine
                # would let the tile axis be "parallel".
                dimension_semantics=("arbitrary", "arbitrary"),
                vmem_limit_bytes=32 * 1024 * 1024,
            ),
        )(x, *flat_params)

    # TODO(synk): for very large N, return the padded (F, n_pad) buffer and let
    # the consumer slice lazily (the slice below is an extra HBM copy).
    out = out if n_pad == n else out[:, :n]
    return out[None]  # unsqueeze(0) -> (1, feature_dim, N)


def init_point_encoder_params(key, feature_dim: int, layers):
    """Deterministic parameter init matching the Conv1d shapes of the module."""
    channels = [3] + list(layers) + [feature_dim]
    params = []
    n_layers = len(channels) - 1
    for i in range(n_layers):
        c_in, c_out = channels[i], channels[i + 1]
        key, kw, kb = jax.random.split(key, 3)
        bound = 1.0 / jnp.sqrt(float(c_in))  # fan_in = c_in * kernel_size(=1)
        w = jax.random.uniform(kw, (c_out, c_in), jnp.float32, -bound, bound)
        if i == n_layers - 1:
            b = jnp.zeros((c_out,), jnp.float32)  # nn.init.constant_(bias, 0.0)
        else:
            b = jax.random.uniform(kb, (c_out,), jnp.float32, -bound, bound)
        params.append((w, b))
    return params


def _reference_forward(pts, params):
    """Pure-JAX reference for correctness checking."""
    x = pts.T.astype(jnp.float32)
    n_layers = len(params)
    for i, (w, b) in enumerate(params):
        y = w @ x + b[:, None]
        if i < n_layers - 1:
            mean = jnp.mean(y, axis=1, keepdims=True)
            var = jnp.mean((y - mean) ** 2, axis=1, keepdims=True)
            y = (y - mean) / jnp.sqrt(var + 1e-5)
            y = jnp.maximum(y, 0.0)
        x = y
    return x[None]


if __name__ == "__main__":
    key = jax.random.PRNGKey(0)
    k_pts, k_params = jax.random.split(key)

    N = 2000            # not a multiple of 128 -> exercises lane masking
    layers = [16, 32]   # hidden channel sizes
    feature_dim = 32

    pts = jax.random.normal(k_pts, (N, 3), jnp.float32)
    params = init_point_encoder_params(k_params, feature_dim, layers)
    ref = _reference_forward(pts, params)

    # 1) Auto tiling -> small-N single-invocation fast path.
    out = jax.block_until_ready(point_encoder_forward(pts, params))
    assert out.shape == (1, feature_dim, N), out.shape
    err = float(jnp.max(jnp.abs(out - ref)))
    assert jnp.allclose(out, ref, atol=2e-4, rtol=2e-4), err

    # 2) Forced small tile -> (phase, tile) grid kernel with a masked last tile.
    out2 = jax.block_until_ready(point_encoder_forward(pts, params, tile_n=512))
    err2 = float(jnp.max(jnp.abs(out2 - ref)))
    assert jnp.allclose(out2, ref, atol=2e-4, rtol=2e-4), err2

    # 3) Exact tile multiple -> grid kernel with masking statically disabled.
    N3 = 1536
    pts3 = jax.random.normal(jax.random.PRNGKey(1), (N3, 3), jnp.float32)
    ref3 = _reference_forward(pts3, params)
    out3 = jax.block_until_ready(point_encoder_forward(pts3, params, tile_n=512))
    err3 = float(jnp.max(jnp.abs(out3 - ref3)))
    assert out3.shape == (1, feature_dim, N3), out3.shape
    assert jnp.allclose(out3, ref3, atol=2e-4, rtol=2e-4), err3

    print("KERNEL_OK")
</pallas_src>

<mosaic_0001>
module attributes {stable_mosaic.version = 11 : i64} {
  func.func @_point_encoder_single_kernel(%arg0: memref<3x2048xf32, #tpu.memory_space<vmem>>, %arg1: memref<16x3xf32, #tpu.memory_space<vmem>>, %arg2: memref<16x1xf32, #tpu.memory_space<vmem>>, %arg3: memref<32x16xf32, #tpu.memory_space<vmem>>, %arg4: memref<32x1xf32, #tpu.memory_space<vmem>>, %arg5: memref<32x32xf32, #tpu.memory_space<vmem>>, %arg6: memref<32x1xf32, #tpu.memory_space<vmem>>, %arg7: memref<32x2048xf32, #tpu.memory_space<vmem>>) attributes {dimension_semantics = [], scalar_prefetch = 0 : i64, scratch_operands = 0 : i64, tpu.core_type = #tpu.core_type<tc>} {
    %0 = tpu.iota {dimensions = array<i32: 1>} : vector<1x2048xi32>
    %c2000_i32 = arith.constant 2000 : i32
    %1 = vector.broadcast %c2000_i32 : i32 to vector<1x2048xi32>
    %2 = arith.cmpi slt, %0, %1 : vector<1x2048xi32>
    %c0 = arith.constant 0 : index
    %c0_0 = arith.constant 0 : index
    %3 = vector.load %arg0[%c0, %c0_0] : memref<3x2048xf32, #tpu.memory_space<vmem>>, vector<3x2048xf32>
    %c0_1 = arith.constant 0 : index
    %c0_2 = arith.constant 0 : index
    %4 = vector.load %arg1[%c0_1, %c0_2] : memref<16x3xf32, #tpu.memory_space<vmem>>, vector<16x3xf32>
    %5 = vector.extract_strided_slice %4 {offsets = [0, 0], sizes = [16, 1], strides = [1, 1]} : vector<16x3xf32> to vector<16x1xf32>
    %6 = vector.extract_strided_slice %3 {offsets = [0, 0], sizes = [1, 2048], strides = [1, 1]} : vector<3x2048xf32> to vector<1x2048xf32>
    %7 = vector.broadcast %5 : vector<16x1xf32> to vector<16x2048xf32>
    %8 = vector.broadcast %6 : vector<1x2048xf32> to vector<16x2048xf32>
    %9 = arith.mulf %7, %8 : vector<16x2048xf32>
    %10 = vector.extract_strided_slice %4 {offsets = [0, 1], sizes = [16, 1], strides = [1, 1]} : vector<16x3xf32> to vector<16x1xf32>
    %11 = vector.extract_strided_slice %3 {offsets = [1, 0], sizes = [1, 2048], strides = [1, 1]} : vector<3x2048xf32> to vector<1x2048xf32>
    %12 = vector.broadcast %10 : vector<16x1xf32> to vector<16x2048xf32>
    %13 = vector.broadcast %11 : vector<1x2048xf32> to vector<16x2048xf32>
    %14 = arith.mulf %12, %13 : vector<16x2048xf32>
    %15 = arith.addf %9, %14 : vector<16x2048xf32>
    %16 = vector.extract_strided_slice %4 {offsets = [0, 2], sizes = [16, 1], strides = [1, 1]} : vector<16x3xf32> to vector<16x1xf32>
    %17 = vector.extract_strided_slice %3 {offsets = [2, 0], sizes = [1, 2048], strides = [1, 1]} : vector<3x2048xf32> to vector<1x2048xf32>
    %18 = vector.broadcast %16 : vector<16x1xf32> to vector<16x2048xf32>
    %19 = vector.broadcast %17 : vector<1x2048xf32> to vector<16x2048xf32>
    %20 = arith.mulf %18, %19 : vector<16x2048xf32>
    %21 = arith.addf %15, %20 : vector<16x2048xf32>
    %c0_3 = arith.constant 0 : index
    %c0_4 = arith.constant 0 : index
    %22 = vector.load %arg2[%c0_3, %c0_4] : memref<16x1xf32, #tpu.memory_space<vmem>>, vector<16x1xf32>
    %23 = vector.broadcast %22 : vector<16x1xf32> to vector<16x2048xf32>
    %24 = arith.addf %21, %23 : vector<16x2048xf32>
    %cst = arith.constant 0.000000e+00 : f32
    %25 = vector.shape_cast %2 : vector<1x2048xi1> to vector<1x2048xi1>
    %26 = vector.broadcast %25 : vector<1x2048xi1> to vector<16x2048xi1>
    %27 = vector.broadcast %cst : f32 to vector<16x2048xf32>
    %28 = arith.select %26, %24, %27 : vector<16x2048xi1>, vector<16x2048xf32>
    %cst_5 = arith.constant dense<0.000000e+00> : vector<16xf32>
    %29 = vector.multi_reduction <add>, %28, %cst_5 [1] : vector<16x2048xf32> to vector<16xf32>
    %30 = vector.shape_cast %29 : vector<16xf32> to vector<16x1xf32>
    %cst_6 = arith.constant 5.000000e-04 : f32
    %31 = vector.broadcast %cst_6 : f32 to vector<16x1xf32>
    %32 = arith.mulf %30, %31 : vector<16x1xf32>
    %33 = vector.broadcast %32 : vector<16x1xf32> to vector<16x2048xf32>
    %34 = arith.subf %24, %33 : vector<16x2048xf32>
    %cst_7 = arith.constant 0.000000e+00 : f32
    %35 = vector.shape_cast %2 : vector<1x2048xi1> to vector<1x2048xi1>
    %36 = vector.broadcast %35 : vector<1x2048xi1> to vector<16x2048xi1>
    %37 = vector.broadcast %cst_7 : f32 to vector<16x2048xf32>
    %38 = arith.select %36, %34, %37 : vector<16x2048xi1>, vector<16x2048xf32>
    %39 = arith.mulf %38, %38 : vector<16x2048xf32>
    %cst_8 = arith.constant dense<0.000000e+00> : vector<16xf32>
    %40 = vector.multi_reduction <add>, %39, %cst_8 [1] : vector<16x2048xf32> to vector<16xf32>
    %41 = vector.shape_cast %40 : vector<16xf32> to vector<16x1xf32>
    %cst_9 = arith.constant 5.000000e-04 : f32
    %42 = vector.broadcast %cst_9 : f32 to vector<16x1xf32>
    %43 = arith.mulf %41, %42 : vector<16x1xf32>
    %cst_10 = arith.constant 9.99999974E-6 : f32
    %44 = vector.broadcast %cst_10 : f32 to vector<16x1xf32>
    %45 = arith.addf %43, %44 : vector<16x1xf32>
    %46 = math.rsqrt %45 : vector<16x1xf32>
    %47 = vector.broadcast %46 : vector<16x1xf32> to vector<16x2048xf32>
    %48 = arith.mulf %34, %47 : vector<16x2048xf32>
    %cst_11 = arith.constant 0.000000e+00 : f32
    %49 = vector.broadcast %cst_11 : f32 to vector<16x2048xf32>
    %50 = arith.maximumf %48, %49 : vector<16x2048xf32>
    %c0_12 = arith.constant 0 : index
    %c0_13 = arith.constant 0 : index
    %51 = vector.load %arg3[%c0_12, %c0_13] : memref<32x16xf32, #tpu.memory_space<vmem>>, vector<32x16xf32>
    %cst_14 = arith.constant dense<0.000000e+00> : vector<32x2048xf32>
    %52 = tpu.matmul %51, %50, %cst_14 {dimension_numbers = #tpu.dot_dimension_numbers<[1], [0], [0], [1], [0, 0, 1, 1], [], []>} : vector<32x16xf32>, vector<16x2048xf32>, vector<32x2048xf32> -> vector<32x2048xf32>
    %c0_15 = arith.constant 0 : index
    %c0_16 = arith.constant 0 : index
    %53 = vector.load %arg4[%c0_15, %c0_16] : memref<32x1xf32, #tpu.memory_space<vmem>>, vector<32x1xf32>
    %54 = vector.broadcast %53 : vector<32x1xf32> to vector<32x2048xf32>
    %55 = arith.addf %52, %54 : vector<32x2048xf32>
    %cst_17 = arith.constant 0.000000e+00 : f32
    %56 = vector.shape_cast %2 : vector<1x2048xi1> to vector<1x2048xi1>
    %57 = vector.broadcast %56 : vector<1x2048xi1> to vector<32x2048xi1>
    %58 = vector.broadcast %cst_17 : f32 to vector<32x2048xf32>
    %59 = arith.select %57, %55, %58 : vector<32x2048xi1>, vector<32x2048xf32>
    %cst_18 = arith.constant dense<0.000000e+00> : vector<32xf32>
    %60 = vector.multi_reduction <add>, %59, %cst_18 [1] : vector<32x2048xf32> to vector<32xf32>
    %61 = vector.shape_cast %60 : vector<32xf32> to vector<32x1xf32>
    %cst_19 = arith.constant 5.000000e-04 : f32
    %62 = vector.broadcast %cst_19 : f32 to vector<32x1xf32>
    %63 = arith.mulf %61, %62 : vector<32x1xf32>
    %64 = vector.broadcast %63 : vector<32x1xf32> to vector<32x2048xf32>
    %65 = arith.subf %55, %64 : vector<32x2048xf32>
    %cst_20 = arith.constant 0.000000e+00 : f32
    %66 = vector.shape_cast %2 : vector<1x2048xi1> to vector<1x2048xi1>
    %67 = vector.broadcast %66 : vector<1x2048xi1> to vector<32x2048xi1>
    %68 = vector.broadcast %cst_20 : f32 to vector<32x2048xf32>
    %69 = arith.select %67, %65, %68 : vector<32x2048xi1>, vector<32x2048xf32>
    %70 = arith.mulf %69, %69 : vector<32x2048xf32>
    %cst_21 = arith.constant dense<0.000000e+00> : vector<32xf32>
    %71 = vector.multi_reduction <add>, %70, %cst_21 [1] : vector<32x2048xf32> to vector<32xf32>
    %72 = vector.shape_cast %71 : vector<32xf32> to vector<32x1xf32>
    %cst_22 = arith.constant 5.000000e-04 : f32
    %73 = vector.broadcast %cst_22 : f32 to vector<32x1xf32>
    %74 = arith.mulf %72, %73 : vector<32x1xf32>
    %cst_23 = arith.constant 9.99999974E-6 : f32
    %75 = vector.broadcast %cst_23 : f32 to vector<32x1xf32>
    %76 = arith.addf %74, %75 : vector<32x1xf32>
    %77 = math.rsqrt %76 : vector<32x1xf32>
    %78 = vector.broadcast %77 : vector<32x1xf32> to vector<32x2048xf32>
    %79 = arith.mulf %65, %78 : vector<32x2048xf32>
    %cst_24 = arith.constant 0.000000e+00 : f32
    %80 = vector.broadcast %cst_24 : f32 to vector<32x2048xf32>
    %81 = arith.maximumf %79, %80 : vector<32x2048xf32>
    %c0_25 = arith.constant 0 : index
    %c0_26 = arith.constant 0 : index
    %82 = vector.load %arg5[%c0_25, %c0_26] : memref<32x32xf32, #tpu.memory_space<vmem>>, vector<32x32xf32>
    %cst_27 = arith.constant dense<0.000000e+00> : vector<32x2048xf32>
    %83 = tpu.matmul %82, %81, %cst_27 {dimension_numbers = #tpu.dot_dimension_numbers<[1], [0], [0], [1], [0, 0, 1, 1], [], []>} : vector<32x32xf32>, vector<32x2048xf32>, vector<32x2048xf32> -> vector<32x2048xf32>
    %c0_28 = arith.constant 0 : index
    %c0_29 = arith.constant 0 : index
    %84 = vector.load %arg6[%c0_28, %c0_29] : memref<32x1xf32, #tpu.memory_space<vmem>>, vector<32x1xf32>
    %85 = vector.broadcast %84 : vector<32x1xf32> to vector<32x2048xf32>
    %86 = arith.addf %83, %85 : vector<32x2048xf32>
    %c0_30 = arith.constant 0 : index
    %c0_31 = arith.constant 0 : index
    %87 = vector.load %arg7[%c0_30, %c0_31] : memref<32x2048xf32, #tpu.memory_space<vmem>>, vector<32x2048xf32>
    tpu.vector_store %arg7[%c0_30, %c0_31], %86 {strides = array<i32>} : memref<32x2048xf32, #tpu.memory_space<vmem>>, vector<32x2048xf32>,
    return
  }
}

</mosaic_0001>

<llo_original>
// kernel: tpu_custom_call.1
$region0: #{tpu_custom_call.1}
  #allocation0 [shape = 'u32[]', space=smem, size = 0x4, offset = 0x4, fixed_abs, tag = 'smem constant byte address 0x4 - core index']
  #allocation1 [shape = 'u32[144,128]{1,0:T(1,128)}', space=vmem, size = 0x12000, scoped, tag = 'internal scratch']
  %s0 = inlined_call_operand.vmem [shape: f32[3,2048], index: 0, kind: input, shape index: {}]
  %s1 = inlined_call_operand.vmem [shape: f32[16,3], index: 1, kind: input, shape index: {}]
  %s2 = inlined_call_operand.vmem [shape: f32[16,1], index: 2, kind: input, shape index: {}]
  %s3 = inlined_call_operand.vmem [shape: f32[32,16], index: 3, kind: input, shape index: {}]
  %s4 = inlined_call_operand.vmem [shape: f32[32,1], index: 4, kind: input, shape index: {}]
  %s5 = inlined_call_operand.vmem [shape: f32[32,32], index: 5, kind: input, shape index: {}]
  %s6 = inlined_call_operand.vmem [shape: f32[32,1], index: 6, kind: input, shape index: {}]
  %s7 = inlined_call_operand.hbm [shape: f32[32,2048], index: 7, kind: output, shape index: {}]
  %s8 = sld [smem:[#allocation0]]
  $region38: #{tpu_custom_call.1} parent=0
    _
  %s10 = ssub.s32 1, %s8
  %s11 = scalar_select 0, %s10, %s8
  $region1: #{tpu_custom_call.1} parent=0
    #allocation2 [shape = 'u8[262144]{0}', space=vmem, size = 0x40000, scoped, tag = 'output window, operand 0, single buffered']
    #allocation3 [shape = 's32[1]{0}', space=sflag, size = 0x4, scoped, tag = 'scoped memory for tpu_custom_call.1']
    %12 = vsyncpa [#allocation3], 0
    // Predicated region
    $region2: #{tpu_custom_call.1} parent=1 // pred_check
      _
    $region3: #{tpu_custom_call.1} parent=1 // pred_check_branch
      %14 = sbr.rel (0) target = $region5
    $region4: #{tpu_custom_call.1} parent=1 // pred_region
      _
    $region5: #{tpu_custom_call.1} parent=1 // pred_fallthru
      _
    // Predicated region
    $region6: #{tpu_custom_call.1} parent=1 // pred_check
      _
    $region7: #{tpu_custom_call.1} parent=1 // pred_check_branch
      %16 = sbr.rel (0) target = $region9
    $region8: #{tpu_custom_call.1} parent=1 // pred_region
      _
    $region9: #{tpu_custom_call.1} parent=1 // pred_fallthru
      _
    // Predicated region
    $region10: #{tpu_custom_call.1} parent=1 // pred_check
      _
    $region11: #{tpu_custom_call.1} parent=1 // pred_check_branch
      %18 = sbr.rel (0) target = $region13
    $region12: #{tpu_custom_call.1} parent=1 // pred_region
      _
    $region13: #{tpu_custom_call.1} parent=1 // pred_fallthru
      _
    // Predicated region
    $region14: #{tpu_custom_call.1} parent=1 // pred_check
      _
    $region15: #{tpu_custom_call.1} parent=1 // pred_check_branch
      %20 = sbr.rel (0) target = $region17
    $region16: #{tpu_custom_call.1} parent=1 // pred_region
      _
    $region17: #{tpu_custom_call.1} parent=1 // pred_fallthru
      _
    // Predicated region
    $region18: #{tpu_custom_call.1} parent=1 // pred_check
      _
    $region19: #{tpu_custom_call.1} parent=1 // pred_check_branch
      %22 = sbr.rel (0) target = $region21
    $region20: #{tpu_custom_call.1} parent=1 // pred_region
      _
    $region21: #{tpu_custom_call.1} parent=1 // pred_fallthru
      _
    // Predicated region
    $region22: #{tpu_custom_call.1} parent=1 // pred_check
      _
    $region23: #{tpu_custom_call.1} parent=1 // pred_check_branch
      %24 = sbr.rel (0) target = $region25
    $region24: #{tpu_custom_call.1} parent=1 // pred_region
      _
    $region25: #{tpu_custom_call.1} parent=1 // pred_fallthru
      _
    // Predicated region
    $region26: #{tpu_custom_call.1} parent=1 // pred_check
      _
    $region27: #{tpu_custom_call.1} parent=1 // pred_check_branch
      %26 = sbr.rel (0) target = $region29
    $region28: #{tpu_custom_call.1} parent=1 // pred_region
      _
    $region29: #{tpu_custom_call.1} parent=1 // pred_fallthru
      _
    %v27 = vlaneseq
    %v28 = vand.u32 %v27, 127
    %v29 = vadd.s32 %v28, 128
    %v30 = vadd.s32 %v28, 256
    %v31 = vadd.s32 %v28, 384
    %v32 = vadd.s32 %v28, 512
    %v33 = vadd.s32 %v28, 640
    %v34 = vadd.s32 %v28, 768
    %v35 = vadd.s32 %v28, 896
    %v36 = vadd.s32 %v28, 1024
    %v37 = vadd.s32 %v28, 1152
    %v38 = vadd.s32 %v28, 1280
    %v39 = vadd.s32 %v28, 1408
    %v40 = vadd.s32 %v28, 1536
    %v41 = vadd.s32 %v28, 1664
    %v42 = vadd.s32 %v28, 1792
    %v43 = vadd.s32 %v28, 1920
    %vm44 = vcmp.lt.s32.totalorder %v28, 2000
    %vm45 = vcmp.lt.s32.totalorder %v29, 2000
    %vm46 = vcmp.lt.s32.totalorder %v30, 2000
    %vm47 = vcmp.lt.s32.totalorder %v31, 2000
    %vm48 = vcmp.lt.s32.totalorder %v32, 2000
    %vm49 = vcmp.lt.s32.totalorder %v33, 2000
    %vm50 = vcmp.lt.s32.totalorder %v34, 2000
    %vm51 = vcmp.lt.s32.totalorder %v35, 2000
    %vm52 = vcmp.lt.s32.totalorder %v36, 2000
    %vm53 = vcmp.lt.s32.totalorder %v37, 2000
    %vm54 = vcmp.lt.s32.totalorder %v38, 2000
    %vm55 = vcmp.lt.s32.totalorder %v39, 2000
    %vm56 = vcmp.lt.s32.totalorder %v40, 2000
    %vm57 = vcmp.lt.s32.totalorder %v41, 2000
    %vm58 = vcmp.lt.s32.totalorder %v42, 2000
    %vm59 = vcmp.lt.s32.totalorder %v43, 2000
    %v60 = vld [vmem:[%s0] sm:$0x77]
    %v61 = vld [vmem:[%s0 + $0x8] sm:$0x77]
    %v62 = vld [vmem:[%s0 + $0x10] sm:$0x77]
    %v63 = vld [vmem:[%s0 + $0x18] sm:$0x77]
    %v64 = vld [vmem:[%s0 + $0x20] sm:$0x77]
    %v65 = vld [vmem:[%s0 + $0x28] sm:$0x77]
    %v66 = vld [vmem:[%s0 + $0x30] sm:$0x77]
    %v67 = vld [vmem:[%s0 + $0x38] sm:$0x77]
    %v68 = vld [vmem:[%s1] sm:$0xff]
    %v69 = vld [vmem:[%s1 + $0x8] sm:$0xff]
    %71 = vset.pattern.permute.xlu0 0
    %72 = vperm.xlu0 %71, %v68
    %v73 = vpop.permute.xlu0 %72
    %76 = vset.pattern.permute.xlu0 0
    %77 = vperm.xlu0 %76, %v69
    %v78 = vpop.permute.xlu0 %77
    %v88 = vlaneseq
    %v89 = vshrl.u32 %v88, 7
    %v90 = vsub.s32 0, %v89
    %v91 = vrot.slane %v60, %v90
    %v92 = vlaneseq
    %v93 = vshrl.u32 %v92, 7
    %v94 = vsub.s32 4, %v93
    %v95 = vrot.slane %v60, %v94
    %v96 = vlaneseq
    %v97 = vshrl.u32 %v96, 7
    %v98 = vsub.s32 0, %v97
    %v99 = vrot.slane %v61, %v98
    %v100 = vlaneseq
    %v101 = vshrl.u32 %v100, 7
    %v102 = vsub.s32 4, %v101
    %v103 = vrot.slane %v61, %v102
    %v104 = vlaneseq
    %v105 = vshrl.u32 %v104, 7
    %v106 = vsub.s32 0, %v105
    %v107 = vrot.slane %v62, %v106
    %v108 = vlaneseq
    %v109 = vshrl.u32 %v108, 7
    %v110 = vsub.s32 4, %v109
    %v111 = vrot.slane %v62, %v110
    %v112 = vlaneseq
    %v113 = vshrl.u32 %v112, 7
    %v114 = vsub.s32 0, %v113
    %v115 = vrot.slane %v63, %v114
    %v116 = vlaneseq
    %v117 = vshrl.u32 %v116, 7
    %v118 = vsub.s32 4, %v117
    %v119 = vrot.slane %v63, %v118
    %v120 = vlaneseq
    %v121 = vshrl.u32 %v120, 7
    %v122 = vsub.s32 0, %v121
    %v123 = vrot.slane %v64, %v122
    %v124 = vlaneseq
    %v125 = vshrl.u32 %v124, 7
    %v126 = vsub.s32 4, %v125
    %v127 = vrot.slane %v64, %v126
    %v128 = vlaneseq
    %v129 = vshrl.u32 %v128, 7
    %v130 = vsub.s32 0, %v129
    %v131 = vrot.slane %v65, %v130
    %v132 = vlaneseq
    %v133 = vshrl.u32 %v132, 7
    %v134 = vsub.s32 4, %v133
    %v135 = vrot.slane %v65, %v134
    %v136 = vlaneseq
    %v137 = vshrl.u32 %v136, 7
    %v138 = vsub.s32 0, %v137
    %v139 = vrot.slane %v66, %v138
    %v140 = vlaneseq
    %v141 = vshrl.u32 %v140, 7
    %v142 = vsub.s32 4, %v141
    %v143 = vrot.slane %v66, %v142
    %v144 = vlaneseq
    %v145 = vshrl.u32 %v144, 7
    %v146 = vsub.s32 0, %v145
    %v147 = vrot.slane %v67, %v146
    %v148 = vlaneseq
    %v149 = vshrl.u32 %v148, 7
    %v150 = vsub.s32 4, %v149
    %v151 = vrot.slane %v67, %v150
    %v168 = vlaneseq
    %v169 = vshrl.u32 %v168, 7
    %v170 = vsub.s32 0, %v169
    %v171 = vrot.slane %v91, %v170
    %v172 = vlaneseq
    %v173 = vshrl.u32 %v172, 7
    %v174 = vsub.s32 0, %v173
    %v175 = vrot.slane %v95, %v174
    %v176 = vlaneseq
    %v177 = vshrl.u32 %v176, 7
    %v178 = vsub.s32 0, %v177
    %v179 = vrot.slane %v99, %v178
    %v180 = vlaneseq
    %v181 = vshrl.u32 %v180, 7
    %v182 = vsub.s32 0, %v181
    %v183 = vrot.slane %v103, %v182
    %v184 = vlaneseq
    %v185 = vshrl.u32 %v184, 7
    %v186 = vsub.s32 0, %v185
    %v187 = vrot.slane %v107, %v186
    %v188 = vlaneseq
    %v189 = vshrl.u32 %v188, 7
    %v190 = vsub.s32 0, %v189
    %v191 = vrot.slane %v111, %v190
    %v192 = vlaneseq
    %v193 = vshrl.u32 %v192, 7
    %v194 = vsub.s32 0, %v193
    %v195 = vrot.slane %v115, %v194
    %v196 = vlaneseq
    %v197 = vshrl.u32 %v196, 7
    %v198 = vsub.s32 0, %v197
    %v199 = vrot.slane %v119, %v198
    %v200 = vlaneseq
    %v201 = vshrl.u32 %v200, 7
    %v202 = vsub.s32 0, %v201
    %v203 = vrot.slane %v123, %v202
    %v204 = vlaneseq
    %v205 = vshrl.u32 %v204, 7
    %v206 = vsub.s32 0, %v205
    %v207 = vrot.slane %v127, %v206
    %v208 = vlaneseq
    %v209 = vshrl.u32 %v208, 7
    %v210 = vsub.s32 0, %v209
    %v211 = vrot.slane %v131, %v210
    %v212 = vlaneseq
    %v213 = vshrl.u32 %v212, 7
    %v214 = vsub.s32 0, %v213
    %v215 = vrot.slane %v135, %v214
    %v216 = vlaneseq
    %v217 = vshrl.u32 %v216, 7
    %v218 = vsub.s32 0, %v217
    %v219 = vrot.slane %v139, %v218
    %v220 = vlaneseq
    %v221 = vshrl.u32 %v220, 7
    %v222 = vsub.s32 0, %v221
    %v223 = vrot.slane %v143, %v222
    %v224 = vlaneseq
    %v225 = vshrl.u32 %v224, 7
    %v226 = vsub.s32 0, %v225
    %v227 = vrot.slane %v147, %v226
    %v228 = vlaneseq
    %v229 = vshrl.u32 %v228, 7
    %v230 = vsub.s32 0, %v229
    %v231 = vrot.slane %v151, %v230
    %v232 = vmul.f32 %v73, %v171
    %v233 = vmul.f32 %v73, %v175
    %v234 = vmul.f32 %v73, %v179
    %v235 = vmul.f32 %v73, %v183
    %v236 = vmul.f32 %v73, %v187
    %v237 = vmul.f32 %v73, %v191
    %v238 = vmul.f32 %v73, %v195
    %v239 = vmul.f32 %v73, %v199
    %v240 = vmul.f32 %v73, %v203
    %v241 = vmul.f32 %v73, %v207
    %v242 = vmul.f32 %v73, %v211
    %v243 = vmul.f32 %v73, %v215
    %v244 = vmul.f32 %v73, %v219
    %v245 = vmul.f32 %v73, %v223
    %v246 = vmul.f32 %v73, %v227
    %v247 = vmul.f32 %v73, %v231
    %v248 = vmul.f32 %v78, %v171
    %v249 = vmul.f32 %v78, %v175
    %v250 = vmul.f32 %v78, %v179
    %v251 = vmul.f32 %v78, %v183
    %v252 = vmul.f32 %v78, %v187
    %v253 = vmul.f32 %v78, %v191
    %v254 = vmul.f32 %v78, %v195
    %v255 = vmul.f32 %v78, %v199
    %v256 = vmul.f32 %v78, %v203
    %v257 = vmul.f32 %v78, %v207
    %v258 = vmul.f32 %v78, %v211
    %v259 = vmul.f32 %v78, %v215
    %v260 = vmul.f32 %v78, %v219
    %v261 = vmul.f32 %v78, %v223
    %v262 = vmul.f32 %v78, %v227
    %v263 = vmul.f32 %v78, %v231
    %264 = vset.pattern.permute.xlu0 1
    %265 = vperm.xlu0 %264, %v68
    %v266 = vpop.permute.xlu0 %265
    %268 = vset.pattern.permute.xlu0 1
    %269 = vperm.xlu0 %268, %v69
    %v270 = vpop.permute.xlu0 %269
    %v272 = vlaneseq
    %v273 = vshrl.u32 %v272, 7
    %v274 = vsub.s32 1, %v273
    %v275 = vrot.slane %v60, %v274
    %v276 = vlaneseq
    %v277 = vshrl.u32 %v276, 7
    %v278 = vsub.s32 5, %v277
    %v279 = vrot.slane %v60, %v278
    %v280 = vlaneseq
    %v281 = vshrl.u32 %v280, 7
    %v282 = vsub.s32 1, %v281
    %v283 = vrot.slane %v61, %v282
    %v284 = vlaneseq
    %v285 = vshrl.u32 %v284, 7
    %v286 = vsub.s32 5, %v285
    %v287 = vrot.slane %v61, %v286
    %v288 = vlaneseq
    %v289 = vshrl.u32 %v288, 7
    %v290 = vsub.s32 1, %v289
    %v291 = vrot.slane %v62, %v290
    %v292 = vlaneseq
    %v293 = vshrl.u32 %v292, 7
    %v294 = vsub.s32 5, %v293
    %v295 = vrot.slane %v62, %v294
    %v296 = vlaneseq
    %v297 = vshrl.u32 %v296, 7
    %v298 = vsub.s32 1, %v297
    %v299 = vrot.slane %v63, %v298
    %v300 = vlaneseq
    %v301 = vshrl.u32 %v300, 7
    %v302 = vsub.s32 5, %v301
    %v303 = vrot.slane %v63, %v302
    %v304 = vlaneseq
    %v305 = vshrl.u32 %v304, 7
    %v306 = vsub.s32 1, %v305
    %v307 = vrot.slane %v64, %v306
    %v308 = vlaneseq
    %v309 = vshrl.u32 %v308, 7
    %v310 = vsub.s32 5, %v309
    %v311 = vrot.slane %v64, %v310
    %v312 = vlaneseq
    %v313 = vshrl.u32 %v312, 7
    %v314 = vsub.s32 1, %v313
    %v315 = vrot.slane %v65, %v314
    %v316 = vlaneseq
    %v317 = vshrl.u32 %v316, 7
    %v318 = vsub.s32 5, %v317
    %v319 = vrot.slane %v65, %v318
    %v320 = vlaneseq
    %v321 = vshrl.u32 %v320, 7
    %v322 = vsub.s32 1, %v321
    %v323 = vrot.slane %v66, %v322
    %v324 = vlaneseq
    %v325 = vshrl.u32 %v324, 7
    %v326 = vsub.s32 5, %v325
    %v327 = vrot.slane %v66, %v326
    %v328 = vlaneseq
    %v329 = vshrl.u32 %v328, 7
    %v330 = vsub.s32 1, %v329
    %v331 = vrot.slane %v67, %v330
    %v332 = vlaneseq
    %v333 = vshrl.u32 %v332, 7
    %v334 = vsub.s32 5, %v333
    %v335 = vrot.slane %v67, %v334
    %v352 = vlaneseq
    %v353 = vshrl.u32 %v352, 7
    %v354 = vsub.s32 1, %v353
    %v355 = vrot.slane %v275, %v354
    %v356 = vlaneseq
    %v357 = vshrl.u32 %v356, 7
    %v358 = vsub.s32 1, %v357
    %v359 = vrot.slane %v279, %v358
    %v360 = vlaneseq
    %v361 = vshrl.u32 %v360, 7
    %v362 = vsub.s32 1, %v361
    %v363 = vrot.slane %v283, %v362
    %v364 = vlaneseq
    %v365 = vshrl.u32 %v364, 7
    %v366 = vsub.s32 1, %v365
    %v367 = vrot.slane %v287, %v366
    %v368 = vlaneseq
    %v369 = vshrl.u32 %v368, 7
    %v370 = vsub.s32 1, %v369
    %v371 = vrot.slane %v291, %v370
    %v372 = vlaneseq
    %v373 = vshrl.u32 %v372, 7
    %v374 = vsub.s32 1, %v373
    %v375 = vrot.slane %v295, %v374
    %v376 = vlaneseq
    %v377 = vshrl.u32 %v376, 7
    %v378 = vsub.s32 1, %v377
    %v379 = vrot.slane %v299, %v378
    %v380 = vlaneseq
    %v381 = vshrl.u32 %v380, 7
    %v382 = vsub.s32 1, %v381
    %v383 = vrot.slane %v303, %v382
    %v384 = vlaneseq
    %v385 = vshrl.u32 %v384, 7
    %v386 = vsub.s32 1, %v385
    %v387 = vrot.slane %v307, %v386
    %v388 = vlaneseq
    %v389 = vshrl.u32 %v388, 7
    %v390 = vsub.s32 1, %v389
    %v391 = vrot.slane %v311, %v390
    %v392 = vlaneseq
    %v393 = vshrl.u32 %v392, 7
    %v394 = vsub.s32 1, %v393
    %v395 = vrot.slane %v315, %v394
    %v396 = vlaneseq
    %v397 = vshrl.u32 %v396, 7
    %v398 = vsub.s32 1, %v397
    %v399 = vrot.slane %v319, %v398
    %v400 = vlaneseq
    %v401 = vshrl.u32 %v400, 7
    %v402 = vsub.s32 1, %v401
    %v403 = vrot.slane %v323, %v402
    %v404 = vlaneseq
    %v405 = vshrl.u32 %v404, 7
    %v406 = vsub.s32 1, %v405
    %v407 = vrot.slane %v327, %v406
    %v408 = vlaneseq
    %v409 = vshrl.u32 %v408, 7
    %v410 = vsub.s32 1, %v409
    %v411 = vrot.slane %v331, %v410
    %v412 = vlaneseq
    %v413 = vshrl.u32 %v412, 7
    %v414 = vsub.s32 1, %v413
    %v415 = vrot.slane %v335, %v414
    %v416 = vmul.f32 %v266, %v355
    %v417 = vmul.f32 %v266, %v359
    %v418 = vmul.f32 %v266, %v363
    %v419 = vmul.f32 %v266, %v367
    %v420 = vmul.f32 %v266, %v371
    %v421 = vmul.f32 %v266, %v375
    %v422 = vmul.f32 %v266, %v379
    %v423 = vmul.f32 %v266, %v383
    %v424 = vmul.f32 %v266, %v387
    %v425 = vmul.f32 %v266, %v391
    %v426 = vmul.f32 %v266, %v395
    %v427 = vmul.f32 %v266, %v399
    %v428 = vmul.f32 %v266, %v403
    %v429 = vmul.f32 %v266, %v407
    %v430 = vmul.f32 %v266, %v411
    %v431 = vmul.f32 %v266, %v415
    %v432 = vmul.f32 %v270, %v355
    %v433 = vmul.f32 %v270, %v359
    %v434 = vmul.f32 %v270, %v363
    %v435 = vmul.f32 %v270, %v367
    %v436 = vmul.f32 %v270, %v371
    %v437 = vmul.f32 %v270, %v375
    %v438 = vmul.f32 %v270, %v379
    %v439 = vmul.f32 %v270, %v383
    %v440 = vmul.f32 %v270, %v387
    %v441 = vmul.f32 %v270, %v391
    %v442 = vmul.f32 %v270, %v395
    %v443 = vmul.f32 %v270, %v399
    %v444 = vmul.f32 %v270, %v403
    %v445 = vmul.f32 %v270, %v407
    %v446 = vmul.f32 %v270, %v411
    %v447 = vmul.f32 %v270, %v415
    %v448 = vadd.f32 %v232, %v416
    %v449 = vadd.f32 %v233, %v417
    %v450 = vadd.f32 %v234, %v418
    %v451 = vadd.f32 %v235, %v419
    %v452 = vadd.f32 %v236, %v420
    %v453 = vadd.f32 %v237, %v421
    %v454 = vadd.f32 %v238, %v422
    %v455 = vadd.f32 %v239, %v423
    %v456 = vadd.f32 %v240, %v424
    %v457 = vadd.f32 %v241, %v425
    %v458 = vadd.f32 %v242, %v426
    %v459 = vadd.f32 %v243, %v427
    %v460 = vadd.f32 %v244, %v428
    %v461 = vadd.f32 %v245, %v429
    %v462 = vadd.f32 %v246, %v430
    %v463 = vadd.f32 %v247, %v431
    %v464 = vadd.f32 %v248, %v432
    %v465 = vadd.f32 %v249, %v433
    %v466 = vadd.f32 %v250, %v434
    %v467 = vadd.f32 %v251, %v435
    %v468 = vadd.f32 %v252, %v436
    %v469 = vadd.f32 %v253, %v437
    %v470 = vadd.f32 %v254, %v438
    %v471 = vadd.f32 %v255, %v439
    %v472 = vadd.f32 %v256, %v440
    %v473 = vadd.f32 %v257, %v441
    %v474 = vadd.f32 %v258, %v442
    %v475 = vadd.f32 %v259, %v443
    %v476 = vadd.f32 %v260, %v444
    %v477 = vadd.f32 %v261, %v445
    %v478 = vadd.f32 %v262, %v446
    %v479 = vadd.f32 %v263, %v447
    %480 = vset.pattern.permute.xlu0 2
    %481 = vperm.xlu0 %480, %v68
    %v482 = vpop.permute.xlu0 %481
    %484 = vset.pattern.permute.xlu0 2
    %485 = vperm.xlu0 %484, %v69
    %v486 = vpop.permute.xlu0 %485
    %v488 = vlaneseq
    %v489 = vshrl.u32 %v488, 7
    %v490 = vsub.s32 2, %v489
    %v491 = vrot.slane %v60, %v490
    %v492 = vlaneseq
    %v493 = vshrl.u32 %v492, 7
    %v494 = vsub.s32 6, %v493
    %v495 = vrot.slane %v60, %v494
    %v496 = vlaneseq
    %v497 = vshrl.u32 %v496, 7
    %v498 = vsub.s32 2, %v497
    %v499 = vrot.slane %v61, %v498
    %v500 = vlaneseq
    %v501 = vshrl.u32 %v500, 7
    %v502 = vsub.s32 6, %v501
    %v503 = vrot.slane %v61, %v502
    %v504 = vlaneseq
    %v505 = vshrl.u32 %v504, 7
    %v506 = vsub.s32 2, %v505
    %v507 = vrot.slane %v62, %v506
    %v508 = vlaneseq
    %v509 = vshrl.u32 %v508, 7
    %v510 = vsub.s32 6, %v509
    %v511 = vrot.slane %v62, %v510
    %v512 = vlaneseq
    %v513 = vshrl.u32 %v512, 7
    %v514 = vsub.s32 2, %v513
    %v515 = vrot.slane %v63, %v514
    %v516 = vlaneseq
    %v517 = vshrl.u32 %v516, 7
    %v518 = vsub.s32 6, %v517
    %v519 = vrot.slane %v63, %v518
    %v520 = vlaneseq
    %v521 = vshrl.u32 %v520, 7
    %v522 = vsub.s32 2, %v521
    %v523 = vrot.slane %v64, %v522
    %v524 = vlaneseq
    %v525 = vshrl.u32 %v524, 7
    %v526 = vsub.s32 6, %v525
    %v527 = vrot.slane %v64, %v526
    %v528 = vlaneseq
    %v529 = vshrl.u32 %v528, 7
    %v530 = vsub.s32 2, %v529
    %v531 = vrot.slane %v65, %v530
    %v532 = vlaneseq
    %v533 = vshrl.u32 %v532, 7
    %v534 = vsub.s32 6, %v533
    %v535 = vrot.slane %v65, %v534
    %v536 = vlaneseq
    %v537 = vshrl.u32 %v536, 7
    %v538 = vsub.s32 2, %v537
    %v539 = vrot.slane %v66, %v538
    %v540 = vlaneseq
    %v541 = vshrl.u32 %v540, 7
    %v542 = vsub.s32 6, %v541
    %v543 = vrot.slane %v66, %v542
    %v544 = vlaneseq
    %v545 = vshrl.u32 %v544, 7
    %v546 = vsub.s32 2, %v545
    %v547 = vrot.slane %v67, %v546
    %v548 = vlaneseq
    %v549 = vshrl.u32 %v548, 7
    %v550 = vsub.s32 6, %v549
    %v551 = vrot.slane %v67, %v550
    %v568 = vlaneseq
    %v569 = vshrl.u32 %v568, 7
    %v570 = vsub.s32 2, %v569
    %v571 = vrot.slane %v491, %v570
    %v572 = vlaneseq
    %v573 = vshrl.u32 %v572, 7
    %v574 = vsub.s32 2, %v573
    %v575 = vrot.slane %v495, %v574
    %v576 = vlaneseq
    %v577 = vshrl.u32 %v576, 7
    %v578 = vsub.s32 2, %v577
    %v579 = vrot.slane %v499, %v578
    %v580 = vlaneseq
    %v581 = vshrl.u32 %v580, 7
    %v582 = vsub.s32 2, %v581
    %v583 = vrot.slane %v503, %v582
    %v584 = vlaneseq
    %v585 = vshrl.u32 %v584, 7
    %v586 = vsub.s32 2, %v585
    %v587 = vrot.slane %v507, %v586
    %v588 = vlaneseq
    %v589 = vshrl.u32 %v588, 7
    %v590 = vsub.s32 2, %v589
    %v591 = vrot.slane %v511, %v590
    %v592 = vlaneseq
    %v593 = vshrl.u32 %v592, 7
    %v594 = vsub.s32 2, %v593
    %v595 = vrot.slane %v515, %v594
    %v596 = vlaneseq
    %v597 = vshrl.u32 %v596, 7
    %v598 = vsub.s32 2, %v597
    %v599 = vrot.slane %v519, %v598
    %v600 = vlaneseq
    %v601 = vshrl.u32 %v600, 7
    %v602 = vsub.s32 2, %v601
    %v603 = vrot.slane %v523, %v602
    %v604 = vlaneseq
    %v605 = vshrl.u32 %v604, 7
    %v606 = vsub.s32 2, %v605
    %v607 = vrot.slane %v527, %v606
    %v608 = vlaneseq
    %v609 = vshrl.u32 %v608, 7
    %v610 = vsub.s32 2, %v609
    %v611 = vrot.slane %v531, %v610
    %v612 = vlaneseq
    %v613 = vshrl.u32 %v612, 7
    %v614 = vsub.s32 2, %v613
    %v615 = vrot.slane %v535, %v614
    %v616 = vlaneseq
    %v617 = vshrl.u32 %v616, 7
    %v618 = vsub.s32 2, %v617
    %v619 = vrot.slane %v539, %v618
    %v620 = vlaneseq
    %v621 = vshrl.u32 %v620, 7
    %v622 = vsub.s32 2, %v621
    %v623 = vrot.slane %v543, %v622
    %v624 = vlaneseq
    %v625 = vshrl.u32 %v624, 7
    %v626 = vsub.s32 2, %v625
    %v627 = vrot.slane %v547, %v626
    %v628 = vlaneseq
    %v629 = vshrl.u32 %v628, 7
    %v630 = vsub.s32 2, %v629
    %v631 = vrot.slane %v551, %v630
    %v632 = vmul.f32 %v482, %v571
    %v633 = vmul.f32 %v482, %v575
    %v634 = vmul.f32 %v482, %v579
    %v635 = vmul.f32 %v482, %v583
    %v636 = vmul.f32 %v482, %v587
    %v637 = vmul.f32 %v482, %v591
    %v638 = vmul.f32 %v482, %v595
    %v639 = vmul.f32 %v482, %v599
    %v640 = vmul.f32 %v482, %v603
    %v641 = vmul.f32 %v482, %v607
    %v642 = vmul.f32 %v482, %v611
    %v643 = vmul.f32 %v482, %v615
    %v644 = vmul.f32 %v482, %v619
    %v645 = vmul.f32 %v482, %v623
    %v646 = vmul.f32 %v482, %v627
    %v647 = vmul.f32 %v482, %v631
    %v648 = vmul.f32 %v486, %v571
    %v649 = vmul.f32 %v486, %v575
    %v650 = vmul.f32 %v486, %v579
    %v651 = vmul.f32 %v486, %v583
    %v652 = vmul.f32 %v486, %v587
    %v653 = vmul.f32 %v486, %v591
    %v654 = vmul.f32 %v486, %v595
    %v655 = vmul.f32 %v486, %v599
    %v656 = vmul.f32 %v486, %v603
    %v657 = vmul.f32 %v486, %v607
    %v658 = vmul.f32 %v486, %v611
    %v659 = vmul.f32 %v486, %v615
    %v660 = vmul.f32 %v486, %v619
    %v661 = vmul.f32 %v486, %v623
    %v662 = vmul.f32 %v486, %v627
    %v663 = vmul.f32 %v486, %v631
    %v664 = vadd.f32 %v448, %v632
    %v665 = vadd.f32 %v449, %v633
    %v666 = vadd.f32 %v450, %v634
    %v667 = vadd.f32 %v451, %v635
    %v668 = vadd.f32 %v452, %v636
    %v669 = vadd.f32 %v453, %v637
    %v670 = vadd.f32 %v454, %v638
    %v671 = vadd.f32 %v455, %v639
    %v672 = vadd.f32 %v456, %v640
    %v673 = vadd.f32 %v457, %v641
    %v674 = vadd.f32 %v458, %v642
    %v675 = vadd.f32 %v459, %v643
    %v676 = vadd.f32 %v460, %v644
    %v677 = vadd.f32 %v461, %v645
    %v678 = vadd.f32 %v462, %v646
    %v679 = vadd.f32 %v463, %v647
    %v680 = vadd.f32 %v464, %v648
    %v681 = vadd.f32 %v465, %v649
    %v682 = vadd.f32 %v466, %v650
    %v683 = vadd.f32 %v467, %v651
    %v684 = vadd.f32 %v468, %v652
    %v685 = vadd.f32 %v469, %v653
    %v686 = vadd.f32 %v470, %v654
    %v687 = vadd.f32 %v471, %v655
    %v688 = vadd.f32 %v472, %v656
    %v689 = vadd.f32 %v473, %v657
    %v690 = vadd.f32 %v474, %v658
    %v691 = vadd.f32 %v475, %v659
    %v692 = vadd.f32 %v476, %v660
    %v693 = vadd.f32 %v477, %v661
    %v694 = vadd.f32 %v478, %v662
    %v695 = vadd.f32 %v479, %v663
    %v696 = vld [vmem:[%s2] sm:$0xff]
    %v697 = vld [vmem:[%s2 + $0x8] sm:$0xff]
    %699 = vset.pattern.permute.xlu0 0
    %700 = vperm.xlu0 %699, %v696
    %v701 = vpop.permute.xlu0 %700
    %704 = vset.pattern.permute.xlu0 0
    %705 = vperm.xlu0 %704, %v697
    %v706 = vpop.permute.xlu0 %705
    %v708 = vadd.f32 %v664, %v701
    %v709 = vadd.f32 %v665, %v701
    %v710 = vadd.f32 %v666, %v701
    %v711 = vadd.f32 %v667, %v701
    %v712 = vadd.f32 %v668, %v701
    %v713 = vadd.f32 %v669, %v701
    %v714 = vadd.f32 %v670, %v701
    %v715 = vadd.f32 %v671, %v701
    %v716 = vadd.f32 %v672, %v701
    %v717 = vadd.f32 %v673, %v701
    %v718 = vadd.f32 %v674, %v701
    %v719 = vadd.f32 %v675, %v701
    %v720 = vadd.f32 %v676, %v701
    %v721 = vadd.f32 %v677, %v701
    %v722 = vadd.f32 %v678, %v701
    %v723 = vadd.f32 %v679, %v701
    %v724 = vadd.f32 %v680, %v706
    %v725 = vadd.f32 %v681, %v706
    %v726 = vadd.f32 %v682, %v706
    %v727 = vadd.f32 %v683, %v706
    %v728 = vadd.f32 %v684, %v706
    %v729 = vadd.f32 %v685, %v706
    %v730 = vadd.f32 %v686, %v706
    %v731 = vadd.f32 %v687, %v706
    %v732 = vadd.f32 %v688, %v706
    %v733 = vadd.f32 %v689, %v706
    %v734 = vadd.f32 %v690, %v706
    %v735 = vadd.f32 %v691, %v706
    %v736 = vadd.f32 %v692, %v706
    %v737 = vadd.f32 %v693, %v706
    %v738 = vadd.f32 %v694, %v706
    %v739 = vadd.f32 %v695, %v706
    %v740 = vsel %vm44, 1, 0
    %v741 = vsel %vm45, 1, 0
    %v742 = vsel %vm46, 1, 0
    %v743 = vsel %vm47, 1, 0
    %v744 = vsel %vm48, 1, 0
    %v745 = vsel %vm49, 1, 0
    %v746 = vsel %vm50, 1, 0
    %v747 = vsel %vm51, 1, 0
    %v748 = vsel %vm52, 1, 0
    %v749 = vsel %vm53, 1, 0
    %v750 = vsel %vm54, 1, 0
    %v751 = vsel %vm55, 1, 0
    %v752 = vsel %vm56, 1, 0
    %v753 = vsel %vm57, 1, 0
    %v754 = vsel %vm58, 1, 0
    %v755 = vsel %vm59, 1, 0
    %vm756 = vcmp.eq.s32.totalorder %v740, 1
    %vm757 = vcmp.eq.s32.totalorder %v741, 1
    %vm758 = vcmp.eq.s32.totalorder %v742, 1
    %vm759 = vcmp.eq.s32.totalorder %v743, 1
    %vm760 = vcmp.eq.s32.totalorder %v744, 1
    %vm761 = vcmp.eq.s32.totalorder %v745, 1
    %vm762 = vcmp.eq.s32.totalorder %v746, 1
    %vm763 = vcmp.eq.s32.totalorder %v747, 1
    %vm764 = vcmp.eq.s32.totalorder %v748, 1
    %vm765 = vcmp.eq.s32.totalorder %v749, 1
    %vm766 = vcmp.eq.s32.totalorder %v750, 1
    %vm767 = vcmp.eq.s32.totalorder %v751, 1
    %vm768 = vcmp.eq.s32.totalorder %v752, 1
    %vm769 = vcmp.eq.s32.totalorder %v753, 1
    %vm770 = vcmp.eq.s32.totalorder %v754, 1
    %vm771 = vcmp.eq.s32.totalorder %v755, 1
    %v772 = vsel %vm756, %v708, 0.0
    %v773 = vsel %vm757, %v709, 0.0
    %v774 = vsel %vm758, %v710, 0.0
    %v775 = vsel %vm759, %v711, 0.0
    %v776 = vsel %vm760, %v712, 0.0
    %v777 = vsel %vm761, %v713, 0.0
    %v778 = vsel %vm762, %v714, 0.0
    %v779 = vsel %vm763, %v715, 0.0
    %v780 = vsel %vm764, %v716, 0.0
    %v781 = vsel %vm765, %v717, 0.0
    %v782 = vsel %vm766, %v718, 0.0
    %v783 = vsel %vm767, %v719, 0.0
    %v784 = vsel %vm768, %v720, 0.0
    %v785 = vsel %vm769, %v721, 0.0
    %v786 = vsel %vm770, %v722, 0.0
    %v787 = vsel %vm771, %v723, 0.0
    %v788 = vsel %vm756, %v724, 0.0
    %v789 = vsel %vm757, %v725, 0.0
    %v790 = vsel %vm758, %v726, 0.0
    %v791 = vsel %vm759, %v727, 0.0
    %v792 = vsel %vm760, %v728, 0.0
    %v793 = vsel %vm761, %v729, 0.0
    %v794 = vsel %vm762, %v730, 0.0
    %v795 = vsel %vm763, %v731, 0.0
    %v796 = vsel %vm764, %v732, 0.0
    %v797 = vsel %vm765, %v733, 0.0
    %v798 = vsel %vm766, %v734, 0.0
    %v799 = vsel %vm767, %v735, 0.0
    %v800 = vsel %vm768, %v736, 0.0
    %v801 = vsel %vm769, %v737, 0.0
    %v802 = vsel %vm770, %v738, 0.0
    %v803 = vsel %vm771, %v739, 0.0
    %v804 = vadd.f32 %v772, %v773
    %v805 = vadd.f32 %v804, %v774
    %v806 = vadd.f32 %v805, %v775
    %v807 = vadd.f32 %v806, %v776
    %v808 = vadd.f32 %v807, %v777
    %v809 = vadd.f32 %v808, %v778
    %v810 = vadd.f32 %v809, %v779
    %v811 = vadd.f32 %v810, %v780
    %v812 = vadd.f32 %v811, %v781
    %v813 = vadd.f32 %v812, %v782
    %v814 = vadd.f32 %v813, %v783
    %v815 = vadd.f32 %v814, %v784
    %v816 = vadd.f32 %v815, %v785
    %v817 = vadd.f32 %v816, %v786
    %v818 = vadd.f32 %v817, %v787
    %819 = vadd.xlane.f32.xlu0 %v818
    %v820 = vpop.xlane.xlu0 %819
    %v821 = vadd.f32 %v788, %v789
    %v822 = vadd.f32 %v821, %v790
    %v823 = vadd.f32 %v822, %v791
    %v824 = vadd.f32 %v823, %v792
    %v825 = vadd.f32 %v824, %v793
    %v826 = vadd.f32 %v825, %v794
    %v827 = vadd.f32 %v826, %v795
    %v828 = vadd.f32 %v827, %v796
    %v829 = vadd.f32 %v828, %v797
    %v830 = vadd.f32 %v829, %v798
    %v831 = vadd.f32 %v830, %v799
    %v832 = vadd.f32 %v831, %v800
    %v833 = vadd.f32 %v832, %v801
    %v834 = vadd.f32 %v833, %v802
    %v835 = vadd.f32 %v834, %v803
    %836 = vadd.xlane.f32.xlu0 %v835
    %v837 = vpop.xlane.xlu0 %836
    %v838 = vmul.f32 %v820, 0.0005
    %v839 = vmul.f32 %v837, 0.0005
    %v840 = vsub.f32 %v708, %v838
    %v841 = vsub.f32 %v709, %v838
    %v842 = vsub.f32 %v710, %v838
    %v843 = vsub.f32 %v711, %v838
    %v844 = vsub.f32 %v712, %v838
    %v845 = vsub.f32 %v713, %v838
    %v846 = vsub.f32 %v714, %v838
    %v847 = vsub.f32 %v715, %v838
    %v848 = vsub.f32 %v716, %v838
    %v849 = vsub.f32 %v717, %v838
    %v850 = vsub.f32 %v718, %v838
    %v851 = vsub.f32 %v719, %v838
    %v852 = vsub.f32 %v720, %v838
    %v853 = vsub.f32 %v721, %v838
    %v854 = vsub.f32 %v722, %v838
    %v855 = vsub.f32 %v723, %v838
    %v856 = vsub.f32 %v724, %v839
    %v857 = vsub.f32 %v725, %v839
    %v858 = vsub.f32 %v726, %v839
    %v859 = vsub.f32 %v727, %v839
    %v860 = vsub.f32 %v728, %v839
    %v861 = vsub.f32 %v729, %v839
    %v862 = vsub.f32 %v730, %v839
    %v863 = vsub.f32 %v731, %v839
    %v864 = vsub.f32 %v732, %v839
    %v865 = vsub.f32 %v733, %v839
    %v866 = vsub.f32 %v734, %v839
    %v867 = vsub.f32 %v735, %v839
    %v868 = vsub.f32 %v736, %v839
    %v869 = vsub.f32 %v737, %v839
    %v870 = vsub.f32 %v738, %v839
    %v871 = vsub.f32 %v739, %v839
    %v872 = vsel %vm756, %v840, 0.0
    %v873 = vsel %vm757, %v841, 0.0
    %v874 = vsel %vm758, %v842, 0.0
    %v875 = vsel %vm759, %v843, 0.0
    %v876 = vsel %vm760, %v844, 0.0
    %v877 = vsel %vm761, %v845, 0.0
    %v878 = vsel %vm762, %v846, 0.0
    %v879 = vsel %vm763, %v847, 0.0
    %v880 = vsel %vm764, %v848, 0.0
    %v881 = vsel %vm765, %v849, 0.0
    %v882 = vsel %vm766, %v850, 0.0
    %v883 = vsel %vm767, %v851, 0.0
    %v884 = vsel %vm768, %v852, 0.0
    %v885 = vsel %vm769, %v853, 0.0
    %v886 = vsel %vm770, %v854, 0.0
    %v887 = vsel %vm771, %v855, 0.0
    %v888 = vsel %vm756, %v856, 0.0
    %v889 = vsel %vm757, %v857, 0.0
    %v890 = vsel %vm758, %v858, 0.0
    %v891 = vsel %vm759, %v859, 0.0
    %v892 = vsel %vm760, %v860, 0.0
    %v893 = vsel %vm761, %v861, 0.0
    %v894 = vsel %vm762, %v862, 0.0
    %v895 = vsel %vm763, %v863, 0.0
    %v896 = vsel %vm764, %v864, 0.0
    %v897 = vsel %vm765, %v865, 0.0
    %v898 = vsel %vm766, %v866, 0.0
    %v899 = vsel %vm767, %v867, 0.0
    %v900 = vsel %vm768, %v868, 0.0
    %v901 = vsel %vm769, %v869, 0.0
    %v902 = vsel %vm770, %v870, 0.0
    %v903 = vsel %vm771, %v871, 0.0
    %v904 = vmul.f32 %v872, %v872
    %v905 = vmul.f32 %v873, %v873
    %v906 = vmul.f32 %v874, %v874
    %v907 = vmul.f32 %v875, %v875
    %v908 = vmul.f32 %v876, %v876
    %v909 = vmul.f32 %v877, %v877
    %v910 = vmul.f32 %v878, %v878
    %v911 = vmul.f32 %v879, %v879
    %v912 = vmul.f32 %v880, %v880
    %v913 = vmul.f32 %v881, %v881
    %v914 = vmul.f32 %v882, %v882
    %v915 = vmul.f32 %v883, %v883
    %v916 = vmul.f32 %v884, %v884
    %v917 = vmul.f32 %v885, %v885
    %v918 = vmul.f32 %v886, %v886
    %v919 = vmul.f32 %v887, %v887
    %v920 = vmul.f32 %v888, %v888
    %v921 = vmul.f32 %v889, %v889
    %v922 = vmul.f32 %v890, %v890
    %v923 = vmul.f32 %v891, %v891
    %v924 = vmul.f32 %v892, %v892
    %v925 = vmul.f32 %v893, %v893
    %v926 = vmul.f32 %v894, %v894
    %v927 = vmul.f32 %v895, %v895
    %v928 = vmul.f32 %v896, %v896
    %v929 = vmul.f32 %v897, %v897
    %v930 = vmul.f32 %v898, %v898
    %v931 = vmul.f32 %v899, %v899
    %v932 = vmul.f32 %v900, %v900
    %v933 = vmul.f32 %v901, %v901
    %v934 = vmul.f32 %v902, %v902
    %v935 = vmul.f32 %v903, %v903
    %v936 = vadd.f32 %v904, %v905
    %v937 = vadd.f32 %v936, %v906
    %v938 = vadd.f32 %v937, %v907
    %v939 = vadd.f32 %v938, %v908
    %v940 = vadd.f32 %v939, %v909
    %v941 = vadd.f32 %v940, %v910
    %v942 = vadd.f32 %v941, %v911
    %v943 = vadd.f32 %v942, %v912
    %v944 = vadd.f32 %v943, %v913
    %v945 = vadd.f32 %v944, %v914
    %v946 = vadd.f32 %v945, %v915
    %v947 = vadd.f32 %v946, %v916
    %v948 = vadd.f32 %v947, %v917
    %v949 = vadd.f32 %v948, %v918
    %v950 = vadd.f32 %v949, %v919
    %951 = vadd.xlane.f32.xlu0 %v950
    %v952 = vpop.xlane.xlu0 %951
    %v953 = vadd.f32 %v920, %v921
    %v954 = vadd.f32 %v953, %v922
    %v955 = vadd.f32 %v954, %v923
    %v956 = vadd.f32 %v955, %v924
    %v957 = vadd.f32 %v956, %v925
    %v958 = vadd.f32 %v957, %v926
    %v959 = vadd.f32 %v958, %v927
    %v960 = vadd.f32 %v959, %v928
    %v961 = vadd.f32 %v960, %v929
    %v962 = vadd.f32 %v961, %v930
    %v963 = vadd.f32 %v962, %v931
    %v964 = vadd.f32 %v963, %v932
    %v965 = vadd.f32 %v964, %v933
    %v966 = vadd.f32 %v965, %v934
    %v967 = vadd.f32 %v966, %v935
    %968 = vadd.xlane.f32.xlu0 %v967
    %v969 = vpop.xlane.xlu0 %968
    %v970 = vmul.f32 %v952, 0.0005
    %v971 = vmul.f32 %v969, 0.0005
    %v972 = vadd.f32 %v970, 1e-05
    %v973 = vadd.f32 %v971, 1e-05
    %v974 = vrsqrt.pop %v972
    %v975 = vrsqrt.pop %v973
    %v976 = vmul.f32 %v840, %v974
    %v977 = vmul.f32 %v841, %v974
    %v978 = vmul.f32 %v842, %v974
    %v979 = vmul.f32 %v843, %v974
    %v980 = vmul.f32 %v844, %v974
    %v981 = vmul.f32 %v845, %v974
    %v982 = vmul.f32 %v846, %v974
    %v983 = vmul.f32 %v847, %v974
    %v984 = vmul.f32 %v848, %v974
    %v985 = vmul.f32 %v849, %v974
    %v986 = vmul.f32 %v850, %v974
    %v987 = vmul.f32 %v851, %v974
    %v988 = vmul.f32 %v852, %v974
    %v989 = vmul.f32 %v853, %v974
    %v990 = vmul.f32 %v854, %v974
    %v991 = vmul.f32 %v855, %v974
    %v992 = vmul.f32 %v856, %v975
    %v993 = vmul.f32 %v857, %v975
    %v994 = vmul.f32 %v858, %v975
    %v995 = vmul.f32 %v859, %v975
    %v996 = vmul.f32 %v860, %v975
    %v997 = vmul.f32 %v861, %v975
    %v998 = vmul.f32 %v862, %v975
    %v999 = vmul.f32 %v863, %v975
    %v1000 = vmul.f32 %v864, %v975
    %v1001 = vmul.f32 %v865, %v975
    %v1002 = vmul.f32 %v866, %v975
    %v1003 = vmul.f32 %v867, %v975
    %v1004 = vmul.f32 %v868, %v975
    %v1005 = vmul.f32 %v869, %v975
    %v1006 = vmul.f32 %v870, %v975
    %v1007 = vmul.f32 %v871, %v975
    %v1008 = vmax.f32 %v976, 0.0
    %v1009 = vmax.f32 %v977, 0.0
    %v1010 = vmax.f32 %v978, 0.0
    %v1011 = vmax.f32 %v979, 0.0
    %v1012 = vmax.f32 %v980, 0.0
    %v1013 = vmax.f32 %v981, 0.0
    %v1014 = vmax.f32 %v982, 0.0
    %v1015 = vmax.f32 %v983, 0.0
    %v1016 = vmax.f32 %v984, 0.0
    %v1017 = vmax.f32 %v985, 0.0
    %v1018 = vmax.f32 %v986, 0.0
    %v1019 = vmax.f32 %v987, 0.0
    %v1020 = vmax.f32 %v988, 0.0
    %v1021 = vmax.f32 %v989, 0.0
    %v1022 = vmax.f32 %v990, 0.0
    %v1023 = vmax.f32 %v991, 0.0
    %v1024 = vmax.f32 %v992, 0.0
    %v1025 = vmax.f32 %v993, 0.0
    %v1026 = vmax.f32 %v994, 0.0
    %v1027 = vmax.f32 %v995, 0.0
    %v1028 = vmax.f32 %v996, 0.0
    %v1029 = vmax.f32 %v997, 0.0
    %v1030 = vmax.f32 %v998, 0.0
    %v1031 = vmax.f32 %v999, 0.0
    %v1032 = vmax.f32 %v1000, 0.0
    %v1033 = vmax.f32 %v1001, 0.0
    %v1034 = vmax.f32 %v1002, 0.0
    %v1035 = vmax.f32 %v1003, 0.0
    %v1036 = vmax.f32 %v1004, 0.0
    %v1037 = vmax.f32 %v1005, 0.0
    %v1038 = vmax.f32 %v1006, 0.0
    %v1039 = vmax.f32 %v1007, 0.0
    %v1040 = vld [vmem:[%s3] sm:$0xff]
    %v1041 = vld [vmem:[%s3 + $0x8] sm:$0xff]
    %v1042 = vld [vmem:[%s3 + $0x10] sm:$0xff]
    %v1043 = vld [vmem:[%s3 + $0x18] sm:$0xff]
    %v1044 = vld [vmem:[%s4] sm:$0xff]
    %v1045 = vld [vmem:[%s4 + $0x8] sm:$0xff]
    %v1046 = vld [vmem:[%s4 + $0x10] sm:$0xff]
    %v1047 = vld [vmem:[%s4 + $0x18] sm:$0xff]
    %1049 = vset.pattern.permute.xlu0 0
    %1050 = vperm.xlu0 %1049, %v1044
    %v1051 = vpop.permute.xlu0 %1050
    %1054 = vset.pattern.permute.xlu0 0
    %1055 = vperm.xlu0 %1054, %v1045
    %v1056 = vpop.permute.xlu0 %1055
    %1059 = vset.pattern.permute.xlu0 0
    %1060 = vperm.xlu0 %1059, %v1046
    %v1061 = vpop.permute.xlu0 %1060
    %1064 = vset.pattern.permute.xlu0 0
    %1065 = vperm.xlu0 %1064, %v1047
    %v1066 = vpop.permute.xlu0 %1065
    %vm1068 = vcmask 130048
    %v1070 = vsel %vm1068, %v1040, 0
    %v1073 = vsel %vm1068, %v1041, 0
    %v1076 = vsel %vm1068, %v1042, 0
    %v1079 = vsel %vm1068, %v1043, 0
    %1081 = vmatprep.subr.mxu0 %v1009
    %1082 = vmatpush1.msra.mxu0 %v1008
    %1083 = vmatprep.subr.mxu0 %v1025
    %1084 = vmatpush1.msra.mxu0 %v1024
    %1085 = vmatprep.subr.mxu0 0.0
    %1086 = vmatpush1.msra.mxu0 0.0
    %1087 = vmatprep.subr.mxu0 0.0
    %1088 = vmatpush1.msra.mxu0 0.0
    %1089 = vmatprep.subr.mxu0 0.0
    %1090 = vmatpush1.msra.mxu0 0.0
    %1091 = vmatprep.subr.mxu0 0.0
    %1092 = vmatpush1.msra.mxu0 0.0
    %1093 = vmatprep.subr.mxu0 0.0
    %1094 = vmatpush1.msra.mxu0 0.0
    %1095 = vmatprep.subr.mxu0 0.0
    %1096 = vmatpush1.msra.mxu0 0.0
    %1097 = vmatprep.subr.mxu0 0.0
    %1098 = vmatpush1.msra.mxu0 0.0
    %1099 = vmatprep.subr.mxu0 0.0
    %1100 = vmatpush1.msra.mxu0 0.0
    %1101 = vmatprep.subr.mxu0 0.0
    %1102 = vmatpush1.msra.mxu0 0.0
    %1103 = vmatprep.subr.mxu0 0.0
    %1104 = vmatpush1.msra.mxu0 0.0
    %1105 = vmatprep.subr.mxu0 0.0
    %1106 = vmatpush1.msra.mxu0 0.0
    %1107 = vmatprep.subr.mxu0 0.0
    %1108 = vmatpush1.msra.mxu0 0.0
    %1109 = vmatprep.subr.mxu0 0.0
    %1110 = vmatpush1.msra.mxu0 0.0
    %1111 = vmatprep.subr.mxu0 0.0
    %1112 = vmatpush1.msra.mxu0 0.0
    %1113 = vmatprep.subr.mxu0 0.0
    %1114 = vmatpush1.msra.mxu0 0.0
    %1115 = vmatprep.subr.mxu0 0.0
    %1116 = vmatpush1.msra.mxu0 0.0
    %1117 = vmatprep.subr.mxu0 0.0
    %1118 = vmatpush1.msra.mxu0 0.0
    %1119 = vmatprep.subr.mxu0 0.0
    %1120 = vmatpush1.msra.mxu0 0.0
    %1121 = vmatprep.subr.mxu0 0.0
    %1122 = vmatpush1.msra.mxu0 0.0
    %1123 = vmatprep.subr.mxu0 0.0
    %1124 = vmatpush1.msra.mxu0 0.0
    %1125 = vmatprep.subr.mxu0 0.0
    %1126 = vmatpush1.msra.mxu0 0.0
    %1127 = vmatprep.subr.mxu0 0.0
    %1128 = vmatpush1.msra.mxu0 0.0
    %1129 = vmatprep.subr.mxu0 0.0
    %1130 = vmatpush1.msra.mxu0 0.0
    %1131 = vmatprep.subr.mxu0 0.0
    %1132 = vmatpush1.msra.mxu0 0.0
    %1133 = vmatprep.subr.mxu0 0.0
    %1134 = vmatpush1.msra.mxu0 0.0
    %1135 = vmatprep.subr.mxu0 0.0
    %1136 = vmatpush1.msra.mxu0 0.0
    %1137 = vmatprep.subr.mxu0 0.0
    %1138 = vmatpush1.msra.mxu0 0.0
    %1139 = vmatprep.subr.mxu0 0.0
    %1140 = vmatpush1.msra.mxu0 0.0
    %1141 = vmatprep.subr.mxu0 0.0
    %1142 = vmatpush1.msra.mxu0 0.0
    %1143 = vmatprep.subr.mxu0 0.0
    %1144 = vmatpush1.msra.mxu0 0.0
    %1145 = vmatprep.mubr.f32.mxu0 0.0
    %1146 = vmatmul.mubr.f32.gmra.mrb[0].mxu0 %v1070
    %v1147 = vpop.f32.mrb[0].mxu0
    %v1148 = vadd.f32 %v1051, %v1147
    %v1149 = vpop.f32.mrb[0].mxu0
    %v1150 = vadd.f32 %v1051, %v1149
    %1151 = vmatprep.mubr.f32.mxu0 0.0
    %1152 = vmatmul.mubr.f32.gmra.mrb[0].mxu0 %v1073
    %v1153 = vpop.f32.mrb[0].mxu0
    %v1154 = vadd.f32 %v1056, %v1153
    %v1155 = vpop.f32.mrb[0].mxu0
    %v1156 = vadd.f32 %v1056, %v1155
    %1157 = vmatprep.mubr.f32.mxu0 0.0
    %1158 = vmatmul.mubr.f32.gmra.mrb[0].mxu0 %v1076
    %v1159 = vpop.f32.mrb[0].mxu0
    %v1160 = vadd.f32 %v1061, %v1159
    %v1161 = vpop.f32.mrb[0].mxu0
    %v1162 = vadd.f32 %v1061, %v1161
    %1163 = vmatprep.mubr.f32.mxu0 0.0
    %1164 = vmatmul.mubr.f32.gmra.mrb[0].mxu0 %v1079
    %v1165 = vpop.f32.mrb[0].mxu0
    %v1166 = vadd.f32 %v1066, %v1165
    %v1167 = vpop.f32.mrb[0].mxu0
    %v1168 = vadd.f32 %v1066, %v1167
    %1169 = vdwg.mxu0
    %1170 = vmatprep.subr.mxu0 %v1011
    %1171 = vmatpush1.msra.mxu0 %v1010
    %1172 = vmatprep.subr.mxu0 %v1027
    %1173 = vmatpush1.msra.mxu0 %v1026
    %1174 = vmatprep.subr.mxu0 0.0
    %1175 = vmatpush1.msra.mxu0 0.0
    %1176 = vmatprep.subr.mxu0 0.0
    %1177 = vmatpush1.msra.mxu0 0.0
    %1178 = vmatprep.subr.mxu0 0.0
    %1179 = vmatpush1.msra.mxu0 0.0
    %1180 = vmatprep.subr.mxu0 0.0
    %1181 = vmatpush1.msra.mxu0 0.0
    %1182 = vmatprep.subr.mxu0 0.0
    %1183 = vmatpush1.msra.mxu0 0.0
    %1184 = vmatprep.subr.mxu0 0.0
    %1185 = vmatpush1.msra.mxu0 0.0
    %1186 = vmatprep.subr.mxu0 0.0
    %1187 = vmatpush1.msra.mxu0 0.0
    %1188 = vmatprep.subr.mxu0 0.0
    %1189 = vmatpush1.msra.mxu0 0.0
    %1190 = vmatprep.subr.mxu0 0.0
    %1191 = vmatpush1.msra.mxu0 0.0
    %1192 = vmatprep.subr.mxu0 0.0
    %1193 = vmatpush1.msra.mxu0 0.0
    %1194 = vmatprep.subr.mxu0 0.0
    %1195 = vmatpush1.msra.mxu0 0.0
    %1196 = vmatprep.subr.mxu0 0.0
    %1197 = vmatpush1.msra.mxu0 0.0
    %1198 = vmatprep.subr.mxu0 0.0
    %1199 = vmatpush1.msra.mxu0 0.0
    %1200 = vmatprep.subr.mxu0 0.0
    %1201 = vmatpush1.msra.mxu0 0.0
    %1202 = vmatprep.subr.mxu0 0.0
    %1203 = vmatpush1.msra.mxu0 0.0
    %1204 = vmatprep.subr.mxu0 0.0
    %1205 = vmatpush1.msra.mxu0 0.0
    %1206 = vmatprep.subr.mxu0 0.0
    %1207 = vmatpush1.msra.mxu0 0.0
    %1208 = vmatprep.subr.mxu0 0.0
    %1209 = vmatpush1.msra.mxu0 0.0
    %1210 = vmatprep.subr.mxu0 0.0
    %1211 = vmatpush1.msra.mxu0 0.0
    %1212 = vmatprep.subr.mxu0 0.0
    %1213 = vmatpush1.msra.mxu0 0.0
    %1214 = vmatprep.subr.mxu0 0.0
    %1215 = vmatpush1.msra.mxu0 0.0
    %1216 = vmatprep.subr.mxu0 0.0
    %1217 = vmatpush1.msra.mxu0 0.0
    %1218 = vmatprep.subr.mxu0 0.0
    %1219 = vmatpush1.msra.mxu0 0.0
    %1220 = vmatprep.subr.mxu0 0.0
    %1221 = vmatpush1.msra.mxu0 0.0
    %1222 = vmatprep.subr.mxu0 0.0
    %1223 = vmatpush1.msra.mxu0 0.0
    %1224 = vmatprep.subr.mxu0 0.0
    %1225 = vmatpush1.msra.mxu0 0.0
    %1226 = vmatprep.subr.mxu0 0.0
    %1227 = vmatpush1.msra.mxu0 0.0
    %1228 = vmatprep.subr.mxu0 0.0
    %1229 = vmatpush1.msra.mxu0 0.0
    %1230 = vmatprep.subr.mxu0 0.0
    %1231 = vmatpush1.msra.mxu0 0.0
    %1232 = vmatprep.subr.mxu0 0.0
    %1233 = vmatpush1.msra.mxu0 0.0
    %1234 = vmatprep.mubr.f32.mxu0 0.0
    %1235 = vmatmul.mubr.f32.gmra.mrb[0].mxu0 %v1070
    %v1236 = vpop.f32.mrb[0].mxu0
    %v1237 = vadd.f32 %v1051, %v1236
    %v1238 = vpop.f32.mrb[0].mxu0
    %v1239 = vadd.f32 %v1051, %v1238
    %1240 = vmatprep.mubr.f32.mxu0 0.0
    %1241 = vmatmul.mubr.f32.gmra.mrb[0].mxu0 %v1073
    %v1242 = vpop.f32.mrb[0].mxu0
    %v1243 = vadd.f32 %v1056, %v1242
    %v1244 = vpop.f32.mrb[0].mxu0
    %v1245 = vadd.f32 %v1056, %v1244
    %1246 = vmatprep.mubr.f32.mxu0 0.0
    %1247 = vmatmul.mubr.f32.gmra.mrb[0].mxu0 %v1076
    %v1248 = vpop.f32.mrb[0].mxu0
    %v1249 = vadd.f32 %v1061, %v1248
    %v1250 = vpop.f32.mrb[0].mxu0
    %v1251 = vadd.f32 %v1061, %v1250
    %1252 = vmatprep.mubr.f32.mxu0 0.0
    %1253 = vmatmul.mubr.f32.gmra.mrb[0].mxu0 %v1079
    %v1254 = vpop.f32.mrb[0].mxu0
    %v1255 = vadd.f32 %v1066, %v1254
    %v1256 = vpop.f32.mrb[0].mxu0
    %v1257 = vadd.f32 %v1066, %v1256
    %1258 = vdwg.mxu0
    %1259 = vmatprep.subr.mxu0 %v1013
    %1260 = vmatpush1.msra.mxu0 %v1012
    %1261 = vmatprep.subr.mxu0 %v1029
    %1262 = vmatpush1.msra.mxu0 %v1028
    %1263 = vmatprep.subr.mxu0 0.0
    %1264 = vmatpush1.msra.mxu0 0.0
    %1265 = vmatprep.subr.mxu0 0.0
    %1266 = vmatpush1.msra.mxu0 0.0
    %1267 = vmatprep.subr.mxu0 0.0
    %1268 = vmatpush1.msra.mxu0 0.0
    %1269 = vmatprep.subr.mxu0 0.0
    %1270 = vmatpush1.msra.mxu0 0.0
    %1271 = vmatprep.subr.mxu0 0.0
    %1272 = vmatpush1.msra.mxu0 0.0
    %1273 = vmatprep.subr.mxu0 0.0
    %1274 = vmatpush1.msra.mxu0 0.0
    %1275 = vmatprep.subr.mxu0 0.0
    %1276 = vmatpush1.msra.mxu0 0.0
    %1277 = vmatprep.subr.mxu0 0.0
    %1278 = vmatpush1.msra.mxu0 0.0
    %1279 = vmatprep.subr.mxu0 0.0
    %1280 = vmatpush1.msra.mxu0 0.0
    %1281 = vmatprep.subr.mxu0 0.0
    %1282 = vmatpush1.msra.mxu0 0.0
    %1283 = vmatprep.subr.mxu0 0.0
    %1284 = vmatpush1.msra.mxu0 0.0
    %1285 = vmatprep.subr.mxu0 0.0
    %1286 = vmatpush1.msra.mxu0 0.0
    %1287 = vmatprep.subr.mxu0 0.0
    %1288 = vmatpush1.msra.mxu0 0.0
    %1289 = vmatprep.subr.mxu0 0.0
    %1290 = vmatpush1.msra.mxu0 0.0
    %1291 = vmatprep.subr.mxu0 0.0
    %1292 = vmatpush1.msra.mxu0 0.0
    %1293 = vmatprep.subr.mxu0 0.0
    %1294 = vmatpush1.msra.mxu0 0.0
    %1295 = vmatprep.subr.mxu0 0.0
    %1296 = vmatpush1.msra.mxu0 0.0
    %1297 = vmatprep.subr.mxu0 0.0
    %1298 = vmatpush1.msra.mxu0 0.0
    %1299 = vmatprep.subr.mxu0 0.0
    %1300 = vmatpush1.msra.mxu0 0.0
    %1301 = vmatprep.subr.mxu0 0.0
    %1302 = vmatpush1.msra.mxu0 0.0
    %1303 = vmatprep.subr.mxu0 0.0
    %1304 = vmatpush1.msra.mxu0 0.0
    %1305 = vmatprep.subr.mxu0 0.0
    %1306 = vmatpush1.msra.mxu0 0.0
    %1307 = vmatprep.subr.mxu0 0.0
    %1308 = vmatpush1.msra.mxu0 0.0
    %1309 = vmatprep.subr.mxu0 0.0
    %1310 = vmatpush1.msra.mxu0 0.0
    %1311 = vmatprep.subr.mxu0 0.0
    %1312 = vmatpush1.msra.mxu0 0.0
    %1313 = vmatprep.subr.mxu0 0.0
    %1314 = vmatpush1.msra.mxu0 0.0
    %1315 = vmatprep.subr.mxu0 0.0
    %1316 = vmatpush1.msra.mxu0 0.0
    %1317 = vmatprep.subr.mxu0 0.0
    %1318 = vmatpush1.msra.mxu0 0.0
    %1319 = vmatprep.subr.mxu0 0.0
    %1320 = vmatpush1.msra.mxu0 0.0
    %1321 = vmatprep.subr.mxu0 0.0
    %1322 = vmatpush1.msra.mxu0 0.0
    %1323 = vmatprep.mubr.f32.mxu0 0.0
    %1324 = vmatmul.mubr.f32.gmra.mrb[0].mxu0 %v1070
    %v1325 = vpop.f32.mrb[0].mxu0
    %v1326 = vadd.f32 %v1051, %v1325
    %v1327 = vpop.f32.mrb[0].mxu0
    %v1328 = vadd.f32 %v1051, %v1327
    %1329 = vmatprep.mubr.f32.mxu0 0.0
    %1330 = vmatmul.mubr.f32.gmra.mrb[0].mxu0 %v1073
    %v1331 = vpop.f32.mrb[0].mxu0
    %v1332 = vadd.f32 %v1056, %v1331
    %v1333 = vpop.f32.mrb[0].mxu0
    %v1334 = vadd.f32 %v1056, %v1333
    %1335 = vmatprep.mubr.f32.mxu0 0.0
    %1336 = vmatmul.mubr.f32.gmra.mrb[0].mxu0 %v1076
    %v1337 = vpop.f32.mrb[0].mxu0
    %v1338 = vadd.f32 %v1061, %v1337
    %v1339 = vpop.f32.mrb[0].mxu0
    %v1340 = vadd.f32 %v1061, %v1339
    %1341 = vmatprep.mubr.f32.mxu0 0.0
    %1342 = vmatmul.mubr.f32.gmra.mrb[0].mxu0 %v1079
    %v1343 = vpop.f32.mrb[0].mxu0
    %v1344 = vadd.f32 %v1066, %v1343
    %v1345 = vpop.f32.mrb[0].mxu0
    %v1346 = vadd.f32 %v1066, %v1345
    %1347 = vdwg.mxu0
    %1348 = vmatprep.subr.mxu0 %v1015
    %1349 = vmatpush1.msra.mxu0 %v1014
    %1350 = vmatprep.subr.mxu0 %v1031
    %1351 = vmatpush1.msra.mxu0 %v1030
    %1352 = vmatprep.subr.mxu0 0.0
    %1353 = vmatpush1.msra.mxu0 0.0
    %1354 = vmatprep.subr.mxu0 0.0
    %1355 = vmatpush1.msra.mxu0 0.0
    %1356 = vmatprep.subr.mxu0 0.0
    %1357 = vmatpush1.msra.mxu0 0.0
    %1358 = vmatprep.subr.mxu0 0.0
    %1359 = vmatpush1.msra.mxu0 0.0
    %1360 = vmatprep.subr.mxu0 0.0
    %1361 = vmatpush1.msra.mxu0 0.0
    %1362 = vmatprep.subr.mxu0 0.0
    %1363 = vmatpush1.msra.mxu0 0.0
    %1364 = vmatprep.subr.mxu0 0.0
    %1365 = vmatpush1.msra.mxu0 0.0
    %1366 = vmatprep.subr.mxu0 0.0
    %1367 = vmatpush1.msra.mxu0 0.0
    %1368 = vmatprep.subr.mxu0 0.0
    %1369 = vmatpush1.msra.mxu0 0.0
    %1370 = vmatprep.subr.mxu0 0.0
    %1371 = vmatpush1.msra.mxu0 0.0
    %1372 = vmatprep.subr.mxu0 0.0
    %1373 = vmatpush1.msra.mxu0 0.0
    %1374 = vmatprep.subr.mxu0 0.0
    %1375 = vmatpush1.msra.mxu0 0.0
    %1376 = vmatprep.subr.mxu0 0.0
    %1377 = vmatpush1.msra.mxu0 0.0
    %1378 = vmatprep.subr.mxu0 0.0
    %1379 = vmatpush1.msra.mxu0 0.0
    %1380 = vmatprep.subr.mxu0 0.0
    %1381 = vmatpush1.msra.mxu0 0.0
    %1382 = vmatprep.subr.mxu0 0.0
    %1383 = vmatpush1.msra.mxu0 0.0
    %1384 = vmatprep.subr.mxu0 0.0
    %1385 = vmatpush1.msra.mxu0 0.0
    %1386 = vmatprep.subr.mxu0 0.0
    %1387 = vmatpush1.msra.mxu0 0.0
    %1388 = vmatprep.subr.mxu0 0.0
    %1389 = vmatpush1.msra.mxu0 0.0
    %1390 = vmatprep.subr.mxu0 0.0
    %1391 = vmatpush1.msra.mxu0 0.0
    %1392 = vmatprep.subr.mxu0 0.0
    %1393 = vmatpush1.msra.mxu0 0.0
    %1394 = vmatprep.subr.mxu0 0.0
    %1395 = vmatpush1.msra.mxu0 0.0
    %1396 = vmatprep.subr.mxu0 0.0
    %1397 = vmatpush1.msra.mxu0 0.0
    %1398 = vmatprep.subr.mxu0 0.0
    %1399 = vmatpush1.msra.mxu0 0.0
    %1400 = vmatprep.subr.mxu0 0.0
    %1401 = vmatpush1.msra.mxu0 0.0
    %1402 = vmatprep.subr.mxu0 0.0
    %1403 = vmatpush1.msra.mxu0 0.0
    %1404 = vmatprep.subr.mxu0 0.0
    %1405 = vmatpush1.msra.mxu0 0.0
    %1406 = vmatprep.subr.mxu0 0.0
    %1407 = vmatpush1.msra.mxu0 0.0
    %1408 = vmatprep.subr.mxu0 0.0
    %1409 = vmatpush1.msra.mxu0 0.0
    %1410 = vmatprep.subr.mxu0 0.0
    %1411 = vmatpush1.msra.mxu0 0.0
    %1412 = vmatprep.mubr.f32.mxu0 0.0
    %1413 = vmatmul.mubr.f32.gmra.mrb[0].mxu0 %v1070
    %v1414 = vpop.f32.mrb[0].mxu0
    %v1415 = vadd.f32 %v1051, %v1414
    %v1416 = vpop.f32.mrb[0].mxu0
    %v1417 = vadd.f32 %v1051, %v1416
    %1418 = vmatprep.mubr.f32.mxu0 0.0
    %1419 = vmatmul.mubr.f32.gmra.mrb[0].mxu0 %v1073
    %v1420 = vpop.f32.mrb[0].mxu0
    %v1421 = vadd.f32 %v1056, %v1420
    %v1422 = vpop.f32.mrb[0].mxu0
    %v1423 = vadd.f32 %v1056, %v1422
    %1424 = vmatprep.mubr.f32.mxu0 0.0
    %1425 = vmatmul.mubr.f32.gmra.mrb[0].mxu0 %v1076
    %v1426 = vpop.f32.mrb[0].mxu0
    %v1427 = vadd.f32 %v1061, %v1426
    %v1428 = vpop.f32.mrb[0].mxu0
    %v1429 = vadd.f32 %v1061, %v1428
    %1430 = vmatprep.mubr.f32.mxu0 0.0
    %1431 = vmatmul.mubr.f32.gmra.mrb[0].mxu0 %v1079
    %v1432 = vpop.f32.mrb[0].mxu0
    %v1433 = vadd.f32 %v1066, %v1432
    %v1434 = vpop.f32.mrb[0].mxu0
    %v1435 = vadd.f32 %v1066, %v1434
    %1436 = vdwg.mxu0
    %1437 = vmatprep.subr.mxu0 %v1017
    %1438 = vmatpush1.msra.mxu0 %v1016
    %1439 = vmatprep.subr.mxu0 %v1033
    %1440 = vmatpush1.msra.mxu0 %v1032
    %1441 = vmatprep.subr.mxu0 0.0
    %1442 = vmatpush1.msra.mxu0 0.0
    %1443 = vmatprep.subr.mxu0 0.0
    %1444 = vmatpush1.msra.mxu0 0.0
    %1445 = vmatprep.subr.mxu0 0.0
    %1446 = vmatpush1.msra.mxu0 0.0
    %1447 = vmatprep.subr.mxu0 0.0
    %1448 = vmatpush1.msra.mxu0 0.0
    %1449 = vmatprep.subr.mxu0 0.0
    %1450 = vmatpush1.msra.mxu0 0.0
    %1451 = vmatprep.subr.mxu0 0.0
    %1452 = vmatpush1.msra.mxu0 0.0
    %1453 = vmatprep.subr.mxu0 0.0
    %1454 = vmatpush1.msra.mxu0 0.0
    %1455 = vmatprep.subr.mxu0 0.0
    %1456 = vmatpush1.msra.mxu0 0.0
    %1457 = vmatprep.subr.mxu0 0.0
    %1458 = vmatpush1.msra.mxu0 0.0
    %1459 = vmatprep.subr.mxu0 0.0
    %1460 = vmatpush1.msra.mxu0 0.0
    %1461 = vmatprep.subr.mxu0 0.0
    %1462 = vmatpush1.msra.mxu0 0.0
    %1463 = vmatprep.subr.mxu0 0.0
    %1464 = vmatpush1.msra.mxu0 0.0
    %1465 = vmatprep.subr.mxu0 0.0
    %1466 = vmatpush1.msra.mxu0 0.0
    %1467 = vmatprep.subr.mxu0 0.0
    %1468 = vmatpush1.msra.mxu0 0.0
    %1469 = vmatprep.subr.mxu0 0.0
    %1470 = vmatpush1.msra.mxu0 0.0
    %1471 = vmatprep.subr.mxu0 0.0
    %1472 = vmatpush1.msra.mxu0 0.0
    %1473 = vmatprep.subr.mxu0 0.0
    %1474 = vmatpush1.msra.mxu0 0.0
    %1475 = vmatprep.subr.mxu0 0.0
    %1476 = vmatpush1.msra.mxu0 0.0
    %1477 = vmatprep.subr.mxu0 0.0
    %1478 = vmatpush1.msra.mxu0 0.0
    %1479 = vmatprep.subr.mxu0 0.0
    %1480 = vmatpush1.msra.mxu0 0.0
    %1481 = vmatprep.subr.mxu0 0.0
    %1482 = vmatpush1.msra.mxu0 0.0
    %1483 = vmatprep.subr.mxu0 0.0
    %1484 = vmatpush1.msra.mxu0 0.0
    %1485 = vmatprep.subr.mxu0 0.0
    %1486 = vmatpush1.msra.mxu0 0.0
    %1487 = vmatprep.subr.mxu0 0.0
    %1488 = vmatpush1.msra.mxu0 0.0
    %1489 = vmatprep.subr.mxu0 0.0
    %1490 = vmatpush1.msra.mxu0 0.0
    %1491 = vmatprep.subr.mxu0 0.0
    %1492 = vmatpush1.msra.mxu0 0.0
    %1493 = vmatprep.subr.mxu0 0.0
    %1494 = vmatpush1.msra.mxu0 0.0
    %1495 = vmatprep.subr.mxu0 0.0
    %1496 = vmatpush1.msra.mxu0 0.0
    %1497 = vmatprep.subr.mxu0 0.0
    %1498 = vmatpush1.msra.mxu0 0.0
    %1499 = vmatprep.subr.mxu0 0.0
    %1500 = vmatpush1.msra.mxu0 0.0
    %1501 = vmatprep.mubr.f32.mxu0 0.0
    %1502 = vmatmul.mubr.f32.gmra.mrb[0].mxu0 %v1070
    %v1503 = vpop.f32.mrb[0].mxu0
    %v1504 = vadd.f32 %v1051, %v1503
    %v1505 = vpop.f32.mrb[0].mxu0
    %v1506 = vadd.f32 %v1051, %v1505
    %1507 = vmatprep.mubr.f32.mxu0 0.0
    %1508 = vmatmul.mubr.f32.gmra.mrb[0].mxu0 %v1073
    %v1509 = vpop.f32.mrb[0].mxu0
    %v1510 = vadd.f32 %v1056, %v1509
    %v1511 = vpop.f32.mrb[0].mxu0
    %v1512 = vadd.f32 %v1056, %v1511
    %1513 = vmatprep.mubr.f32.mxu0 0.0
    %1514 = vmatmul.mubr.f32.gmra.mrb[0].mxu0 %v1076
    %v1515 = vpop.f32.mrb[0].mxu0
    %v1516 = vadd.f32 %v1061, %v1515
    %v1517 = vpop.f32.mrb[0].mxu0
    %v1518 = vadd.f32 %v1061, %v1517
    %1519 = vmatprep.mubr.f32.mxu0 0.0
    %1520 = vmatmul.mubr.f32.gmra.mrb[0].mxu0 %v1079
    %v1521 = vpop.f32.mrb[0].mxu0
    %v1522 = vadd.f32 %v1066, %v1521
    %v1523 = vpop.f32.mrb[0].mxu0
    %v1524 = vadd.f32 %v1066, %v1523
    %1525 = vdwg.mxu0
    %1526 = vmatprep.subr.mxu0 %v1019
    %1527 = vmatpush1.msra.mxu0 %v1018
    %1528 = vmatprep.subr.mxu0 %v1035
    %1529 = vmatpush1.msra.mxu0 %v1034
    %1530 = vmatprep.subr.mxu0 0.0
    %1531 = vmatpush1.msra.mxu0 0.0
    %1532 = vmatprep.subr.mxu0 0.0
    %1533 = vmatpush1.msra.mxu0 0.0
    %1534 = vmatprep.subr.mxu0 0.0
    %1535 = vmatpush1.msra.mxu0 0.0
    %1536 = vmatprep.subr.mxu0 0.0
    %1537 = vmatpush1.msra.mxu0 0.0
    %1538 = vmatprep.subr.mxu0 0.0
    %1539 = vmatpush1.msra.mxu0 0.0
    %1540 = vmatprep.subr.mxu0 0.0
    %1541 = vmatpush1.msra.mxu0 0.0
    %1542 = vmatprep.subr.mxu0 0.0
    %1543 = vmatpush1.msra.mxu0 0.0
    %1544 = vmatprep.subr.mxu0 0.0
    %1545 = vmatpush1.msra.mxu0 0.0
    %1546 = vmatprep.subr.mxu0 0.0
    %1547 = vmatpush1.msra.mxu0 0.0
    %1548 = vmatprep.subr.mxu0 0.0
    %1549 = vmatpush1.msra.mxu0 0.0
    %1550 = vmatprep.subr.mxu0 0.0
    %1551 = vmatpush1.msra.mxu0 0.0
    %1552 = vmatprep.subr.mxu0 0.0
    %1553 = vmatpush1.msra.mxu0 0.0
    %1554 = vmatprep.subr.mxu0 0.0
    %1555 = vmatpush1.msra.mxu0 0.0
    %1556 = vmatprep.subr.mxu0 0.0
    %1557 = vmatpush1.msra.mxu0 0.0
    %1558 = vmatprep.subr.mxu0 0.0
    %1559 = vmatpush1.msra.mxu0 0.0
    %1560 = vmatprep.subr.mxu0 0.0
    %1561 = vmatpush1.msra.mxu0 0.0
    %1562 = vmatprep.subr.mxu0 0.0
    %1563 = vmatpush1.msra.mxu0 0.0
    %1564 = vmatprep.subr.mxu0 0.0
    %1565 = vmatpush1.msra.mxu0 0.0
    %1566 = vmatprep.subr.mxu0 0.0
    %1567 = vmatpush1.msra.mxu0 0.0
    %1568 = vmatprep.subr.mxu0 0.0
    %1569 = vmatpush1.msra.mxu0 0.0
    %1570 = vmatprep.subr.mxu0 0.0
    %1571 = vmatpush1.msra.mxu0 0.0
    %1572 = vmatprep.subr.mxu0 0.0
    %1573 = vmatpush1.msra.mxu0 0.0
    %1574 = vmatprep.subr.mxu0 0.0
    %1575 = vmatpush1.msra.mxu0 0.0
    %1576 = vmatprep.subr.mxu0 0.0
    %1577 = vmatpush1.msra.mxu0 0.0
    %1578 = vmatprep.subr.mxu0 0.0
    %1579 = vmatpush1.msra.mxu0 0.0
    %1580 = vmatprep.subr.mxu0 0.0
    %1581 = vmatpush1.msra.mxu0 0.0
    %1582 = vmatprep.subr.mxu0 0.0
    %1583 = vmatpush1.msra.mxu0 0.0
    %1584 = vmatprep.subr.mxu0 0.0
    %1585 = vmatpush1.msra.mxu0 0.0
    %1586 = vmatprep.subr.mxu0 0.0
    %1587 = vmatpush1.msra.mxu0 0.0
    %1588 = vmatprep.subr.mxu0 0.0
    %1589 = vmatpush1.msra.mxu0 0.0
    %1590 = vmatprep.mubr.f32.mxu0 0.0
    %1591 = vmatmul.mubr.f32.gmra.mrb[0].mxu0 %v1070
    %v1592 = vpop.f32.mrb[0].mxu0
    %v1593 = vadd.f32 %v1051, %v1592
    %v1594 = vpop.f32.mrb[0].mxu0
    %v1595 = vadd.f32 %v1051, %v1594
    %1596 = vmatprep.mubr.f32.mxu0 0.0
    %1597 = vmatmul.mubr.f32.gmra.mrb[0].mxu0 %v1073
    %v1598 = vpop.f32.mrb[0].mxu0
    %v1599 = vadd.f32 %v1056, %v1598
    %v1600 = vpop.f32.mrb[0].mxu0
    %v1601 = vadd.f32 %v1056, %v1600
    %1602 = vmatprep.mubr.f32.mxu0 0.0
    %1603 = vmatmul.mubr.f32.gmra.mrb[0].mxu0 %v1076
    %v1604 = vpop.f32.mrb[0].mxu0
    %v1605 = vadd.f32 %v1061, %v1604
    %v1606 = vpop.f32.mrb[0].mxu0
    %v1607 = vadd.f32 %v1061, %v1606
    %1608 = vmatprep.mubr.f32.mxu0 0.0
    %1609 = vmatmul.mubr.f32.gmra.mrb[0].mxu0 %v1079
    %v1610 = vpop.f32.mrb[0].mxu0
    %v1611 = vadd.f32 %v1066, %v1610
    %v1612 = vpop.f32.mrb[0].mxu0
    %v1613 = vadd.f32 %v1066, %v1612
    %1614 = vdwg.mxu0
    %1615 = vmatprep.subr.mxu0 %v1021
    %1616 = vmatpush1.msra.mxu0 %v1020
    %1617 = vmatprep.subr.mxu0 %v1037
    %1618 = vmatpush1.msra.mxu0 %v1036
    %1619 = vmatprep.subr.mxu0 0.0
    %1620 = vmatpush1.msra.mxu0 0.0
    %1621 = vmatprep.subr.mxu0 0.0
    %1622 = vmatpush1.msra.mxu0 0.0
    %1623 = vmatprep.subr.mxu0 0.0
    %1624 = vmatpush1.msra.mxu0 0.0
    %1625 = vmatprep.subr.mxu0 0.0
    %1626 = vmatpush1.msra.mxu0 0.0
    %1627 = vmatprep.subr.mxu0 0.0
    %1628 = vmatpush1.msra.mxu0 0.0
    %1629 = vmatprep.subr.mxu0 0.0
    %1630 = vmatpush1.msra.mxu0 0.0
    %1631 = vmatprep.subr.mxu0 0.0
    %1632 = vmatpush1.msra.mxu0 0.0
    %1633 = vmatprep.subr.mxu0 0.0
    %1634 = vmatpush1.msra.mxu0 0.0
    %1635 = vmatprep.subr.mxu0 0.0
    %1636 = vmatpush1.msra.mxu0 0.0
    %1637 = vmatprep.subr.mxu0 0.0
    %1638 = vmatpush1.msra.mxu0 0.0
    %1639 = vmatprep.subr.mxu0 0.0
    %1640 = vmatpush1.msra.mxu0 0.0
    %1641 = vmatprep.subr.mxu0 0.0
    %1642 = vmatpush1.msra.mxu0 0.0
    %1643 = vmatprep.subr.mxu0 0.0
    %1644 = vmatpush1.msra.mxu0 0.0
    %1645 = vmatprep.subr.mxu0 0.0
    %1646 = vmatpush1.msra.mxu0 0.0
    %1647 = vmatprep.subr.mxu0 0.0
    %1648 = vmatpush1.msra.mxu0 0.0
    %1649 = vmatprep.subr.mxu0 0.0
    %1650 = vmatpush1.msra.mxu0 0.0
    %1651 = vmatprep.subr.mxu0 0.0
    %1652 = vmatpush1.msra.mxu0 0.0
    %1653 = vmatprep.subr.mxu0 0.0
    %1654 = vmatpush1.msra.mxu0 0.0
    %1655 = vmatprep.subr.mxu0 0.0
    %1656 = vmatpush1.msra.mxu0 0.0
    %1657 = vmatprep.subr.mxu0 0.0
    %1658 = vmatpush1.msra.mxu0 0.0
    %1659 = vmatprep.subr.mxu0 0.0
    %1660 = vmatpush1.msra.mxu0 0.0
    %1661 = vmatprep.subr.mxu0 0.0
    %1662 = vmatpush1.msra.mxu0 0.0
    %1663 = vmatprep.subr.mxu0 0.0
    %1664 = vmatpush1.msra.mxu0 0.0
    %1665 = vmatprep.subr.mxu0 0.0
    %1666 = vmatpush1.msra.mxu0 0.0
    %1667 = vmatprep.subr.mxu0 0.0
    %1668 = vmatpush1.msra.mxu0 0.0
    %1669 = vmatprep.subr.mxu0 0.0
    %1670 = vmatpush1.msra.mxu0 0.0
    %1671 = vmatprep.subr.mxu0 0.0
    %1672 = vmatpush1.msra.mxu0 0.0
    %1673 = vmatprep.subr.mxu0 0.0
    %1674 = vmatpush1.msra.mxu0 0.0
    %1675 = vmatprep.subr.mxu0 0.0
    %1676 = vmatpush1.msra.mxu0 0.0
    %1677 = vmatprep.subr.mxu0 0.0
    %1678 = vmatpush1.msra.mxu0 0.0
    %1679 = vmatprep.mubr.f32.mxu0 0.0
    %1680 = vmatmul.mubr.f32.gmra.mrb[0].mxu0 %v1070
    %v1681 = vpop.f32.mrb[0].mxu0
    %v1682 = vadd.f32 %v1051, %v1681
    %v1683 = vpop.f32.mrb[0].mxu0
    %v1684 = vadd.f32 %v1051, %v1683
    %1685 = vmatprep.mubr.f32.mxu0 0.0
    %1686 = vmatmul.mubr.f32.gmra.mrb[0].mxu0 %v1073
    %v1687 = vpop.f32.mrb[0].mxu0
    %v1688 = vadd.f32 %v1056, %v1687
    %v1689 = vpop.f32.mrb[0].mxu0
    %v1690 = vadd.f32 %v1056, %v1689
    %1691 = vmatprep.mubr.f32.mxu0 0.0
    %1692 = vmatmul.mubr.f32.gmra.mrb[0].mxu0 %v1076
    %v1693 = vpop.f32.mrb[0].mxu0
    %v1694 = vadd.f32 %v1061, %v1693
    %v1695 = vpop.f32.mrb[0].mxu0
    %v1696 = vadd.f32 %v1061, %v1695
    %1697 = vmatprep.mubr.f32.mxu0 0.0
    %1698 = vmatmul.mubr.f32.gmra.mrb[0].mxu0 %v1079
    %v1699 = vpop.f32.mrb[0].mxu0
    %v1700 = vadd.f32 %v1066, %v1699
    %v1701 = vpop.f32.mrb[0].mxu0
    %v1702 = vadd.f32 %v1066, %v1701
    %1703 = vdwg.mxu0
    %1704 = vmatprep.subr.mxu0 %v1023
    %1705 = vmatpush1.msra.mxu0 %v1022
    %1706 = vmatprep.subr.mxu0 %v1039
    %1707 = vmatpush1.msra.mxu0 %v1038
    %1708 = vmatprep.subr.mxu0 0.0
    %1709 = vmatpush1.msra.mxu0 0.0
    %1710 = vmatprep.subr.mxu0 0.0
    %1711 = vmatpush1.msra.mxu0 0.0
    %1712 = vmatprep.subr.mxu0 0.0
    %1713 = vmatpush1.msra.mxu0 0.0
    %1714 = vmatprep.subr.mxu0 0.0
    %1715 = vmatpush1.msra.mxu0 0.0
    %1716 = vmatprep.subr.mxu0 0.0
    %1717 = vmatpush1.msra.mxu0 0.0
    %1718 = vmatprep.subr.mxu0 0.0
    %1719 = vmatpush1.msra.mxu0 0.0
    %1720 = vmatprep.subr.mxu0 0.0
    %1721 = vmatpush1.msra.mxu0 0.0
    %1722 = vmatprep.subr.mxu0 0.0
    %1723 = vmatpush1.msra.mxu0 0.0
    %1724 = vmatprep.subr.mxu0 0.0
    %1725 = vmatpush1.msra.mxu0 0.0
    %1726 = vmatprep.subr.mxu0 0.0
    %1727 = vmatpush1.msra.mxu0 0.0
    %1728 = vmatprep.subr.mxu0 0.0
    %1729 = vmatpush1.msra.mxu0 0.0
    %1730 = vmatprep.subr.mxu0 0.0
    %1731 = vmatpush1.msra.mxu0 0.0
    %1732 = vmatprep.subr.mxu0 0.0
    %1733 = vmatpush1.msra.mxu0 0.0
    %1734 = vmatprep.subr.mxu0 0.0
    %1735 = vmatpush1.msra.mxu0 0.0
    %1736 = vmatprep.subr.mxu0 0.0
    %1737 = vmatpush1.msra.mxu0 0.0
    %1738 = vmatprep.subr.mxu0 0.0
    %1739 = vmatpush1.msra.mxu0 0.0
    %1740 = vmatprep.subr.mxu0 0.0
    %1741 = vmatpush1.msra.mxu0 0.0
    %1742 = vmatprep.subr.mxu0 0.0
    %1743 = vmatpush1.msra.mxu0 0.0
    %1744 = vmatprep.subr.mxu0 0.0
    %1745 = vmatpush1.msra.mxu0 0.0
    %1746 = vmatprep.subr.mxu0 0.0
    %1747 = vmatpush1.msra.mxu0 0.0
    %1748 = vmatprep.subr.mxu0 0.0
    %1749 = vmatpush1.msra.mxu0 0.0
    %1750 = vmatprep.subr.mxu0 0.0
    %1751 = vmatpush1.msra.mxu0 0.0
    %1752 = vmatprep.subr.mxu0 0.0
    %1753 = vmatpush1.msra.mxu0 0.0
    %1754 = vmatprep.subr.mxu0 0.0
    %1755 = vmatpush1.msra.mxu0 0.0
    %1756 = vmatprep.subr.mxu0 0.0
    %1757 = vmatpush1.msra.mxu0 0.0
    %1758 = vmatprep.subr.mxu0 0.0
    %1759 = vmatpush1.msra.mxu0 0.0
    %1760 = vmatprep.subr.mxu0 0.0
    %1761 = vmatpush1.msra.mxu0 0.0
    %1762 = vmatprep.subr.mxu0 0.0
    %1763 = vmatpush1.msra.mxu0 0.0
    %1764 = vmatprep.subr.mxu0 0.0
    %1765 = vmatpush1.msra.mxu0 0.0
    %1766 = vmatprep.subr.mxu0 0.0
    %1767 = vmatpush1.msra.mxu0 0.0
    %1768 = vmatprep.mubr.f32.mxu0 0.0
    %1769 = vmatmul.mubr.f32.gmra.mrb[0].mxu0 %v1070
    %v1770 = vpop.f32.mrb[0].mxu0
    %v1771 = vadd.f32 %v1051, %v1770
    %v1772 = vpop.f32.mrb[0].mxu0
    %v1773 = vadd.f32 %v1051, %v1772
    %1774 = vmatprep.mubr.f32.mxu0 0.0
    %1775 = vmatmul.mubr.f32.gmra.mrb[0].mxu0 %v1073
    %v1776 = vpop.f32.mrb[0].mxu0
    %v1777 = vadd.f32 %v1056, %v1776
    %v1778 = vpop.f32.mrb[0].mxu0
    %v1779 = vadd.f32 %v1056, %v1778
    %1780 = vmatprep.mubr.f32.mxu0 0.0
    %1781 = vmatmul.mubr.f32.gmra.mrb[0].mxu0 %v1076
    %v1782 = vpop.f32.mrb[0].mxu0
    %v1783 = vadd.f32 %v1061, %v1782
    %v1784 = vpop.f32.mrb[0].mxu0
    %v1785 = vadd.f32 %v1061, %v1784
    %1786 = vmatprep.mubr.f32.mxu0 0.0
    %1787 = vmatmul.mubr.f32.gmra.mrb[0].mxu0 %v1079
    %v1788 = vpop.f32.mrb[0].mxu0
    %v1789 = vadd.f32 %v1066, %v1788
    %v1790 = vpop.f32.mrb[0].mxu0
    %v1791 = vadd.f32 %v1066, %v1790
    %1792 = vdwg.mxu0
    %v1793 = vsel %vm756, %v1148, 0.0
    %v1794 = vsel %vm757, %v1150, 0.0
    %v1795 = vsel %vm758, %v1237, 0.0
    %v1796 = vsel %vm759, %v1239, 0.0
    %v1797 = vsel %vm760, %v1326, 0.0
    %v1798 = vsel %vm761, %v1328, 0.0
    %v1799 = vsel %vm762, %v1415, 0.0
    %v1800 = vsel %vm763, %v1417, 0.0
    %v1801 = vsel %vm764, %v1504, 0.0
    %v1802 = vsel %vm765, %v1506, 0.0
    %v1803 = vsel %vm766, %v1593, 0.0
    %v1804 = vsel %vm767, %v1595, 0.0
    %v1805 = vsel %vm768, %v1682, 0.0
    %v1806 = vsel %vm769, %v1684, 0.0
    %v1807 = vsel %vm770, %v1771, 0.0
    %v1808 = vsel %vm771, %v1773, 0.0
    %v1809 = vsel %vm756, %v1154, 0.0
    %v1810 = vsel %vm757, %v1156, 0.0
    %v1811 = vsel %vm758, %v1243, 0.0
    %v1812 = vsel %vm759, %v1245, 0.0
    %v1813 = vsel %vm760, %v1332, 0.0
    %v1814 = vsel %vm761, %v1334, 0.0
    %v1815 = vsel %vm762, %v1421, 0.0
    %v1816 = vsel %vm763, %v1423, 0.0
    %v1817 = vsel %vm764, %v1510, 0.0
    %v1818 = vsel %vm765, %v1512, 0.0
    %v1819 = vsel %vm766, %v1599, 0.0
    %v1820 = vsel %vm767, %v1601, 0.0
    %v1821 = vsel %vm768, %v1688, 0.0
    %v1822 = vsel %vm769, %v1690, 0.0
    %v1823 = vsel %vm770, %v1777, 0.0
    %v1824 = vsel %vm771, %v1779, 0.0
    %v1825 = vsel %vm756, %v1160, 0.0
    %v1826 = vsel %vm757, %v1162, 0.0
    %v1827 = vsel %vm758, %v1249, 0.0
    %v1828 = vsel %vm759, %v1251, 0.0
    %v1829 = vsel %vm760, %v1338, 0.0
    %v1830 = vsel %vm761, %v1340, 0.0
    %v1831 = vsel %vm762, %v1427, 0.0
    %v1832 = vsel %vm763, %v1429, 0.0
    %v1833 = vsel %vm764, %v1516, 0.0
    %v1834 = vsel %vm765, %v1518, 0.0
    %v1835 = vsel %vm766, %v1605, 0.0
    %v1836 = vsel %vm767, %v1607, 0.0
    %v1837 = vsel %vm768, %v1694, 0.0
    %v1838 = vsel %vm769, %v1696, 0.0
    %v1839 = vsel %vm770, %v1783, 0.0
    %v1840 = vsel %vm771, %v1785, 0.0
    %v1841 = vsel %vm756, %v1166, 0.0
    %v1842 = vsel %vm757, %v1168, 0.0
    %v1843 = vsel %vm758, %v1255, 0.0
    %v1844 = vsel %vm759, %v1257, 0.0
    %v1845 = vsel %vm760, %v1344, 0.0
    %v1846 = vsel %vm761, %v1346, 0.0
    %v1847 = vsel %vm762, %v1433, 0.0
    %v1848 = vsel %vm763, %v1435, 0.0
    %v1849 = vsel %vm764, %v1522, 0.0
    %v1850 = vsel %vm765, %v1524, 0.0
    %v1851 = vsel %vm766, %v1611, 0.0
    %v1852 = vsel %vm767, %v1613, 0.0
    %v1853 = vsel %vm768, %v1700, 0.0
    %v1854 = vsel %vm769, %v1702, 0.0
    %v1855 = vsel %vm770, %v1789, 0.0
    %v1856 = vsel %vm771, %v1791, 0.0
    %v1857 = vadd.f32 %v1793, %v1794
    %v1858 = vadd.f32 %v1857, %v1795
    %v1859 = vadd.f32 %v1858, %v1796
    %v1860 = vadd.f32 %v1859, %v1797
    %v1861 = vadd.f32 %v1860, %v1798
    %v1862 = vadd.f32 %v1861, %v1799
    %v1863 = vadd.f32 %v1862, %v1800
    %v1864 = vadd.f32 %v1863, %v1801
    %v1865 = vadd.f32 %v1864, %v1802
    %v1866 = vadd.f32 %v1865, %v1803
    %v1867 = vadd.f32 %v1866, %v1804
    %v1868 = vadd.f32 %v1867, %v1805
    %v1869 = vadd.f32 %v1868, %v1806
    %v1870 = vadd.f32 %v1869, %v1807
    %v1871 = vadd.f32 %v1870, %v1808
    %1872 = vadd.xlane.f32.xlu0 %v1871
    %v1873 = vpop.xlane.xlu0 %1872
    %v1874 = vadd.f32 %v1809, %v1810
    %v1875 = vadd.f32 %v1874, %v1811
    %v1876 = vadd.f32 %v1875, %v1812
    %v1877 = vadd.f32 %v1876, %v1813
    %v1878 = vadd.f32 %v1877, %v1814
    %v1879 = vadd.f32 %v1878, %v1815
    %v1880 = vadd.f32 %v1879, %v1816
    %v1881 = vadd.f32 %v1880, %v1817
    %v1882 = vadd.f32 %v1881, %v1818
    %v1883 = vadd.f32 %v1882, %v1819
    %v1884 = vadd.f32 %v1883, %v1820
    %v1885 = vadd.f32 %v1884, %v1821
    %v1886 = vadd.f32 %v1885, %v1822
    %v1887 = vadd.f32 %v1886, %v1823
    %v1888 = vadd.f32 %v1887, %v1824
    %1889 = vadd.xlane.f32.xlu0 %v1888
    %v1890 = vpop.xlane.xlu0 %1889
    %v1891 = vadd.f32 %v1825, %v1826
    %v1892 = vadd.f32 %v1891, %v1827
    %v1893 = vadd.f32 %v1892, %v1828
    %v1894 = vadd.f32 %v1893, %v1829
    %v1895 = vadd.f32 %v1894, %v1830
    %v1896 = vadd.f32 %v1895, %v1831
    %v1897 = vadd.f32 %v1896, %v1832
    %v1898 = vadd.f32 %v1897, %v1833
    %v1899 = vadd.f32 %v1898, %v1834
    %v1900 = vadd.f32 %v1899, %v1835
    %v1901 = vadd.f32 %v1900, %v1836
    %v1902 = vadd.f32 %v1901, %v1837
    %v1903 = vadd.f32 %v1902, %v1838
    %v1904 = vadd.f32 %v1903, %v1839
    %v1905 = vadd.f32 %v1904, %v1840
    %1906 = vadd.xlane.f32.xlu0 %v1905
    %v1907 = vpop.xlane.xlu0 %1906
    %v1908 = vadd.f32 %v1841, %v1842
    %v1909 = vadd.f32 %v1908, %v1843
    %v1910 = vadd.f32 %v1909, %v1844
    %v1911 = vadd.f32 %v1910, %v1845
    %v1912 = vadd.f32 %v1911, %v1846
    %v1913 = vadd.f32 %v1912, %v1847
    %v1914 = vadd.f32 %v1913, %v1848
    %v1915 = vadd.f32 %v1914, %v1849
    %v1916 = vadd.f32 %v1915, %v1850
    %v1917 = vadd.f32 %v1916, %v1851
    %v1918 = vadd.f32 %v1917, %v1852
    %v1919 = vadd.f32 %v1918, %v1853
    %v1920 = vadd.f32 %v1919, %v1854
    %v1921 = vadd.f32 %v1920, %v1855
    %v1922 = vadd.f32 %v1921, %v1856
    %1923 = vadd.xlane.f32.xlu0 %v1922
    %v1924 = vpop.xlane.xlu0 %1923
    %v1925 = vmul.f32 %v1873, 0.0005
    %v1926 = vmul.f32 %v1890, 0.0005
    %v1927 = vmul.f32 %v1907, 0.0005
    %v1928 = vmul.f32 %v1924, 0.0005
    %v1929 = vsub.f32 %v1148, %v1925
    %v1930 = vsub.f32 %v1150, %v1925
    %v1931 = vsub.f32 %v1237, %v1925
    %v1932 = vsub.f32 %v1239, %v1925
    %v1933 = vsub.f32 %v1326, %v1925
    %v1934 = vsub.f32 %v1328, %v1925
    %v1935 = vsub.f32 %v1415, %v1925
    %v1936 = vsub.f32 %v1417, %v1925
    %v1937 = vsub.f32 %v1504, %v1925
    %v1938 = vsub.f32 %v1506, %v1925
    %v1939 = vsub.f32 %v1593, %v1925
    %v1940 = vsub.f32 %v1595, %v1925
    %v1941 = vsub.f32 %v1682, %v1925
    %v1942 = vsub.f32 %v1684, %v1925
    %v1943 = vsub.f32 %v1771, %v1925
    %v1944 = vsub.f32 %v1773, %v1925
    %v1945 = vsub.f32 %v1154, %v1926
    %v1946 = vsub.f32 %v1156, %v1926
    %v1947 = vsub.f32 %v1243, %v1926
    %v1948 = vsub.f32 %v1245, %v1926
    %v1949 = vsub.f32 %v1332, %v1926
    %v1950 = vsub.f32 %v1334, %v1926
    %v1951 = vsub.f32 %v1421, %v1926
    %v1952 = vsub.f32 %v1423, %v1926
    %v1953 = vsub.f32 %v1510, %v1926
    %v1954 = vsub.f32 %v1512, %v1926
    %v1955 = vsub.f32 %v1599, %v1926
    %v1956 = vsub.f32 %v1601, %v1926
    %v1957 = vsub.f32 %v1688, %v1926
    %v1958 = vsub.f32 %v1690, %v1926
    %v1959 = vsub.f32 %v1777, %v1926
    %v1960 = vsub.f32 %v1779, %v1926
    %v1961 = vsub.f32 %v1160, %v1927
    %v1962 = vsub.f32 %v1162, %v1927
    %v1963 = vsub.f32 %v1249, %v1927
    %v1964 = vsub.f32 %v1251, %v1927
    %v1965 = vsub.f32 %v1338, %v1927
    %v1966 = vsub.f32 %v1340, %v1927
    %v1967 = vsub.f32 %v1427, %v1927
    %v1968 = vsub.f32 %v1429, %v1927
    %v1969 = vsub.f32 %v1516, %v1927
    %v1970 = vsub.f32 %v1518, %v1927
    %v1971 = vsub.f32 %v1605, %v1927
    %v1972 = vsub.f32 %v1607, %v1927
    %v1973 = vsub.f32 %v1694, %v1927
    %v1974 = vsub.f32 %v1696, %v1927
    %v1975 = vsub.f32 %v1783, %v1927
    %v1976 = vsub.f32 %v1785, %v1927
    %v1977 = vsub.f32 %v1166, %v1928
    %v1978 = vsub.f32 %v1168, %v1928
    %v1979 = vsub.f32 %v1255, %v1928
    %v1980 = vsub.f32 %v1257, %v1928
    %v1981 = vsub.f32 %v1344, %v1928
    %v1982 = vsub.f32 %v1346, %v1928
    %v1983 = vsub.f32 %v1433, %v1928
    %v1984 = vsub.f32 %v1435, %v1928
    %v1985 = vsub.f32 %v1522, %v1928
    %v1986 = vsub.f32 %v1524, %v1928
    %v1987 = vsub.f32 %v1611, %v1928
    %v1988 = vsub.f32 %v1613, %v1928
    %v1989 = vsub.f32 %v1700, %v1928
    %v1990 = vsub.f32 %v1702, %v1928
    %v1991 = vsub.f32 %v1789, %v1928
    %v1992 = vsub.f32 %v1791, %v1928
    %v1993 = vsel %vm756, %v1929, 0.0
    %v1994 = vsel %vm757, %v1930, 0.0
    %v1995 = vsel %vm758, %v1931, 0.0
    %v1996 = vsel %vm759, %v1932, 0.0
    %v1997 = vsel %vm760, %v1933, 0.0
    %v1998 = vsel %vm761, %v1934, 0.0
    %v1999 = vsel %vm762, %v1935, 0.0
    %v2000 = vsel %vm763, %v1936, 0.0
    %v2001 = vsel %vm764, %v1937, 0.0
    %v2002 = vsel %vm765, %v1938, 0.0
    %v2003 = vsel %vm766, %v1939, 0.0
    %v2004 = vsel %vm767, %v1940, 0.0
    %v2005 = vsel %vm768, %v1941, 0.0
    %v2006 = vsel %vm769, %v1942, 0.0
    %v2007 = vsel %vm770, %v1943, 0.0
    %v2008 = vsel %vm771, %v1944, 0.0
    %v2009 = vsel %vm756, %v1945, 0.0
    %v2010 = vsel %vm757, %v1946, 0.0
    %v2011 = vsel %vm758, %v1947, 0.0
    %v2012 = vsel %vm759, %v1948, 0.0
    %v2013 = vsel %vm760, %v1949, 0.0
    %v2014 = vsel %vm761, %v1950, 0.0
    %v2015 = vsel %vm762, %v1951, 0.0
    %v2016 = vsel %vm763, %v1952, 0.0
    %v2017 = vsel %vm764, %v1953, 0.0
    %v2018 = vsel %vm765, %v1954, 0.0
    %v2019 = vsel %vm766, %v1955, 0.0
    %v2020 = vsel %vm767, %v1956, 0.0
    %v2021 = vsel %vm768, %v1957, 0.0
    %v2022 = vsel %vm769, %v1958, 0.0
    %v2023 = vsel %vm770, %v1959, 0.0
    %v2024 = vsel %vm771, %v1960, 0.0
    %v2025 = vsel %vm756, %v1961, 0.0
    %v2026 = vsel %vm757, %v1962, 0.0
    %v2027 = vsel %vm758, %v1963, 0.0
    %v2028 = vsel %vm759, %v1964, 0.0
    %v2029 = vsel %vm760, %v1965, 0.0
    %v2030 = vsel %vm761, %v1966, 0.0
    %v2031 = vsel %vm762, %v1967, 0.0
    %v2032 = vsel %vm763, %v1968, 0.0
    %v2033 = vsel %vm764, %v1969, 0.0
    %v2034 = vsel %vm765, %v1970, 0.0
    %v2035 = vsel %vm766, %v1971, 0.0
    %v2036 = vsel %vm767, %v1972, 0.0
    %v2037 = vsel %vm768, %v1973, 0.0
    %v2038 = vsel %vm769, %v1974, 0.0
    %v2039 = vsel %vm770, %v1975, 0.0
    %v2040 = vsel %vm771, %v1976, 0.0
    %v2041 = vsel %vm756, %v1977, 0.0
    %v2042 = vsel %vm757, %v1978, 0.0
    %v2043 = vsel %vm758, %v1979, 0.0
    %v2044 = vsel %vm759, %v1980, 0.0
    %v2045 = vsel %vm760, %v1981, 0.0
    %v2046 = vsel %vm761, %v1982, 0.0
    %v2047 = vsel %vm762, %v1983, 0.0
    %v2048 = vsel %vm763, %v1984, 0.0
    %v2049 = vsel %vm764, %v1985, 0.0
    %v2050 = vsel %vm765, %v1986, 0.0
    %v2051 = vsel %vm766, %v1987, 0.0
    %v2052 = vsel %vm767, %v1988, 0.0
    %v2053 = vsel %vm768, %v1989, 0.0
    %v2054 = vsel %vm769, %v1990, 0.0
    %v2055 = vsel %vm770, %v1991, 0.0
    %v2056 = vsel %vm771, %v1992, 0.0
    %v2057 = vmul.f32 %v1993, %v1993
    %v2058 = vmul.f32 %v1994, %v1994
    %v2059 = vmul.f32 %v1995, %v1995
    %v2060 = vmul.f32 %v1996, %v1996
    %v2061 = vmul.f32 %v1997, %v1997
    %v2062 = vmul.f32 %v1998, %v1998
    %v2063 = vmul.f32 %v1999, %v1999
    %v2064 = vmul.f32 %v2000, %v2000
    %v2065 = vmul.f32 %v2001, %v2001
    %v2066 = vmul.f32 %v2002, %v2002
    %v2067 = vmul.f32 %v2003, %v2003
    %v2068 = vmul.f32 %v2004, %v2004
    %v2069 = vmul.f32 %v2005, %v2005
    %v2070 = vmul.f32 %v2006, %v2006
    %v2071 = vmul.f32 %v2007, %v2007
    %v2072 = vmul.f32 %v2008, %v2008
    %v2073 = vmul.f32 %v2009, %v2009
    %v2074 = vmul.f32 %v2010, %v2010
    %v2075 = vmul.f32 %v2011, %v2011
    %v2076 = vmul.f32 %v2012, %v2012
    %v2077 = vmul.f32 %v2013, %v2013
    %v2078 = vmul.f32 %v2014, %v2014
    %v2079 = vmul.f32 %v2015, %v2015
    %v2080 = vmul.f32 %v2016, %v2016
    %v2081 = vmul.f32 %v2017, %v2017
    %v2082 = vmul.f32 %v2018, %v2018
    %v2083 = vmul.f32 %v2019, %v2019
    %v2084 = vmul.f32 %v2020, %v2020
    %v2085 = vmul.f32 %v2021, %v2021
    %v2086 = vmul.f32 %v2022, %v2022
    %v2087 = vmul.f32 %v2023, %v2023
    %v2088 = vmul.f32 %v2024, %v2024
    %v2089 = vmul.f32 %v2025, %v2025
    %v2090 = vmul.f32 %v2026, %v2026
    %v2091 = vmul.f32 %v2027, %v2027
    %v2092 = vmul.f32 %v2028, %v2028
    %v2093 = vmul.f32 %v2029, %v2029
    %v2094 = vmul.f32 %v2030, %v2030
    %v2095 = vmul.f32 %v2031, %v2031
    %v2096 = vmul.f32 %v2032, %v2032
    %v2097 = vmul.f32 %v2033, %v2033
    %v2098 = vmul.f32 %v2034, %v2034
    %v2099 = vmul.f32 %v2035, %v2035
    %v2100 = vmul.f32 %v2036, %v2036
    %v2101 = vmul.f32 %v2037, %v2037
    %v2102 = vmul.f32 %v2038, %v2038
    %v2103 = vmul.f32 %v2039, %v2039
    %v2104 = vmul.f32 %v2040, %v2040
    %v2105 = vmul.f32 %v2041, %v2041
    %v2106 = vmul.f32 %v2042, %v2042
    %v2107 = vmul.f32 %v2043, %v2043
    %v2108 = vmul.f32 %v2044, %v2044
    %v2109 = vmul.f32 %v2045, %v2045
    %v2110 = vmul.f32 %v2046, %v2046
    %v2111 = vmul.f32 %v2047, %v2047
    %v2112 = vmul.f32 %v2048, %v2048
    %v2113 = vmul.f32 %v2049, %v2049
    %v2114 = vmul.f32 %v2050, %v2050
    %v2115 = vmul.f32 %v2051, %v2051
    %v2116 = vmul.f32 %v2052, %v2052
    %v2117 = vmul.f32 %v2053, %v2053
    %v2118 = vmul.f32 %v2054, %v2054
    %v2119 = vmul.f32 %v2055, %v2055
    %v2120 = vmul.f32 %v2056, %v2056
    %v2121 = vadd.f32 %v2057, %v2058
    %v2122 = vadd.f32 %v2121, %v2059
    %v2123 = vadd.f32 %v2122, %v2060
    %v2124 = vadd.f32 %v2123, %v2061
    %v2125 = vadd.f32 %v2124, %v2062
    %v2126 = vadd.f32 %v2125, %v2063
    %v2127 = vadd.f32 %v2126, %v2064
    %v2128 = vadd.f32 %v2127, %v2065
    %v2129 = vadd.f32 %v2128, %v2066
    %v2130 = vadd.f32 %v2129, %v2067
    %v2131 = vadd.f32 %v2130, %v2068
    %v2132 = vadd.f32 %v2131, %v2069
    %v2133 = vadd.f32 %v2132, %v2070
    %v2134 = vadd.f32 %v2133, %v2071
    %v2135 = vadd.f32 %v2134, %v2072
    %2136 = vadd.xlane.f32.xlu0 %v2135
    %v2137 = vpop.xlane.xlu0 %2136
    %v2138 = vadd.f32 %v2073, %v2074
    %v2139 = vadd.f32 %v2138, %v2075
    %v2140 = vadd.f32 %v2139, %v2076
    %v2141 = vadd.f32 %v2140, %v2077
    %v2142 = vadd.f32 %v2141, %v2078
    %v2143 = vadd.f32 %v2142, %v2079
    %v2144 = vadd.f32 %v2143, %v2080
    %v2145 = vadd.f32 %v2144, %v2081
    %v2146 = vadd.f32 %v2145, %v2082
    %v2147 = vadd.f32 %v2146, %v2083
    %v2148 = vadd.f32 %v2147, %v2084
    %v2149 = vadd.f32 %v2148, %v2085
    %v2150 = vadd.f32 %v2149, %v2086
    %v2151 = vadd.f32 %v2150, %v2087
    %v2152 = vadd.f32 %v2151, %v2088
    %2153 = vadd.xlane.f32.xlu0 %v2152
    %v2154 = vpop.xlane.xlu0 %2153
    %v2155 = vadd.f32 %v2089, %v2090
    %v2156 = vadd.f32 %v2155, %v2091
    %v2157 = vadd.f32 %v2156, %v2092
    %v2158 = vadd.f32 %v2157, %v2093
    %v2159 = vadd.f32 %v2158, %v2094
    %v2160 = vadd.f32 %v2159, %v2095
    %v2161 = vadd.f32 %v2160, %v2096
    %v2162 = vadd.f32 %v2161, %v2097
    %v2163 = vadd.f32 %v2162, %v2098
    %v2164 = vadd.f32 %v2163, %v2099
    %v2165 = vadd.f32 %v2164, %v2100
    %v2166 = vadd.f32 %v2165, %v2101
    %v2167 = vadd.f32 %v2166, %v2102
    %v2168 = vadd.f32 %v2167, %v2103
    %v2169 = vadd.f32 %v2168, %v2104
    %2170 = vadd.xlane.f32.xlu0 %v2169
    %v2171 = vpop.xlane.xlu0 %2170
    %v2172 = vadd.f32 %v2105, %v2106
    %v2173 = vadd.f32 %v2172, %v2107
    %v2174 = vadd.f32 %v2173, %v2108
    %v2175 = vadd.f32 %v2174, %v2109
    %v2176 = vadd.f32 %v2175, %v2110
    %v2177 = vadd.f32 %v2176, %v2111
    %v2178 = vadd.f32 %v2177, %v2112
    %v2179 = vadd.f32 %v2178, %v2113
    %v2180 = vadd.f32 %v2179, %v2114
    %v2181 = vadd.f32 %v2180, %v2115
    %v2182 = vadd.f32 %v2181, %v2116
    %v2183 = vadd.f32 %v2182, %v2117
    %v2184 = vadd.f32 %v2183, %v2118
    %v2185 = vadd.f32 %v2184, %v2119
    %v2186 = vadd.f32 %v2185, %v2120
    %2187 = vadd.xlane.f32.xlu0 %v2186
    %v2188 = vpop.xlane.xlu0 %2187
    %v2189 = vmul.f32 %v2137, 0.0005
    %v2190 = vmul.f32 %v2154, 0.0005
    %v2191 = vmul.f32 %v2171, 0.0005
    %v2192 = vmul.f32 %v2188, 0.0005
    %v2193 = vadd.f32 %v2189, 1e-05
    %v2194 = vadd.f32 %v2190, 1e-05
    %v2195 = vadd.f32 %v2191, 1e-05
    %v2196 = vadd.f32 %v2192, 1e-05
    %v2197 = vrsqrt.pop %v2193
    %v2198 = vrsqrt.pop %v2194
    %v2199 = vrsqrt.pop %v2195
    %v2200 = vrsqrt.pop %v2196
    %v2201 = vmul.f32 %v1929, %v2197
    %v2202 = vmul.f32 %v1930, %v2197
    %v2203 = vmul.f32 %v1931, %v2197
    %v2204 = vmul.f32 %v1932, %v2197
    %v2205 = vmul.f32 %v1933, %v2197
    %v2206 = vmul.f32 %v1934, %v2197
    %v2207 = vmul.f32 %v1935, %v2197
    %v2208 = vmul.f32 %v1936, %v2197
    %v2209 = vmul.f32 %v1937, %v2197
    %v2210 = vmul.f32 %v1938, %v2197
    %v2211 = vmul.f32 %v1939, %v2197
    %v2212 = vmul.f32 %v1940, %v2197
    %v2213 = vmul.f32 %v1941, %v2197
    %v2214 = vmul.f32 %v1942, %v2197
    %v2215 = vmul.f32 %v1943, %v2197
    %v2216 = vmul.f32 %v1944, %v2197
    %v2217 = vmul.f32 %v1945, %v2198
    %v2218 = vmul.f32 %v1946, %v2198
    %v2219 = vmul.f32 %v1947, %v2198
    %v2220 = vmul.f32 %v1948, %v2198
    %v2221 = vmul.f32 %v1949, %v2198
    %v2222 = vmul.f32 %v1950, %v2198
    %v2223 = vmul.f32 %v1951, %v2198
    %v2224 = vmul.f32 %v1952, %v2198
    %v2225 = vmul.f32 %v1953, %v2198
    %v2226 = vmul.f32 %v1954, %v2198
    %v2227 = vmul.f32 %v1955, %v2198
    %v2228 = vmul.f32 %v1956, %v2198
    %v2229 = vmul.f32 %v1957, %v2198
    %v2230 = vmul.f32 %v1958, %v2198
    %v2231 = vmul.f32 %v1959, %v2198
    %v2232 = vmul.f32 %v1960, %v2198
    %v2233 = vmul.f32 %v1961, %v2199
    %v2234 = vmul.f32 %v1962, %v2199
    %v2235 = vmul.f32 %v1963, %v2199
    %v2236 = vmul.f32 %v1964, %v2199
    %v2237 = vmul.f32 %v1965, %v2199
    %v2238 = vmul.f32 %v1966, %v2199
    %v2239 = vmul.f32 %v1967, %v2199
    %v2240 = vmul.f32 %v1968, %v2199
    %v2241 = vmul.f32 %v1969, %v2199
    %v2242 = vmul.f32 %v1970, %v2199
    %v2243 = vmul.f32 %v1971, %v2199
    %v2244 = vmul.f32 %v1972, %v2199
    %v2245 = vmul.f32 %v1973, %v2199
    %v2246 = vmul.f32 %v1974, %v2199
    %v2247 = vmul.f32 %v1975, %v2199
    %v2248 = vmul.f32 %v1976, %v2199
    %v2249 = vmul.f32 %v1977, %v2200
    %v2250 = vmul.f32 %v1978, %v2200
    %v2251 = vmul.f32 %v1979, %v2200
    %v2252 = vmul.f32 %v1980, %v2200
    %v2253 = vmul.f32 %v1981, %v2200
    %v2254 = vmul.f32 %v1982, %v2200
    %v2255 = vmul.f32 %v1983, %v2200
    %v2256 = vmul.f32 %v1984, %v2200
    %v2257 = vmul.f32 %v1985, %v2200
    %v2258 = vmul.f32 %v1986, %v2200
    %v2259 = vmul.f32 %v1987, %v2200
    %v2260 = vmul.f32 %v1988, %v2200
    %v2261 = vmul.f32 %v1989, %v2200
    %v2262 = vmul.f32 %v1990, %v2200
    %v2263 = vmul.f32 %v1991, %v2200
    %v2264 = vmul.f32 %v1992, %v2200
    %v2265 = vmax.f32 %v2201, 0.0
    %v2266 = vmax.f32 %v2202, 0.0
    %v2267 = vmax.f32 %v2203, 0.0
    %v2268 = vmax.f32 %v2204, 0.0
    %v2269 = vmax.f32 %v2205, 0.0
    %v2270 = vmax.f32 %v2206, 0.0
    %v2271 = vmax.f32 %v2207, 0.0
    %v2272 = vmax.f32 %v2208, 0.0
    %v2273 = vmax.f32 %v2209, 0.0
    %v2274 = vmax.f32 %v2210, 0.0
    %v2275 = vmax.f32 %v2211, 0.0
    %v2276 = vmax.f32 %v2212, 0.0
    %v2277 = vmax.f32 %v2213, 0.0
    %v2278 = vmax.f32 %v2214, 0.0
    %v2279 = vmax.f32 %v2215, 0.0
    %v2280 = vmax.f32 %v2216, 0.0
    %v2281 = vmax.f32 %v2217, 0.0
    %v2282 = vmax.f32 %v2218, 0.0
    %v2283 = vmax.f32 %v2219, 0.0
    %v2284 = vmax.f32 %v2220, 0.0
    %v2285 = vmax.f32 %v2221, 0.0
    %v2286 = vmax.f32 %v2222, 0.0
    %v2287 = vmax.f32 %v2223, 0.0
    %v2288 = vmax.f32 %v2224, 0.0
    %v2289 = vmax.f32 %v2225, 0.0
    %v2290 = vmax.f32 %v2226, 0.0
    %v2291 = vmax.f32 %v2227, 0.0
    %v2292 = vmax.f32 %v2228, 0.0
    %v2293 = vmax.f32 %v2229, 0.0
    %v2294 = vmax.f32 %v2230, 0.0
    %v2295 = vmax.f32 %v2231, 0.0
    %v2296 = vmax.f32 %v2232, 0.0
    %v2297 = vmax.f32 %v2233, 0.0
    %v2298 = vmax.f32 %v2234, 0.0
    %v2299 = vmax.f32 %v2235, 0.0
    %v2300 = vmax.f32 %v2236, 0.0
    %v2301 = vmax.f32 %v2237, 0.0
    %v2302 = vmax.f32 %v2238, 0.0
    %v2303 = vmax.f32 %v2239, 0.0
    %v2304 = vmax.f32 %v2240, 0.0
    %v2305 = vmax.f32 %v2241, 0.0
    %v2306 = vmax.f32 %v2242, 0.0
    %v2307 = vmax.f32 %v2243, 0.0
    %v2308 = vmax.f32 %v2244, 0.0
    %v2309 = vmax.f32 %v2245, 0.0
    %v2310 = vmax.f32 %v2246, 0.0
    %v2311 = vmax.f32 %v2247, 0.0
    %v2312 = vmax.f32 %v2248, 0.0
    %v2313 = vmax.f32 %v2249, 0.0
    %v2314 = vmax.f32 %v2250, 0.0
    %v2315 = vmax.f32 %v2251, 0.0
    %v2316 = vmax.f32 %v2252, 0.0
    %v2317 = vmax.f32 %v2253, 0.0
    %v2318 = vmax.f32 %v2254, 0.0
    %v2319 = vmax.f32 %v2255, 0.0
    %v2320 = vmax.f32 %v2256, 0.0
    %v2321 = vmax.f32 %v2257, 0.0
    %v2322 = vmax.f32 %v2258, 0.0
    %v2323 = vmax.f32 %v2259, 0.0
    %v2324 = vmax.f32 %v2260, 0.0
    %v2325 = vmax.f32 %v2261, 0.0
    %v2326 = vmax.f32 %v2262, 0.0
    %v2327 = vmax.f32 %v2263, 0.0
    %v2328 = vmax.f32 %v2264, 0.0
    %v2329 = vld [vmem:[%s5] sm:$0xff]
    %v2330 = vld [vmem:[%s5 + $0x8] sm:$0xff]
    %v2331 = vld [vmem:[%s5 + $0x10] sm:$0xff]
    %v2332 = vld [vmem:[%s5 + $0x18] sm:$0xff]
    %v2333 = vld [vmem:[%s6] sm:$0xff]
    %v2334 = vld [vmem:[%s6 + $0x8] sm:$0xff]
    %v2335 = vld [vmem:[%s6 + $0x10] sm:$0xff]
    %v2336 = vld [vmem:[%s6 + $0x18] sm:$0xff]
    %2338 = vset.pattern.permute.xlu0 0
    %2339 = vperm.xlu0 %2338, %v2333
    %v2340 = vpop.permute.xlu0 %2339
    %2343 = vset.pattern.permute.xlu0 0
    %2344 = vperm.xlu0 %2343, %v2334
    %v2345 = vpop.permute.xlu0 %2344
    %2348 = vset.pattern.permute.xlu0 0
    %2349 = vperm.xlu0 %2348, %v2335
    %v2350 = vpop.permute.xlu0 %2349
    %2353 = vset.pattern.permute.xlu0 0
    %2354 = vperm.xlu0 %2353, %v2336
    %v2355 = vpop.permute.xlu0 %2354
    %vm2357 = vcmask 261120
    %v2359 = vsel %vm2357, %v2329, 0
    %v2362 = vsel %vm2357, %v2330, 0
    %v2365 = vsel %vm2357, %v2331, 0
    %v2368 = vsel %vm2357, %v2332, 0
    %2370 = vmatprep.subr.mxu0 %v2266
    %2371 = vmatpush1.msra.mxu0 %v2265
    %2372 = vmatprep.subr.mxu0 %v2282
    %2373 = vmatpush1.msra.mxu0 %v2281
    %2374 = vmatprep.subr.mxu0 %v2298
    %2375 = vmatpush1.msra.mxu0 %v2297
    %2376 = vmatprep.subr.mxu0 %v2314
    %2377 = vmatpush1.msra.mxu0 %v2313
    %2378 = vmatprep.subr.mxu0 0.0
    %2379 = vmatpush1.msra.mxu0 0.0
    %2380 = vmatprep.subr.mxu0 0.0
    %2381 = vmatpush1.msra.mxu0 0.0
    %2382 = vmatprep.subr.mxu0 0.0
    %2383 = vmatpush1.msra.mxu0 0.0
    %2384 = vmatprep.subr.mxu0 0.0
    %2385 = vmatpush1.msra.mxu0 0.0
    %2386 = vmatprep.subr.mxu0 0.0
    %2387 = vmatpush1.msra.mxu0 0.0
    %2388 = vmatprep.subr.mxu0 0.0
    %2389 = vmatpush1.msra.mxu0 0.0
    %2390 = vmatprep.subr.mxu0 0.0
    %2391 = vmatpush1.msra.mxu0 0.0
    %2392 = vmatprep.subr.mxu0 0.0
    %2393 = vmatpush1.msra.mxu0 0.0
    %2394 = vmatprep.subr.mxu0 0.0
    %2395 = vmatpush1.msra.mxu0 0.0
    %2396 = vmatprep.subr.mxu0 0.0
    %2397 = vmatpush1.msra.mxu0 0.0
    %2398 = vmatprep.subr.mxu0 0.0
    %2399 = vmatpush1.msra.mxu0 0.0
    %2400 = vmatprep.subr.mxu0 0.0
    %2401 = vmatpush1.msra.mxu0 0.0
    %2402 = vmatprep.subr.mxu0 0.0
    %2403 = vmatpush1.msra.mxu0 0.0
    %2404 = vmatprep.subr.mxu0 0.0
    %2405 = vmatpush1.msra.mxu0 0.0
    %2406 = vmatprep.subr.mxu0 0.0
    %2407 = vmatpush1.msra.mxu0 0.0
    %2408 = vmatprep.subr.mxu0 0.0
    %2409 = vmatpush1.msra.mxu0 0.0
    %2410 = vmatprep.subr.mxu0 0.0
    %2411 = vmatpush1.msra.mxu0 0.0
    %2412 = vmatprep.subr.mxu0 0.0
    %2413 = vmatpush1.msra.mxu0 0.0
    %2414 = vmatprep.subr.mxu0 0.0
    %2415 = vmatpush1.msra.mxu0 0.0
    %2416 = vmatprep.subr.mxu0 0.0
    %2417 = vmatpush1.msra.mxu0 0.0
    %2418 = vmatprep.subr.mxu0 0.0
    %2419 = vmatpush1.msra.mxu0 0.0
    %2420 = vmatprep.subr.mxu0 0.0
    %2421 = vmatpush1.msra.mxu0 0.0
    %2422 = vmatprep.subr.mxu0 0.0
    %2423 = vmatpush1.msra.mxu0 0.0
    %2424 = vmatprep.subr.mxu0 0.0
    %2425 = vmatpush1.msra.mxu0 0.0
    %2426 = vmatprep.subr.mxu0 0.0
    %2427 = vmatpush1.msra.mxu0 0.0
    %2428 = vmatprep.subr.mxu0 0.0
    %2429 = vmatpush1.msra.mxu0 0.0
    %2430 = vmatprep.subr.mxu0 0.0
    %2431 = vmatpush1.msra.mxu0 0.0
    %2432 = vmatprep.subr.mxu0 0.0
    %2433 = vmatpush1.msra.mxu0 0.0
    %2434 = vmatprep.mubr.f32.mxu0 0.0
    %2435 = vmatmul.mubr.f32.gmra.mrb[0].mxu0 %v2359
    %v2436 = vpop.f32.mrb[0].mxu0
    %v2437 = vadd.f32 %v2340, %v2436
    %v2438 = vpop.f32.mrb[0].mxu0
    %v2439 = vadd.f32 %v2340, %v2438
    %2440 = vmatprep.mubr.f32.mxu0 0.0
    %2441 = vmatmul.mubr.f32.gmra.mrb[0].mxu0 %v2362
    %v2442 = vpop.f32.mrb[0].mxu0
    %v2443 = vadd.f32 %v2345, %v2442
    %v2444 = vpop.f32.mrb[0].mxu0
    %v2445 = vadd.f32 %v2345, %v2444
    %2446 = vmatprep.mubr.f32.mxu0 0.0
    %2447 = vmatmul.mubr.f32.gmra.mrb[0].mxu0 %v2365
    %v2448 = vpop.f32.mrb[0].mxu0
    %v2449 = vadd.f32 %v2350, %v2448
    %v2450 = vpop.f32.mrb[0].mxu0
    %v2451 = vadd.f32 %v2350, %v2450
    %2452 = vmatprep.mubr.f32.mxu0 0.0
    %2453 = vmatmul.mubr.f32.gmra.mrb[0].mxu0 %v2368
    %v2454 = vpop.f32.mrb[0].mxu0
    %v2455 = vadd.f32 %v2355, %v2454
    %v2456 = vpop.f32.mrb[0].mxu0
    %v2457 = vadd.f32 %v2355, %v2456
    %2458 = vdwg.mxu0
    %2459 = vmatprep.subr.mxu0 %v2268
    %2460 = vmatpush1.msra.mxu0 %v2267
    %2461 = vmatprep.subr.mxu0 %v2284
    %2462 = vmatpush1.msra.mxu0 %v2283
    %2463 = vmatprep.subr.mxu0 %v2300
    %2464 = vmatpush1.msra.mxu0 %v2299
    %2465 = vmatprep.subr.mxu0 %v2316
    %2466 = vmatpush1.msra.mxu0 %v2315
    %2467 = vmatprep.subr.mxu0 0.0
    %2468 = vmatpush1.msra.mxu0 0.0
    %2469 = vmatprep.subr.mxu0 0.0
    %2470 = vmatpush1.msra.mxu0 0.0
    %2471 = vmatprep.subr.mxu0 0.0
    %2472 = vmatpush1.msra.mxu0 0.0
    %2473 = vmatprep.subr.mxu0 0.0
    %2474 = vmatpush1.msra.mxu0 0.0
    %2475 = vmatprep.subr.mxu0 0.0
    %2476 = vmatpush1.msra.mxu0 0.0
    %2477 = vmatprep.subr.mxu0 0.0
    %2478 = vmatpush1.msra.mxu0 0.0
    %2479 = vmatprep.subr.mxu0 0.0
    %2480 = vmatpush1.msra.mxu0 0.0
    %2481 = vmatprep.subr.mxu0 0.0
    %2482 = vmatpush1.msra.mxu0 0.0
    %2483 = vmatprep.subr.mxu0 0.0
    %2484 = vmatpush1.msra.mxu0 0.0
    %2485 = vmatprep.subr.mxu0 0.0
    %2486 = vmatpush1.msra.mxu0 0.0
    %2487 = vmatprep.subr.mxu0 0.0
    %2488 = vmatpush1.msra.mxu0 0.0
    %2489 = vmatprep.subr.mxu0 0.0
    %2490 = vmatpush1.msra.mxu0 0.0
    %2491 = vmatprep.subr.mxu0 0.0
    %2492 = vmatpush1.msra.mxu0 0.0
    %2493 = vmatprep.subr.mxu0 0.0
    %2494 = vmatpush1.msra.mxu0 0.0
    %2495 = vmatprep.subr.mxu0 0.0
    %2496 = vmatpush1.msra.mxu0 0.0
    %2497 = vmatprep.subr.mxu0 0.0
    %2498 = vmatpush1.msra.mxu0 0.0
    %2499 = vmatprep.subr.mxu0 0.0
    %2500 = vmatpush1.msra.mxu0 0.0
    %2501 = vmatprep.subr.mxu0 0.0
    %2502 = vmatpush1.msra.mxu0 0.0
    %2503 = vmatprep.subr.mxu0 0.0
    %2504 = vmatpush1.msra.mxu0 0.0
    %2505 = vmatprep.subr.mxu0 0.0
    %2506 = vmatpush1.msra.mxu0 0.0
    %2507 = vmatprep.subr.mxu0 0.0
    %2508 = vmatpush1.msra.mxu0 0.0
    %2509 = vmatprep.subr.mxu0 0.0
    %2510 = vmatpush1.msra.mxu0 0.0
    %2511 = vmatprep.subr.mxu0 0.0
    %2512 = vmatpush1.msra.mxu0 0.0
    %2513 = vmatprep.subr.mxu0 0.0
    %2514 = vmatpush1.msra.mxu0 0.0
    %2515 = vmatprep.subr.mxu0 0.0
    %2516 = vmatpush1.msra.mxu0 0.0
    %2517 = vmatprep.subr.mxu0 0.0
    %2518 = vmatpush1.msra.mxu0 0.0
    %2519 = vmatprep.subr.mxu0 0.0
    %2520 = vmatpush1.msra.mxu0 0.0
    %2521 = vmatprep.subr.mxu0 0.0
    %2522 = vmatpush1.msra.mxu0 0.0
    %2523 = vmatprep.mubr.f32.mxu0 0.0
    %2524 = vmatmul.mubr.f32.gmra.mrb[0].mxu0 %v2359
    %v2525 = vpop.f32.mrb[0].mxu0
    %v2526 = vadd.f32 %v2340, %v2525
    %v2527 = vpop.f32.mrb[0].mxu0
    %v2528 = vadd.f32 %v2340, %v2527
    %2529 = vmatprep.mubr.f32.mxu0 0.0
    %2530 = vmatmul.mubr.f32.gmra.mrb[0].mxu0 %v2362
    %v2531 = vpop.f32.mrb[0].mxu0
    %v2532 = vadd.f32 %v2345, %v2531
    %v2533 = vpop.f32.mrb[0].mxu0
    %v2534 = vadd.f32 %v2345, %v2533
    %2535 = vmatprep.mubr.f32.mxu0 0.0
    %2536 = vmatmul.mubr.f32.gmra.mrb[0].mxu0 %v2365
    %v2537 = vpop.f32.mrb[0].mxu0
    %v2538 = vadd.f32 %v2350, %v2537
    %v2539 = vpop.f32.mrb[0].mxu0
    %v2540 = vadd.f32 %v2350, %v2539
    %2541 = vmatprep.mubr.f32.mxu0 0.0
    %2542 = vmatmul.mubr.f32.gmra.mrb[0].mxu0 %v2368
    %v2543 = vpop.f32.mrb[0].mxu0
    %v2544 = vadd.f32 %v2355, %v2543
    %v2545 = vpop.f32.mrb[0].mxu0
    %v2546 = vadd.f32 %v2355, %v2545
    %2547 = vdwg.mxu0
    %2548 = vmatprep.subr.mxu0 %v2270
    %2549 = vmatpush1.msra.mxu0 %v2269
    %2550 = vmatprep.subr.mxu0 %v2286
    %2551 = vmatpush1.msra.mxu0 %v2285
    %2552 = vmatprep.subr.mxu0 %v2302
    %2553 = vmatpush1.msra.mxu0 %v2301
    %2554 = vmatprep.subr.mxu0 %v2318
    %2555 = vmatpush1.msra.mxu0 %v2317
    %2556 = vmatprep.subr.mxu0 0.0
    %2557 = vmatpush1.msra.mxu0 0.0
    %2558 = vmatprep.subr.mxu0 0.0
    %2559 = vmatpush1.msra.mxu0 0.0
    %2560 = vmatprep.subr.mxu0 0.0
    %2561 = vmatpush1.msra.mxu0 0.0
    %2562 = vmatprep.subr.mxu0 0.0
    %2563 = vmatpush1.msra.mxu0 0.0
    %2564 = vmatprep.subr.mxu0 0.0
    %2565 = vmatpush1.msra.mxu0 0.0
    %2566 = vmatprep.subr.mxu0 0.0
    %2567 = vmatpush1.msra.mxu0 0.0
    %2568 = vmatprep.subr.mxu0 0.0
    %2569 = vmatpush1.msra.mxu0 0.0
    %2570 = vmatprep.subr.mxu0 0.0
    %2571 = vmatpush1.msra.mxu0 0.0
    %2572 = vmatprep.subr.mxu0 0.0
    %2573 = vmatpush1.msra.mxu0 0.0
    %2574 = vmatprep.subr.mxu0 0.0
    %2575 = vmatpush1.msra.mxu0 0.0
    %2576 = vmatprep.subr.mxu0 0.0
    %2577 = vmatpush1.msra.mxu0 0.0
    %2578 = vmatprep.subr.mxu0 0.0
    %2579 = vmatpush1.msra.mxu0 0.0
    %2580 = vmatprep.subr.mxu0 0.0
    %2581 = vmatpush1.msra.mxu0 0.0
    %2582 = vmatprep.subr.mxu0 0.0
    %2583 = vmatpush1.msra.mxu0 0.0
    %2584 = vmatprep.subr.mxu0 0.0
    %2585 = vmatpush1.msra.mxu0 0.0
    %2586 = vmatprep.subr.mxu0 0.0
    %2587 = vmatpush1.msra.mxu0 0.0
    %2588 = vmatprep.subr.mxu0 0.0
    %2589 = vmatpush1.msra.mxu0 0.0
    %2590 = vmatprep.subr.mxu0 0.0
    %2591 = vmatpush1.msra.mxu0 0.0
    %2592 = vmatprep.subr.mxu0 0.0
    %2593 = vmatpush1.msra.mxu0 0.0
    %2594 = vmatprep.subr.mxu0 0.0
    %2595 = vmatpush1.msra.mxu0 0.0
    %2596 = vmatprep.subr.mxu0 0.0
    %2597 = vmatpush1.msra.mxu0 0.0
    %2598 = vmatprep.subr.mxu0 0.0
    %2599 = vmatpush1.msra.mxu0 0.0
    %2600 = vmatprep.subr.mxu0 0.0
    %2601 = vmatpush1.msra.mxu0 0.0
    %2602 = vmatprep.subr.mxu0 0.0
    %2603 = vmatpush1.msra.mxu0 0.0
    %2604 = vmatprep.subr.mxu0 0.0
    %2605 = vmatpush1.msra.mxu0 0.0
    %2606 = vmatprep.subr.mxu0 0.0
    %2607 = vmatpush1.msra.mxu0 0.0
    %2608 = vmatprep.subr.mxu0 0.0
    %2609 = vmatpush1.msra.mxu0 0.0
    %2610 = vmatprep.subr.mxu0 0.0
    %2611 = vmatpush1.msra.mxu0 0.0
    %2612 = vmatprep.mubr.f32.mxu0 0.0
    %2613 = vmatmul.mubr.f32.gmra.mrb[0].mxu0 %v2359
    %v2614 = vpop.f32.mrb[0].mxu0
    %v2615 = vadd.f32 %v2340, %v2614
    %v2616 = vpop.f32.mrb[0].mxu0
    %v2617 = vadd.f32 %v2340, %v2616
    %2618 = vmatprep.mubr.f32.mxu0 0.0
    %2619 = vmatmul.mubr.f32.gmra.mrb[0].mxu0 %v2362
    %v2620 = vpop.f32.mrb[0].mxu0
    %v2621 = vadd.f32 %v2345, %v2620
    %v2622 = vpop.f32.mrb[0].mxu0
    %v2623 = vadd.f32 %v2345, %v2622
    %2624 = vmatprep.mubr.f32.mxu0 0.0
    %2625 = vmatmul.mubr.f32.gmra.mrb[0].mxu0 %v2365
    %v2626 = vpop.f32.mrb[0].mxu0
    %v2627 = vadd.f32 %v2350, %v2626
    %v2628 = vpop.f32.mrb[0].mxu0
    %v2629 = vadd.f32 %v2350, %v2628
    %2630 = vmatprep.mubr.f32.mxu0 0.0
    %2631 = vmatmul.mubr.f32.gmra.mrb[0].mxu0 %v2368
    %v2632 = vpop.f32.mrb[0].mxu0
    %v2633 = vadd.f32 %v2355, %v2632
    %v2634 = vpop.f32.mrb[0].mxu0
    %v2635 = vadd.f32 %v2355, %v2634
    %2636 = vdwg.mxu0
    %2637 = vmatprep.subr.mxu0 %v2272
    %2638 = vmatpush1.msra.mxu0 %v2271
    %2639 = vmatprep.subr.mxu0 %v2288
    %2640 = vmatpush1.msra.mxu0 %v2287
    %2641 = vmatprep.subr.mxu0 %v2304
    %2642 = vmatpush1.msra.mxu0 %v2303
    %2643 = vmatprep.subr.mxu0 %v2320
    %2644 = vmatpush1.msra.mxu0 %v2319
    %2645 = vmatprep.subr.mxu0 0.0
    %2646 = vmatpush1.msra.mxu0 0.0
    %2647 = vmatprep.subr.mxu0 0.0
    %2648 = vmatpush1.msra.mxu0 0.0
    %2649 = vmatprep.subr.mxu0 0.0
    %2650 = vmatpush1.msra.mxu0 0.0
    %2651 = vmatprep.subr.mxu0 0.0
    %2652 = vmatpush1.msra.mxu0 0.0
    %2653 = vmatprep.subr.mxu0 0.0
    %2654 = vmatpush1.msra.mxu0 0.0
    %2655 = vmatprep.subr.mxu0 0.0
    %2656 = vmatpush1.msra.mxu0 0.0
    %2657 = vmatprep.subr.mxu0 0.0
    %2658 = vmatpush1.msra.mxu0 0.0
    %2659 = vmatprep.subr.mxu0 0.0
    %2660 = vmatpush1.msra.mxu0 0.0
    %2661 = vmatprep.subr.mxu0 0.0
    %2662 = vmatpush1.msra.mxu0 0.0
    %2663 = vmatprep.subr.mxu0 0.0
    %2664 = vmatpush1.msra.mxu0 0.0
    %2665 = vmatprep.subr.mxu0 0.0
    %2666 = vmatpush1.msra.mxu0 0.0
    %2667 = vmatprep.subr.mxu0 0.0
    %2668 = vmatpush1.msra.mxu0 0.0
    %2669 = vmatprep.subr.mxu0 0.0
    %2670 = vmatpush1.msra.mxu0 0.0
    %2671 = vmatprep.subr.mxu0 0.0
    %2672 = vmatpush1.msra.mxu0 0.0
    %2673 = vmatprep.subr.mxu0 0.0
    %2674 = vmatpush1.msra.mxu0 0.0
    %2675 = vmatprep.subr.mxu0 0.0
    %2676 = vmatpush1.msra.mxu0 0.0
    %2677 = vmatprep.subr.mxu0 0.0
    %2678 = vmatpush1.msra.mxu0 0.0
    %2679 = vmatprep.subr.mxu0 0.0
    %2680 = vmatpush1.msra.mxu0 0.0
    %2681 = vmatprep.subr.mxu0 0.0
    %2682 = vmatpush1.msra.mxu0 0.0
    %2683 = vmatprep.subr.mxu0 0.0
    %2684 = vmatpush1.msra.mxu0 0.0
    %2685 = vmatprep.subr.mxu0 0.0
    %2686 = vmatpush1.msra.mxu0 0.0
    %2687 = vmatprep.subr.mxu0 0.0
    %2688 = vmatpush1.msra.mxu0 0.0
    %2689 = vmatprep.subr.mxu0 0.0
    %2690 = vmatpush1.msra.mxu0 0.0
    %2691 = vmatprep.subr.mxu0 0.0
    %2692 = vmatpush1.msra.mxu0 0.0
    %2693 = vmatprep.subr.mxu0 0.0
    %2694 = vmatpush1.msra.mxu0 0.0
    %2695 = vmatprep.subr.mxu0 0.0
    %2696 = vmatpush1.msra.mxu0 0.0
    %2697 = vmatprep.subr.mxu0 0.0
    %2698 = vmatpush1.msra.mxu0 0.0
    %2699 = vmatprep.subr.mxu0 0.0
    %2700 = vmatpush1.msra.mxu0 0.0
    %2701 = vmatprep.mubr.f32.mxu0 0.0
    %2702 = vmatmul.mubr.f32.gmra.mrb[0].mxu0 %v2359
    %v2703 = vpop.f32.mrb[0].mxu0
    %v2704 = vadd.f32 %v2340, %v2703
    %v2705 = vpop.f32.mrb[0].mxu0
    %v2706 = vadd.f32 %v2340, %v2705
    %2707 = vmatprep.mubr.f32.mxu0 0.0
    %2708 = vmatmul.mubr.f32.gmra.mrb[0].mxu0 %v2362
    %v2709 = vpop.f32.mrb[0].mxu0
    %v2710 = vadd.f32 %v2345, %v2709
    %v2711 = vpop.f32.mrb[0].mxu0
    %v2712 = vadd.f32 %v2345, %v2711
    %2713 = vmatprep.mubr.f32.mxu0 0.0
    %2714 = vmatmul.mubr.f32.gmra.mrb[0].mxu0 %v2365
    %v2715 = vpop.f32.mrb[0].mxu0
    %v2716 = vadd.f32 %v2350, %v2715
    %v2717 = vpop.f32.mrb[0].mxu0
    %v2718 = vadd.f32 %v2350, %v2717
    %2719 = vmatprep.mubr.f32.mxu0 0.0
    %2720 = vmatmul.mubr.f32.gmra.mrb[0].mxu0 %v2368
    %v2721 = vpop.f32.mrb[0].mxu0
    %v2722 = vadd.f32 %v2355, %v2721
    %v2723 = vpop.f32.mrb[0].mxu0
    %v2724 = vadd.f32 %v2355, %v2723
    %2725 = vdwg.mxu0
    %2726 = vmatprep.subr.mxu0 %v2274
    %2727 = vmatpush1.msra.mxu0 %v2273
    %2728 = vmatprep.subr.mxu0 %v2290
    %2729 = vmatpush1.msra.mxu0 %v2289
    %2730 = vmatprep.subr.mxu0 %v2306
    %2731 = vmatpush1.msra.mxu0 %v2305
    %2732 = vmatprep.subr.mxu0 %v2322
    %2733 = vmatpush1.msra.mxu0 %v2321
    %2734 = vmatprep.subr.mxu0 0.0
    %2735 = vmatpush1.msra.mxu0 0.0
    %2736 = vmatprep.subr.mxu0 0.0
    %2737 = vmatpush1.msra.mxu0 0.0
    %2738 = vmatprep.subr.mxu0 0.0
    %2739 = vmatpush1.msra.mxu0 0.0
    %2740 = vmatprep.subr.mxu0 0.0
    %2741 = vmatpush1.msra.mxu0 0.0
    %2742 = vmatprep.subr.mxu0 0.0
    %2743 = vmatpush1.msra.mxu0 0.0
    %2744 = vmatprep.subr.mxu0 0.0
    %2745 = vmatpush1.msra.mxu0 0.0
    %2746 = vmatprep.subr.mxu0 0.0
    %2747 = vmatpush1.msra.mxu0 0.0
    %2748 = vmatprep.subr.mxu0 0.0
    %2749 = vmatpush1.msra.mxu0 0.0
    %2750 = vmatprep.subr.mxu0 0.0
    %2751 = vmatpush1.msra.mxu0 0.0
    %2752 = vmatprep.subr.mxu0 0.0
    %2753 = vmatpush1.msra.mxu0 0.0
    %2754 = vmatprep.subr.mxu0 0.0
    %2755 = vmatpush1.msra.mxu0 0.0
    %2756 = vmatprep.subr.mxu0 0.0
    %2757 = vmatpush1.msra.mxu0 0.0
    %2758 = vmatprep.subr.mxu0 0.0
    %2759 = vmatpush1.msra.mxu0 0.0
    %2760 = vmatprep.subr.mxu0 0.0
    %2761 = vmatpush1.msra.mxu0 0.0
    %2762 = vmatprep.subr.mxu0 0.0
    %2763 = vmatpush1.msra.mxu0 0.0
    %2764 = vmatprep.subr.mxu0 0.0
    %2765 = vmatpush1.msra.mxu0 0.0
    %2766 = vmatprep.subr.mxu0 0.0
    %2767 = vmatpush1.msra.mxu0 0.0
    %2768 = vmatprep.subr.mxu0 0.0
    %2769 = vmatpush1.msra.mxu0 0.0
    %2770 = vmatprep.subr.mxu0 0.0
    %2771 = vmatpush1.msra.mxu0 0.0
    %2772 = vmatprep.subr.mxu0 0.0
    %2773 = vmatpush1.msra.mxu0 0.0
    %2774 = vmatprep.subr.mxu0 0.0
    %2775 = vmatpush1.msra.mxu0 0.0
    %2776 = vmatprep.subr.mxu0 0.0
    %2777 = vmatpush1.msra.mxu0 0.0
    %2778 = vmatprep.subr.mxu0 0.0
    %2779 = vmatpush1.msra.mxu0 0.0
    %2780 = vmatprep.subr.mxu0 0.0
    %2781 = vmatpush1.msra.mxu0 0.0
    %2782 = vmatprep.subr.mxu0 0.0
    %2783 = vmatpush1.msra.mxu0 0.0
    %2784 = vmatprep.subr.mxu0 0.0
    %2785 = vmatpush1.msra.mxu0 0.0
    %2786 = vmatprep.subr.mxu0 0.0
    %2787 = vmatpush1.msra.mxu0 0.0
    %2788 = vmatprep.subr.mxu0 0.0
    %2789 = vmatpush1.msra.mxu0 0.0
    %2790 = vmatprep.mubr.f32.mxu0 0.0
    %2791 = vmatmul.mubr.f32.gmra.mrb[0].mxu0 %v2359
    %v2792 = vpop.f32.mrb[0].mxu0
    %v2793 = vadd.f32 %v2340, %v2792
    %v2794 = vpop.f32.mrb[0].mxu0
    %v2795 = vadd.f32 %v2340, %v2794
    %2796 = vmatprep.mubr.f32.mxu0 0.0
    %2797 = vmatmul.mubr.f32.gmra.mrb[0].mxu0 %v2362
    %v2798 = vpop.f32.mrb[0].mxu0
    %v2799 = vadd.f32 %v2345, %v2798
    %v2800 = vpop.f32.mrb[0].mxu0
    %v2801 = vadd.f32 %v2345, %v2800
    %2802 = vmatprep.mubr.f32.mxu0 0.0
    %2803 = vmatmul.mubr.f32.gmra.mrb[0].mxu0 %v2365
    %v2804 = vpop.f32.mrb[0].mxu0
    %v2805 = vadd.f32 %v2350, %v2804
    %v2806 = vpop.f32.mrb[0].mxu0
    %v2807 = vadd.f32 %v2350, %v2806
    %2808 = vmatprep.mubr.f32.mxu0 0.0
    %2809 = vmatmul.mubr.f32.gmra.mrb[0].mxu0 %v2368
    %v2810 = vpop.f32.mrb[0].mxu0
    %v2811 = vadd.f32 %v2355, %v2810
    %v2812 = vpop.f32.mrb[0].mxu0
    %v2813 = vadd.f32 %v2355, %v2812
    %2814 = vdwg.mxu0
    %2815 = vmatprep.subr.mxu0 %v2276
    %2816 = vmatpush1.msra.mxu0 %v2275
    %2817 = vmatprep.subr.mxu0 %v2292
    %2818 = vmatpush1.msra.mxu0 %v2291
    %2819 = vmatprep.subr.mxu0 %v2308
    %2820 = vmatpush1.msra.mxu0 %v2307
    %2821 = vmatprep.subr.mxu0 %v2324
    %2822 = vmatpush1.msra.mxu0 %v2323
    %2823 = vmatprep.subr.mxu0 0.0
    %2824 = vmatpush1.msra.mxu0 0.0
    %2825 = vmatprep.subr.mxu0 0.0
    %2826 = vmatpush1.msra.mxu0 0.0
    %2827 = vmatprep.subr.mxu0 0.0
    %2828 = vmatpush1.msra.mxu0 0.0
    %2829 = vmatprep.subr.mxu0 0.0
    %2830 = vmatpush1.msra.mxu0 0.0
    %2831 = vmatprep.subr.mxu0 0.0
    %2832 = vmatpush1.msra.mxu0 0.0
    %2833 = vmatprep.subr.mxu0 0.0
    %2834 = vmatpush1.msra.mxu0 0.0
    %2835 = vmatprep.subr.mxu0 0.0
    %2836 = vmatpush1.msra.mxu0 0.0
    %2837 = vmatprep.subr.mxu0 0.0
    %2838 = vmatpush1.msra.mxu0 0.0
    %2839 = vmatprep.subr.mxu0 0.0
    %2840 = vmatpush1.msra.mxu0 0.0
    %2841 = vmatprep.subr.mxu0 0.0
    %2842 = vmatpush1.msra.mxu0 0.0
    %2843 = vmatprep.subr.mxu0 0.0
    %2844 = vmatpush1.msra.mxu0 0.0
    %2845 = vmatprep.subr.mxu0 0.0
    %2846 = vmatpush1.msra.mxu0 0.0
    %2847 = vmatprep.subr.mxu0 0.0
    %2848 = vmatpush1.msra.mxu0 0.0
    %2849 = vmatprep.subr.mxu0 0.0
    %2850 = vmatpush1.msra.mxu0 0.0
    %2851 = vmatprep.subr.mxu0 0.0
    %2852 = vmatpush1.msra.mxu0 0.0
    %2853 = vmatprep.subr.mxu0 0.0
    %2854 = vmatpush1.msra.mxu0 0.0
    %2855 = vmatprep.subr.mxu0 0.0
    %2856 = vmatpush1.msra.mxu0 0.0
    %2857 = vmatprep.subr.mxu0 0.0
    %2858 = vmatpush1.msra.mxu0 0.0
    %2859 = vmatprep.subr.mxu0 0.0
    %2860 = vmatpush1.msra.mxu0 0.0
    %2861 = vmatprep.subr.mxu0 0.0
    %2862 = vmatpush1.msra.mxu0 0.0
    %2863 = vmatprep.subr.mxu0 0.0
    %2864 = vmatpush1.msra.mxu0 0.0
    %2865 = vmatprep.subr.mxu0 0.0
    %2866 = vmatpush1.msra.mxu0 0.0
    %2867 = vmatprep.subr.mxu0 0.0
    %2868 = vmatpush1.msra.mxu0 0.0
    %2869 = vmatprep.subr.mxu0 0.0
    %2870 = vmatpush1.msra.mxu0 0.0
    %2871 = vmatprep.subr.mxu0 0.0
    %2872 = vmatpush1.msra.mxu0 0.0
    %2873 = vmatprep.subr.mxu0 0.0
    %2874 = vmatpush1.msra.mxu0 0.0
    %2875 = vmatprep.subr.mxu0 0.0
    %2876 = vmatpush1.msra.mxu0 0.0
    %2877 = vmatprep.subr.mxu0 0.0
    %2878 = vmatpush1.msra.mxu0 0.0
    %2879 = vmatprep.mubr.f32.mxu0 0.0
    %2880 = vmatmul.mubr.f32.gmra.mrb[0].mxu0 %v2359
    %v2881 = vpop.f32.mrb[0].mxu0
    %v2882 = vadd.f32 %v2340, %v2881
    %v2883 = vpop.f32.mrb[0].mxu0
    %v2884 = vadd.f32 %v2340, %v2883
    %2885 = vmatprep.mubr.f32.mxu0 0.0
    %2886 = vmatmul.mubr.f32.gmra.mrb[0].mxu0 %v2362
    %v2887 = vpop.f32.mrb[0].mxu0
    %v2888 = vadd.f32 %v2345, %v2887
    %v2889 = vpop.f32.mrb[0].mxu0
    %v2890 = vadd.f32 %v2345, %v2889
    %2891 = vmatprep.mubr.f32.mxu0 0.0
    %2892 = vmatmul.mubr.f32.gmra.mrb[0].mxu0 %v2365
    %v2893 = vpop.f32.mrb[0].mxu0
    %v2894 = vadd.f32 %v2350, %v2893
    %v2895 = vpop.f32.mrb[0].mxu0
    %v2896 = vadd.f32 %v2350, %v2895
    %2897 = vmatprep.mubr.f32.mxu0 0.0
    %2898 = vmatmul.mubr.f32.gmra.mrb[0].mxu0 %v2368
    %v2899 = vpop.f32.mrb[0].mxu0
    %v2900 = vadd.f32 %v2355, %v2899
    %v2901 = vpop.f32.mrb[0].mxu0
    %v2902 = vadd.f32 %v2355, %v2901
    %2903 = vdwg.mxu0
    %2904 = vmatprep.subr.mxu0 %v2278
    %2905 = vmatpush1.msra.mxu0 %v2277
    %2906 = vmatprep.subr.mxu0 %v2294
    %2907 = vmatpush1.msra.mxu0 %v2293
    %2908 = vmatprep.subr.mxu0 %v2310
    %2909 = vmatpush1.msra.mxu0 %v2309
    %2910 = vmatprep.subr.mxu0 %v2326
    %2911 = vmatpush1.msra.mxu0 %v2325
    %2912 = vmatprep.subr.mxu0 0.0
    %2913 = vmatpush1.msra.mxu0 0.0
    %2914 = vmatprep.subr.mxu0 0.0
    %2915 = vmatpush1.msra.mxu0 0.0
    %2916 = vmatprep.subr.mxu0 0.0
    %2917 = vmatpush1.msra.mxu0 0.0
    %2918 = vmatprep.subr.mxu0 0.0
    %2919 = vmatpush1.msra.mxu0 0.0
    %2920 = vmatprep.subr.mxu0 0.0
    %2921 = vmatpush1.msra.mxu0 0.0
    %2922 = vmatprep.subr.mxu0 0.0
    %2923 = vmatpush1.msra.mxu0 0.0
    %2924 = vmatprep.subr.mxu0 0.0
    %2925 = vmatpush1.msra.mxu0 0.0
    %2926 = vmatprep.subr.mxu0 0.0
    %2927 = vmatpush1.msra.mxu0 0.0
    %2928 = vmatprep.subr.mxu0 0.0
    %2929 = vmatpush1.msra.mxu0 0.0
    %2930 = vmatprep.subr.mxu0 0.0
    %2931 = vmatpush1.msra.mxu0 0.0
    %2932 = vmatprep.subr.mxu0 0.0
    %2933 = vmatpush1.msra.mxu0 0.0
    %2934 = vmatprep.subr.mxu0 0.0
    %2935 = vmatpush1.msra.mxu0 0.0
    %2936 = vmatprep.subr.mxu0 0.0
    %2937 = vmatpush1.msra.mxu0 0.0
    %2938 = vmatprep.subr.mxu0 0.0
    %2939 = vmatpush1.msra.mxu0 0.0
    %2940 = vmatprep.subr.mxu0 0.0
    %2941 = vmatpush1.msra.mxu0 0.0
    %2942 = vmatprep.subr.mxu0 0.0
    %2943 = vmatpush1.msra.mxu0 0.0
    %2944 = vmatprep.subr.mxu0 0.0
    %2945 = vmatpush1.msra.mxu0 0.0
    %2946 = vmatprep.subr.mxu0 0.0
    %2947 = vmatpush1.msra.mxu0 0.0
    %2948 = vmatprep.subr.mxu0 0.0
    %2949 = vmatpush1.msra.mxu0 0.0
    %2950 = vmatprep.subr.mxu0 0.0
    %2951 = vmatpush1.msra.mxu0 0.0
    %2952 = vmatprep.subr.mxu0 0.0
    %2953 = vmatpush1.msra.mxu0 0.0
    %2954 = vmatprep.subr.mxu0 0.0
    %2955 = vmatpush1.msra.mxu0 0.0
    %2956 = vmatprep.subr.mxu0 0.0
    %2957 = vmatpush1.msra.mxu0 0.0
    %2958 = vmatprep.subr.mxu0 0.0
    %2959 = vmatpush1.msra.mxu0 0.0
    %2960 = vmatprep.subr.mxu0 0.0
    %2961 = vmatpush1.msra.mxu0 0.0
    %2962 = vmatprep.subr.mxu0 0.0
    %2963 = vmatpush1.msra.mxu0 0.0
    %2964 = vmatprep.subr.mxu0 0.0
    %2965 = vmatpush1.msra.mxu0 0.0
    %2966 = vmatprep.subr.mxu0 0.0
    %2967 = vmatpush1.msra.mxu0 0.0
    %2968 = vmatprep.mubr.f32.mxu0 0.0
    %2969 = vmatmul.mubr.f32.gmra.mrb[0].mxu0 %v2359
    %v2970 = vpop.f32.mrb[0].mxu0
    %v2971 = vadd.f32 %v2340, %v2970
    %v2972 = vpop.f32.mrb[0].mxu0
    %v2973 = vadd.f32 %v2340, %v2972
    %2974 = vmatprep.mubr.f32.mxu0 0.0
    %2975 = vmatmul.mubr.f32.gmra.mrb[0].mxu0 %v2362
    %v2976 = vpop.f32.mrb[0].mxu0
    %v2977 = vadd.f32 %v2345, %v2976
    %v2978 = vpop.f32.mrb[0].mxu0
    %v2979 = vadd.f32 %v2345, %v2978
    %2980 = vmatprep.mubr.f32.mxu0 0.0
    %2981 = vmatmul.mubr.f32.gmra.mrb[0].mxu0 %v2365
    %v2982 = vpop.f32.mrb[0].mxu0
    %v2983 = vadd.f32 %v2350, %v2982
    %v2984 = vpop.f32.mrb[0].mxu0
    %v2985 = vadd.f32 %v2350, %v2984
    %2986 = vmatprep.mubr.f32.mxu0 0.0
    %2987 = vmatmul.mubr.f32.gmra.mrb[0].mxu0 %v2368
    %v2988 = vpop.f32.mrb[0].mxu0
    %v2989 = vadd.f32 %v2355, %v2988
    %v2990 = vpop.f32.mrb[0].mxu0
    %v2991 = vadd.f32 %v2355, %v2990
    %2992 = vdwg.mxu0
    %2993 = vmatprep.subr.mxu0 %v2280
    %2994 = vmatpush1.msra.mxu0 %v2279
    %2995 = vmatprep.subr.mxu0 %v2296
    %2996 = vmatpush1.msra.mxu0 %v2295
    %2997 = vmatprep.subr.mxu0 %v2312
    %2998 = vmatpush1.msra.mxu0 %v2311
    %2999 = vmatprep.subr.mxu0 %v2328
    %3000 = vmatpush1.msra.mxu0 %v2327
    %3001 = vmatprep.subr.mxu0 0.0
    %3002 = vmatpush1.msra.mxu0 0.0
    %3003 = vmatprep.subr.mxu0 0.0
    %3004 = vmatpush1.msra.mxu0 0.0
    %3005 = vmatprep.subr.mxu0 0.0
    %3006 = vmatpush1.msra.mxu0 0.0
    %3007 = vmatprep.subr.mxu0 0.0
    %3008 = vmatpush1.msra.mxu0 0.0
    %3009 = vmatprep.subr.mxu0 0.0
    %3010 = vmatpush1.msra.mxu0 0.0
    %3011 = vmatprep.subr.mxu0 0.0
    %3012 = vmatpush1.msra.mxu0 0.0
    %3013 = vmatprep.subr.mxu0 0.0
    %3014 = vmatpush1.msra.mxu0 0.0
    %3015 = vmatprep.subr.mxu0 0.0
    %3016 = vmatpush1.msra.mxu0 0.0
    %3017 = vmatprep.subr.mxu0 0.0
    %3018 = vmatpush1.msra.mxu0 0.0
    %3019 = vmatprep.subr.mxu0 0.0
    %3020 = vmatpush1.msra.mxu0 0.0
    %3021 = vmatprep.subr.mxu0 0.0
    %3022 = vmatpush1.msra.mxu0 0.0
    %3023 = vmatprep.subr.mxu0 0.0
    %3024 = vmatpush1.msra.mxu0 0.0
    %3025 = vmatprep.subr.mxu0 0.0
    %3026 = vmatpush1.msra.mxu0 0.0
    %3027 = vmatprep.subr.mxu0 0.0
    %3028 = vmatpush1.msra.mxu0 0.0
    %3029 = vmatprep.subr.mxu0 0.0
    %3030 = vmatpush1.msra.mxu0 0.0
    %3031 = vmatprep.subr.mxu0 0.0
    %3032 = vmatpush1.msra.mxu0 0.0
    %3033 = vmatprep.subr.mxu0 0.0
    %3034 = vmatpush1.msra.mxu0 0.0
    %3035 = vmatprep.subr.mxu0 0.0
    %3036 = vmatpush1.msra.mxu0 0.0
    %3037 = vmatprep.subr.mxu0 0.0
    %3038 = vmatpush1.msra.mxu0 0.0
    %3039 = vmatprep.subr.mxu0 0.0
    %3040 = vmatpush1.msra.mxu0 0.0
    %3041 = vmatprep.subr.mxu0 0.0
    %3042 = vmatpush1.msra.mxu0 0.0
    %3043 = vmatprep.subr.mxu0 0.0
    %3044 = vmatpush1.msra.mxu0 0.0
    %3045 = vmatprep.subr.mxu0 0.0
    %3046 = vmatpush1.msra.mxu0 0.0
    %3047 = vmatprep.subr.mxu0 0.0
    %3048 = vmatpush1.msra.mxu0 0.0
    %3049 = vmatprep.subr.mxu0 0.0
    %3050 = vmatpush1.msra.mxu0 0.0
    %3051 = vmatprep.subr.mxu0 0.0
    %3052 = vmatpush1.msra.mxu0 0.0
    %3053 = vmatprep.subr.mxu0 0.0
    %3054 = vmatpush1.msra.mxu0 0.0
    %3055 = vmatprep.subr.mxu0 0.0
    %3056 = vmatpush1.msra.mxu0 0.0
    %3057 = vmatprep.mubr.f32.mxu0 0.0
    %3058 = vmatmul.mubr.f32.gmra.mrb[0].mxu0 %v2359
    %v3059 = vpop.f32.mrb[0].mxu0
    %v3060 = vadd.f32 %v2340, %v3059
    %v3061 = vpop.f32.mrb[0].mxu0
    %v3062 = vadd.f32 %v2340, %v3061
    %3063 = vmatprep.mubr.f32.mxu0 0.0
    %3064 = vmatmul.mubr.f32.gmra.mrb[0].mxu0 %v2362
    %v3065 = vpop.f32.mrb[0].mxu0
    %v3066 = vadd.f32 %v2345, %v3065
    %v3067 = vpop.f32.mrb[0].mxu0
    %v3068 = vadd.f32 %v2345, %v3067
    %3069 = vmatprep.mubr.f32.mxu0 0.0
    %3070 = vmatmul.mubr.f32.gmra.mrb[0].mxu0 %v2365
    %v3071 = vpop.f32.mrb[0].mxu0
    %v3072 = vadd.f32 %v2350, %v3071
    %v3073 = vpop.f32.mrb[0].mxu0
    %v3074 = vadd.f32 %v2350, %v3073
    %3075 = vmatprep.mubr.f32.mxu0 0.0
    %3076 = vmatmul.mubr.f32.gmra.mrb[0].mxu0 %v2368
    %v3077 = vpop.f32.mrb[0].mxu0
    %v3078 = vadd.f32 %v2355, %v3077
    %v3079 = vpop.f32.mrb[0].mxu0
    %v3080 = vadd.f32 %v2355, %v3079
    %3081 = vdwg.mxu0
    %3082 = vst [vmem:[#allocation2] sm:$0xff] %v2437
    %3083 = vst [vmem:[#allocation2 + $0x8] sm:$0xff] %v2439
    %3084 = vst [vmem:[#allocation2 + $0x10] sm:$0xff] %v2526
    %3085 = vst [vmem:[#allocation2 + $0x18] sm:$0xff] %v2528
    %3086 = vst [vmem:[#allocation2 + $0x20] sm:$0xff] %v2615
    %3087 = vst [vmem:[#allocation2 + $0x28] sm:$0xff] %v2617
    %3088 = vst [vmem:[#allocation2 + $0x30] sm:$0xff] %v2704
    %3089 = vst [vmem:[#allocation2 + $0x38] sm:$0xff] %v2706
    %3090 = vst [vmem:[#allocation2 + $0x40] sm:$0xff] %v2793
    %3091 = vst [vmem:[#allocation2 + $0x48] sm:$0xff] %v2795
    %3092 = vst [vmem:[#allocation2 + $0x50] sm:$0xff] %v2882
    %3093 = vst [vmem:[#allocation2 + $0x58] sm:$0xff] %v2884
    %3094 = vst [vmem:[#allocation2 + $0x60] sm:$0xff] %v2971
    %3095 = vst [vmem:[#allocation2 + $0x68] sm:$0xff] %v2973
    %3096 = vst [vmem:[#allocation2 + $0x70] sm:$0xff] %v3060
    %3097 = vst [vmem:[#allocation2 + $0x78] sm:$0xff] %v3062
    %3098 = vst [vmem:[#allocation2 + $0x80] sm:$0xff] %v2443
    %3099 = vst [vmem:[#allocation2 + $0x88] sm:$0xff] %v2445
    %3100 = vst [vmem:[#allocation2 + $0x90] sm:$0xff] %v2532
    %3101 = vst [vmem:[#allocation2 + $0x98] sm:$0xff] %v2534
    %3102 = vst [vmem:[#allocation2 + $0xa0] sm:$0xff] %v2621
    %3103 = vst [vmem:[#allocation2 + $0xa8] sm:$0xff] %v2623
    %3104 = vst [vmem:[#allocation2 + $0xb0] sm:$0xff] %v2710
    %3105 = vst [vmem:[#allocation2 + $0xb8] sm:$0xff] %v2712
    %3106 = vst [vmem:[#allocation2 + $0xc0] sm:$0xff] %v2799
    %3107 = vst [vmem:[#allocation2 + $0xc8] sm:$0xff] %v2801
    %3108 = vst [vmem:[#allocation2 + $0xd0] sm:$0xff] %v2888
    %3109 = vst [vmem:[#allocation2 + $0xd8] sm:$0xff] %v2890
    %3110 = vst [vmem:[#allocation2 + $0xe0] sm:$0xff] %v2977
    %3111 = vst [vmem:[#allocation2 + $0xe8] sm:$0xff] %v2979
    %3112 = vst [vmem:[#allocation2 + $0xf0] sm:$0xff] %v3066
    %3113 = vst [vmem:[#allocation2 + $0xf8] sm:$0xff] %v3068
    %3114 = vst [vmem:[#allocation2 + $0x100] sm:$0xff] %v2449
    %3115 = vst [vmem:[#allocation2 + $0x108] sm:$0xff] %v2451
    %3116 = vst [vmem:[#allocation2 + $0x110] sm:$0xff] %v2538
    %3117 = vst [vmem:[#allocation2 + $0x118] sm:$0xff] %v2540
    %3118 = vst [vmem:[#allocation2 + $0x120] sm:$0xff] %v2627
    %3119 = vst [vmem:[#allocation2 + $0x128] sm:$0xff] %v2629
    %3120 = vst [vmem:[#allocation2 + $0x130] sm:$0xff] %v2716
    %3121 = vst [vmem:[#allocation2 + $0x138] sm:$0xff] %v2718
    %3122 = vst [vmem:[#allocation2 + $0x140] sm:$0xff] %v2805
    %3123 = vst [vmem:[#allocation2 + $0x148] sm:$0xff] %v2807
    %3124 = vst [vmem:[#allocation2 + $0x150] sm:$0xff] %v2894
    %3125 = vst [vmem:[#allocation2 + $0x158] sm:$0xff] %v2896
    %3126 = vst [vmem:[#allocation2 + $0x160] sm:$0xff] %v2983
    %3127 = vst [vmem:[#allocation2 + $0x168] sm:$0xff] %v2985
    %3128 = vst [vmem:[#allocation2 + $0x170] sm:$0xff] %v3072
    %3129 = vst [vmem:[#allocation2 + $0x178] sm:$0xff] %v3074
    %3130 = vst [vmem:[#allocation2 + $0x180] sm:$0xff] %v2455
    %3131 = vst [vmem:[#allocation2 + $0x188] sm:$0xff] %v2457
    %3132 = vst [vmem:[#allocation2 + $0x190] sm:$0xff] %v2544
    %3133 = vst [vmem:[#allocation2 + $0x198] sm:$0xff] %v2546
    %3134 = vst [vmem:[#allocation2 + $0x1a0] sm:$0xff] %v2633
    %3135 = vst [vmem:[#allocation2 + $0x1a8] sm:$0xff] %v2635
    %3136 = vst [vmem:[#allocation2 + $0x1b0] sm:$0xff] %v2722
    %3137 = vst [vmem:[#allocation2 + $0x1b8] sm:$0xff] %v2724
    %3138 = vst [vmem:[#allocation2 + $0x1c0] sm:$0xff] %v2811
    %3139 = vst [vmem:[#allocation2 + $0x1c8] sm:$0xff] %v2813
    %3140 = vst [vmem:[#allocation2 + $0x1d0] sm:$0xff] %v2900
    %3141 = vst [vmem:[#allocation2 + $0x1d8] sm:$0xff] %v2902
    %3142 = vst [vmem:[#allocation2 + $0x1e0] sm:$0xff] %v2989
    %3143 = vst [vmem:[#allocation2 + $0x1e8] sm:$0xff] %v2991
    %3144 = vst [vmem:[#allocation2 + $0x1f0] sm:$0xff] %v3078
    %3145 = vst [vmem:[#allocation2 + $0x1f8] sm:$0xff] %v3080
    // Predicated region
    $region30: #{tpu_custom_call.1} parent=1 // pred_check
      _
    $region31: #{tpu_custom_call.1} parent=1 // pred_check_branch
      %3147 = sbr.rel (0) target = $region33
    $region32: #{tpu_custom_call.1} parent=1 // pred_region
      %s3149 = ssub.s32 8192, 8192
      %3150 = vsyncadd [#allocation3], %s3149
      %s3151 = sshll.u32 [#allocation2], 4
      %s3152 = int_to_ptr.vmem [resolvable:$true] %s3151
      %3157 = dma.vmem_to_hbm [thread:$0]  %s3152, 8192, %s7, [#allocation3], 2048, 2048, 128
    $region33: #{tpu_custom_call.1} parent=1 // pred_fallthru
      _
    // Predicated region
    $region34: #{tpu_custom_call.1} parent=1 // pred_check
      _
    $region35: #{tpu_custom_call.1} parent=1 // pred_check_branch
      %3159 = sbr.rel (0) target = $region37
    $region36: #{tpu_custom_call.1} parent=1 // pred_region
      %3160 = dma.done [#allocation3], 8192
    $region37: #{tpu_custom_call.1} parent=1 // pred_fallthru
      _
    %3161 = vsyncpa [#allocation3], 1

</llo_original>
